<compile_context>
chip_gen: v6e
topology: v6e:2x2x1
jax: 0.10.0
libtpu: 0.0.40
codegen_flags: <defaults>
</compile_context>

<pallas_src>
import jax
import jax.numpy as jnp
from jax.experimental import pallas as pl
from jax.experimental.pallas import tpu as pltpu


def _round_up(n, m):
    return ((n + m - 1) // m) * m


def _num_tensorcores():
    """2 TensorCores on v7x, 1 on v5e/v6e. Defensive: default to 1."""
    try:
        kind = jax.devices()[0].device_kind.lower()
        if ("v7" in kind) or ("7x" in kind):
            return 2
    except Exception:
        pass
    return 1


def _choose_tile_b(B, requested, n_tc):
    """Batch-tile heuristic (multiple of 8)."""
    B8 = _round_up(max(B, 1), 8)
    if B8 <= 8:
        return 8
    if n_tc >= 2:
        # v7x megacore: aim for >= 2 grid steps per TensorCore when batch allows,
        # so each core's x-tile DMA overlaps its compute.
        if B >= 512:
            return min(_round_up(pl.cdiv(B, 2 * n_tc), 8), 512)
        return min(_round_up(pl.cdiv(B, n_tc), 8), B8)
    # Single TC (v5e/v6e): one big tile (<= 512); keep grid >= 2 for DMA overlap
    # once the batch is big enough to split.
    if B > requested:
        return min(_round_up(pl.cdiv(B, 2), 8), 512)
    return min(max(_round_up(requested, 8), 8), B8)


def _mlp_kernel(x_ref, w1_ref, b1_ref, w2_ref, b2_ref, w3_ref, b3_ref, o_ref):
    # Fully fused in VMEM: bf16 MXU inputs, f32 accumulation, f32 bias/ReLU epilogue.
    x = x_ref[...].astype(jnp.bfloat16)                       # in-kernel cast (VPU, free)
    h1 = jnp.dot(x, w1_ref[...], preferred_element_type=jnp.float32) + b1_ref[...]
    h1 = jnp.maximum(h1, 0.0).astype(jnp.bfloat16)            # ReLU; Dropout = identity
    h2 = jnp.dot(h1, w2_ref[...], preferred_element_type=jnp.float32) + b2_ref[...]
    h2 = jnp.maximum(h2, 0.0).astype(jnp.bfloat16)            # ReLU
    out = jnp.dot(h2, w3_ref[...], preferred_element_type=jnp.float32) + b3_ref[...]
    o_ref[...] = out.astype(o_ref.dtype)                      # bf16, lane-dense store


def _forward_impl(x, p, num_classes, tile_b, single_buffer_weights):
    B, D = x.shape
    H1 = p["w1"].shape[1]
    H2 = p["w2"].shape[1]
    C_pad = p["w3"].shape[1]                                  # already lane-padded to 128

    n_tc = _num_tensorcores()
    tb = _choose_tile_b(B, tile_b, n_tc)
    grid_b = pl.cdiv(B, tb)

    # ---- tight VMEM budget (double-buffered x/out, resident weights, temps) ----
    n_w_bufs = 1 if single_buffer_weights else 2
    est_bytes = (
        2 * tb * D * 4                                         # x tiles (f32, 2 bufs)
        + 2 * tb * C_pad * 2                                   # out tiles (bf16, 2 bufs)
        + n_w_bufs * (D * H1 + H1 * H2 + H2 * C_pad) * 2       # weights (bf16)
        + n_w_bufs * (H1 + H2 + C_pad) * 4                     # biases (f32)
        + 3 * tb * max(H1, H2, C_pad) * 4                      # f32 intermediates headroom
    )
    vmem_limit = int(min(max(3 * est_bytes, 4 * 1024 * 1024), 56 * 1024 * 1024))

    def _const_spec(shape):
        # Weights/biases: same single block every grid step -> resident in VMEM.
        if single_buffer_weights:
            return pl.BlockSpec(shape, lambda i: (0, 0), pipeline_mode=pl.Buffered(1))
        return pl.BlockSpec(shape, lambda i: (0, 0))

    out = pl.pallas_call(
        _mlp_kernel,
        out_shape=jax.ShapeDtypeStruct((B, C_pad), jnp.bfloat16),
        grid_spec=pltpu.PrefetchScalarGridSpec(
            num_scalar_prefetch=0,
            grid=(grid_b,),
            in_specs=[
                pl.BlockSpec((tb, D), lambda i: (i, 0)),       # x tile (f32 in HBM)
                _const_spec((D, H1)),                          # w1 (bf16)
                _const_spec((1, H1)),                          # b1 (f32)
                _const_spec((H1, H2)),                         # w2 (bf16)
                _const_spec((1, H2)),                          # b2 (f32)
                _const_spec((H2, C_pad)),                      # w3 (bf16, lane-padded)
                _const_spec((1, C_pad)),                       # b3 (f32, lane-padded)
            ],
            out_specs=pl.BlockSpec((tb, C_pad), lambda i: (i, 0)),
        ),
        compiler_params=pltpu.CompilerParams(
            dimension_semantics=("parallel",),
            vmem_limit_bytes=vmem_limit,
        ),
    )(x, p["w1"], p["b1"], p["w2"], p["b2"], p["w3"], p["b3"])

    # Tiny epilogue: slice real classes and upcast for torch-like f32 logits.
    return out[:, :num_classes].astype(jnp.float32)


def simple_tcn_forward(x, prepared_params, num_classes, *, tile_b=256):
    """x: (B, D) float32.  prepared_params: output of prepare_params() (bf16 weights,
    f32 biases, final layer lane-padded).  Returns (B, num_classes) float32 logits."""
    try:
        return _forward_impl(x, prepared_params, num_classes, tile_b, True)
    except Exception:
        # Fallback: default double-buffered weight specs if Buffered(1) lowering
        # is unavailable in this JAX build.
        return _forward_impl(x, prepared_params, num_classes, tile_b, False)


def prepare_params(params):
    """One-time conversion (NOT per call): bf16 weights, f32 (1,H) biases, and
    lane-padding of the final layer to a 128-wide output.  Returns (dict, C)."""
    H1 = params["w1"].shape[1]
    H2 = params["w2"].shape[1]
    C = params["w3"].shape[1]
    C_pad = _round_up(C, 128)

    w3 = params["w3"].astype(jnp.bfloat16)
    b3 = jnp.asarray(params["b3"], jnp.float32).reshape(1, C)
    if C_pad != C:
        w3 = jnp.pad(w3, ((0, 0), (0, C_pad - C)))
        b3 = jnp.pad(b3, ((0, 0), (0, C_pad - C)))

    prepared = {
        "w1": params["w1"].astype(jnp.bfloat16),
        "b1": jnp.asarray(params["b1"], jnp.float32).reshape(1, H1),
        "w2": params["w2"].astype(jnp.bfloat16),
        "b2": jnp.asarray(params["b2"], jnp.float32).reshape(1, H2),
        "w3": w3,
        "b3": b3,
    }
    return prepared, C


def init_params(key, input_size, num_classes):
    """Deterministic synthetic init (torch-Linear-like uniform fan-in scaling)."""
    ks = jax.random.split(key, 6)

    def lin(kw, kb, fan_in, fan_out):
        bound = 1.0 / jnp.sqrt(jnp.float32(fan_in))
        w = jax.random.uniform(kw, (fan_in, fan_out), jnp.float32, -bound, bound)
        b = jax.random.uniform(kb, (1, fan_out), jnp.float32, -bound, bound)
        return w, b

    w1, b1 = lin(ks[0], ks[1], input_size, 256)
    w2, b2 = lin(ks[2], ks[3], 256, 128)
    w3, b3 = lin(ks[4], ks[5], 128, num_classes)
    return {"w1": w1, "b1": b1, "w2": w2, "b2": b2, "w3": w3, "b3": b3}


if __name__ == "__main__":
    key = jax.random.PRNGKey(0)
    # Small-but-tileable shapes consistent with the module's forward: (batch, input_size).
    batch, input_size, num_classes = 512, 512, 2
    kx, kp = jax.random.split(key)
    x = jax.random.normal(kx, (batch, input_size), dtype=jnp.float32)

    raw_params = init_params(kp, input_size, num_classes)
    prepared, n_cls = prepare_params(raw_params)   # one-time cast/pad, outside call path

    out = simple_tcn_forward(x, prepared, n_cls, tile_b=256)
    out = jax.block_until_ready(out)
    assert out.shape == (batch, num_classes)
    assert out.dtype == jnp.float32

    # Reference on the same bf16-matmul / f32-accumulate path (eval dropout = identity).
    xb = x.astype(jnp.bfloat16)
    h1 = jnp.maximum(
        jnp.dot(xb, raw_params["w1"].astype(jnp.bfloat16),
                preferred_element_type=jnp.float32) + raw_params["b1"], 0.0)
    h2 = jnp.maximum(
        jnp.dot(h1.astype(jnp.bfloat16), raw_params["w2"].astype(jnp.bfloat16),
                preferred_element_type=jnp.float32) + raw_params["b2"], 0.0)
    ref = (jnp.dot(h2.astype(jnp.bfloat16), raw_params["w3"].astype(jnp.bfloat16),
                   preferred_element_type=jnp.float32) + raw_params["b3"])

    max_err = float(jnp.max(jnp.abs(out - ref)))
    assert max_err < 5e-2, max_err

    print("KERNEL_OK")
</pallas_src>

<mosaic_0001>
module attributes {stable_mosaic.version = 11 : i64} {
  func.func @_mlp_kernel(%arg0: i32, %arg1: memref<256x512xf32, #tpu.memory_space<vmem>>, %arg2: memref<512x256xbf16, #tpu.memory_space<vmem>>, %arg3: memref<1x256xf32, #tpu.memory_space<vmem>>, %arg4: memref<256x128xbf16, #tpu.memory_space<vmem>>, %arg5: memref<1x128xf32, #tpu.memory_space<vmem>>, %arg6: memref<128x128xbf16, #tpu.memory_space<vmem>>, %arg7: memref<1x128xf32, #tpu.memory_space<vmem>>, %arg8: memref<256x128xbf16, #tpu.memory_space<vmem>>) attributes {dimension_semantics = [#tpu.dimension_semantics<parallel>], iteration_bounds = array<i64: 2>, scalar_prefetch = 0 : i64, scratch_operands = 0 : i64, tpu.core_type = #tpu.core_type<tc>, window_params = [{transform_indices = @transform_0, window_bounds = array<i64: 256, 512>}, {pipeline_mode = #tpu.pipeline_mode<synchronous>, transform_indices = @transform_1, window_bounds = array<i64: 512, 256>}, {pipeline_mode = #tpu.pipeline_mode<synchronous>, transform_indices = @transform_2, window_bounds = array<i64: 1, 256>}, {pipeline_mode = #tpu.pipeline_mode<synchronous>, transform_indices = @transform_3, window_bounds = array<i64: 256, 128>}, {pipeline_mode = #tpu.pipeline_mode<synchronous>, transform_indices = @transform_4, window_bounds = array<i64: 1, 128>}, {pipeline_mode = #tpu.pipeline_mode<synchronous>, transform_indices = @transform_5, window_bounds = array<i64: 128, 128>}, {pipeline_mode = #tpu.pipeline_mode<synchronous>, transform_indices = @transform_6, window_bounds = array<i64: 1, 128>}, {transform_indices = @transform_7, window_bounds = array<i64: 256, 128>}]} {
    %c0 = arith.constant 0 : index
    %c0_0 = arith.constant 0 : index
    %0 = vector.load %arg1[%c0, %c0_0] : memref<256x512xf32, #tpu.memory_space<vmem>>, vector<256x512xf32>
    %1 = arith.truncf %0 : vector<256x512xf32> to vector<256x512xbf16>
    %c0_1 = arith.constant 0 : index
    %c0_2 = arith.constant 0 : index
    %2 = vector.load %arg2[%c0_1, %c0_2] : memref<512x256xbf16, #tpu.memory_space<vmem>>, vector<512x256xbf16>
    %cst = arith.constant dense<0.000000e+00> : vector<256x256xf32>
    %3 = tpu.matmul %1, %2, %cst {dimension_numbers = #tpu.dot_dimension_numbers<[1], [0], [0], [1], [0, 0, 1, 1], [], []>} : vector<256x512xbf16>, vector<512x256xbf16>, vector<256x256xf32> -> vector<256x256xf32>
    %c0_3 = arith.constant 0 : index
    %c0_4 = arith.constant 0 : index
    %4 = vector.load %arg3[%c0_3, %c0_4] : memref<1x256xf32, #tpu.memory_space<vmem>>, vector<1x256xf32>
    %5 = vector.broadcast %4 : vector<1x256xf32> to vector<256x256xf32>
    %6 = arith.addf %3, %5 : vector<256x256xf32>
    %cst_5 = arith.constant 0.000000e+00 : f32
    %7 = vector.broadcast %cst_5 : f32 to vector<256x256xf32>
    %8 = arith.maximumf %6, %7 : vector<256x256xf32>
    %9 = arith.truncf %8 : vector<256x256xf32> to vector<256x256xbf16>
    %c0_6 = arith.constant 0 : index
    %c0_7 = arith.constant 0 : index
    %10 = vector.load %arg4[%c0_6, %c0_7] : memref<256x128xbf16, #tpu.memory_space<vmem>>, vector<256x128xbf16>
    %cst_8 = arith.constant dense<0.000000e+00> : vector<256x128xf32>
    %11 = tpu.matmul %9, %10, %cst_8 {dimension_numbers = #tpu.dot_dimension_numbers<[1], [0], [0], [1], [0, 0, 1, 1], [], []>} : vector<256x256xbf16>, vector<256x128xbf16>, vector<256x128xf32> -> vector<256x128xf32>
    %c0_9 = arith.constant 0 : index
    %c0_10 = arith.constant 0 : index
    %12 = vector.load %arg5[%c0_9, %c0_10] : memref<1x128xf32, #tpu.memory_space<vmem>>, vector<1x128xf32>
    %13 = vector.broadcast %12 : vector<1x128xf32> to vector<256x128xf32>
    %14 = arith.addf %11, %13 : vector<256x128xf32>
    %cst_11 = arith.constant 0.000000e+00 : f32
    %15 = vector.broadcast %cst_11 : f32 to vector<256x128xf32>
    %16 = arith.maximumf %14, %15 : vector<256x128xf32>
    %17 = arith.truncf %16 : vector<256x128xf32> to vector<256x128xbf16>
    %c0_12 = arith.constant 0 : index
    %c0_13 = arith.constant 0 : index
    %18 = vector.load %arg6[%c0_12, %c0_13] : memref<128x128xbf16, #tpu.memory_space<vmem>>, vector<128x128xbf16>
    %cst_14 = arith.constant dense<0.000000e+00> : vector<256x128xf32>
    %19 = tpu.matmul %17, %18, %cst_14 {dimension_numbers = #tpu.dot_dimension_numbers<[1], [0], [0], [1], [0, 0, 1, 1], [], []>} : vector<256x128xbf16>, vector<128x128xbf16>, vector<256x128xf32> -> vector<256x128xf32>
    %c0_15 = arith.constant 0 : index
    %c0_16 = arith.constant 0 : index
    %20 = vector.load %arg7[%c0_15, %c0_16] : memref<1x128xf32, #tpu.memory_space<vmem>>, vector<1x128xf32>
    %21 = vector.broadcast %20 : vector<1x128xf32> to vector<256x128xf32>
    %22 = arith.addf %19, %21 : vector<256x128xf32>
    %23 = arith.truncf %22 : vector<256x128xf32> to vector<256x128xbf16>
    %c0_17 = arith.constant 0 : index
    %c0_18 = arith.constant 0 : index
    %24 = vector.load %arg8[%c0_17, %c0_18] : memref<256x128xbf16, #tpu.memory_space<vmem>>, vector<256x128xbf16>
    tpu.vector_store %arg8[%c0_17, %c0_18], %23 {strides = array<i32>} : memref<256x128xbf16, #tpu.memory_space<vmem>>, vector<256x128xbf16>,
    return
  }
  func.func @transform_0(%arg0: i32) -> (i32, i32) {
    %c0_i32 = arith.constant 0 : i32
    %c0_i32_0 = arith.constant 0 : i32
    return %arg0, %c0_i32 : i32, i32
  }
  func.func @transform_1(%arg0: i32) -> (i32, i32) {
    %c0_i32 = arith.constant 0 : i32
    %c0_i32_0 = arith.constant 0 : i32
    %c0_i32_1 = arith.constant 0 : i32
    return %c0_i32, %c0_i32_0 : i32, i32
  }
  func.func @transform_2(%arg0: i32) -> (i32, i32) {
    %c0_i32 = arith.constant 0 : i32
    %c0_i32_0 = arith.constant 0 : i32
    %c0_i32_1 = arith.constant 0 : i32
    return %c0_i32, %c0_i32_0 : i32, i32
  }
  func.func @transform_3(%arg0: i32) -> (i32, i32) {
    %c0_i32 = arith.constant 0 : i32
    %c0_i32_0 = arith.constant 0 : i32
    %c0_i32_1 = arith.constant 0 : i32
    return %c0_i32, %c0_i32_0 : i32, i32
  }
  func.func @transform_4(%arg0: i32) -> (i32, i32) {
    %c0_i32 = arith.constant 0 : i32
    %c0_i32_0 = arith.constant 0 : i32
    %c0_i32_1 = arith.constant 0 : i32
    return %c0_i32, %c0_i32_0 : i32, i32
  }
  func.func @transform_5(%arg0: i32) -> (i32, i32) {
    %c0_i32 = arith.constant 0 : i32
    %c0_i32_0 = arith.constant 0 : i32
    %c0_i32_1 = arith.constant 0 : i32
    return %c0_i32, %c0_i32_0 : i32, i32
  }
  func.func @transform_6(%arg0: i32) -> (i32, i32) {
    %c0_i32 = arith.constant 0 : i32
    %c0_i32_0 = arith.constant 0 : i32
    %c0_i32_1 = arith.constant 0 : i32
    return %c0_i32, %c0_i32_0 : i32, i32
  }
  func.func @transform_7(%arg0: i32) -> (i32, i32) {
    %c0_i32 = arith.constant 0 : i32
    %c0_i32_0 = arith.constant 0 : i32
    return %arg0, %c0_i32 : i32, i32
  }
}

module attributes {stable_mosaic.version = 11 : i64} {
  func.func @_mlp_kernel(%arg0: i32, %arg1: memref<256x512xf32, #tpu.memory_space<vmem>>, %arg2: memref<512x256xbf16, #tpu.memory_space<vmem>>, %arg3: memref<1x256xf32, #tpu.memory_space<vmem>>, %arg4: memref<256x128xbf16, #tpu.memory_space<vmem>>, %arg5: memref<1x128xf32, #tpu.memory_space<vmem>>, %arg6: memref<128x128xbf16, #tpu.memory_space<vmem>>, %arg7: memref<1x128xf32, #tpu.memory_space<vmem>>, %arg8: memref<256x128xbf16, #tpu.memory_space<vmem>>) attributes {dimension_semantics = [#tpu.dimension_semantics<parallel>], iteration_bounds = array<i64: 2>, scalar_prefetch = 0 : i64, scratch_operands = 0 : i64, tpu.core_type = #tpu.core_type<tc>, window_params = [{transform_indices = @transform_0, window_bounds = array<i64: 256, 512>}, {pipeline_mode = #tpu.pipeline_mode<synchronous>, transform_indices = @transform_1, window_bounds = array<i64: 512, 256>}, {pipeline_mode = #tpu.pipeline_mode<synchronous>, transform_indices = @transform_2, window_bounds = array<i64: 1, 256>}, {pipeline_mode = #tpu.pipeline_mode<synchronous>, transform_indices = @transform_3, window_bounds = array<i64: 256, 128>}, {pipeline_mode = #tpu.pipeline_mode<synchronous>, transform_indices = @transform_4, window_bounds = array<i64: 1, 128>}, {pipeline_mode = #tpu.pipeline_mode<synchronous>, transform_indices = @transform_5, window_bounds = array<i64: 128, 128>}, {pipeline_mode = #tpu.pipeline_mode<synchronous>, transform_indices = @transform_6, window_bounds = array<i64: 1, 128>}, {transform_indices = @transform_7, window_bounds = array<i64: 256, 128>}]} {
    %c0 = arith.constant 0 : index
    %c0_0 = arith.constant 0 : index
    %0 = vector.load %arg1[%c0, %c0_0] : memref<256x512xf32, #tpu.memory_space<vmem>>, vector<256x512xf32>
    %1 = arith.truncf %0 : vector<256x512xf32> to vector<256x512xbf16>
    %c0_1 = arith.constant 0 : index
    %c0_2 = arith.constant 0 : index
    %2 = vector.load %arg2[%c0_1, %c0_2] : memref<512x256xbf16, #tpu.memory_space<vmem>>, vector<512x256xbf16>
    %cst = arith.constant dense<0.000000e+00> : vector<256x256xf32>
    %3 = tpu.matmul %1, %2, %cst {dimension_numbers = #tpu.dot_dimension_numbers<[1], [0], [0], [1], [0, 0, 1, 1], [], []>} : vector<256x512xbf16>, vector<512x256xbf16>, vector<256x256xf32> -> vector<256x256xf32>
    %c0_3 = arith.constant 0 : index
    %c0_4 = arith.constant 0 : index
    %4 = vector.load %arg3[%c0_3, %c0_4] : memref<1x256xf32, #tpu.memory_space<vmem>>, vector<1x256xf32>
    %5 = vector.broadcast %4 : vector<1x256xf32> to vector<256x256xf32>
    %6 = arith.addf %3, %5 : vector<256x256xf32>
    %cst_5 = arith.constant 0.000000e+00 : f32
    %7 = vector.broadcast %cst_5 : f32 to vector<256x256xf32>
    %8 = arith.maximumf %6, %7 : vector<256x256xf32>
    %9 = arith.truncf %8 : vector<256x256xf32> to vector<256x256xbf16>
    %c0_6 = arith.constant 0 : index
    %c0_7 = arith.constant 0 : index
    %10 = vector.load %arg4[%c0_6, %c0_7] : memref<256x128xbf16, #tpu.memory_space<vmem>>, vector<256x128xbf16>
    %cst_8 = arith.constant dense<0.000000e+00> : vector<256x128xf32>
    %11 = tpu.matmul %9, %10, %cst_8 {dimension_numbers = #tpu.dot_dimension_numbers<[1], [0], [0], [1], [0, 0, 1, 1], [], []>} : vector<256x256xbf16>, vector<256x128xbf16>, vector<256x128xf32> -> vector<256x128xf32>
    %c0_9 = arith.constant 0 : index
    %c0_10 = arith.constant 0 : index
    %12 = vector.load %arg5[%c0_9, %c0_10] : memref<1x128xf32, #tpu.memory_space<vmem>>, vector<1x128xf32>
    %13 = vector.broadcast %12 : vector<1x128xf32> to vector<256x128xf32>
    %14 = arith.addf %11, %13 : vector<256x128xf32>
    %cst_11 = arith.constant 0.000000e+00 : f32
    %15 = vector.broadcast %cst_11 : f32 to vector<256x128xf32>
    %16 = arith.maximumf %14, %15 : vector<256x128xf32>
    %17 = arith.truncf %16 : vector<256x128xf32> to vector<256x128xbf16>
    %c0_12 = arith.constant 0 : index
    %c0_13 = arith.constant 0 : index
    %18 = vector.load %arg6[%c0_12, %c0_13] : memref<128x128xbf16, #tpu.memory_space<vmem>>, vector<128x128xbf16>
    %cst_14 = arith.constant dense<0.000000e+00> : vector<256x128xf32>
    %19 = tpu.matmul %17, %18, %cst_14 {dimension_numbers = #tpu.dot_dimension_numbers<[1], [0], [0], [1], [0, 0, 1, 1], [], []>} : vector<256x128xbf16>, vector<128x128xbf16>, vector<256x128xf32> -> vector<256x128xf32>
    %c0_15 = arith.constant 0 : index
    %c0_16 = arith.constant 0 : index
    %20 = vector.load %arg7[%c0_15, %c0_16] : memref<1x128xf32, #tpu.memory_space<vmem>>, vector<1x128xf32>
    %21 = vector.broadcast %20 : vector<1x128xf32> to vector<256x128xf32>
    %22 = arith.addf %19, %21 : vector<256x128xf32>
    %23 = arith.truncf %22 : vector<256x128xf32> to vector<256x128xbf16>
    %c0_17 = arith.constant 0 : index
    %c0_18 = arith.constant 0 : index
    %24 = vector.load %arg8[%c0_17, %c0_18] : memref<256x128xbf16, #tpu.memory_space<vmem>>, vector<256x128xbf16>
    tpu.vector_store %arg8[%c0_17, %c0_18], %23 {strides = array<i32>} : memref<256x128xbf16, #tpu.memory_space<vmem>>, vector<256x128xbf16>,
    return
  }
  func.func @transform_0(%arg0: i32) -> (i32, i32) {
    %c0_i32 = arith.constant 0 : i32
    %c0_i32_0 = arith.constant 0 : i32
    return %arg0, %c0_i32 : i32, i32
  }
  func.func @transform_1(%arg0: i32) -> (i32, i32) {
    %c0_i32 = arith.constant 0 : i32
    %c0_i32_0 = arith.constant 0 : i32
    %c0_i32_1 = arith.constant 0 : i32
    return %c0_i32, %c0_i32_0 : i32, i32
  }
  func.func @transform_2(%arg0: i32) -> (i32, i32) {
    %c0_i32 = arith.constant 0 : i32
    %c0_i32_0 = arith.constant 0 : i32
    %c0_i32_1 = arith.constant 0 : i32
    return %c0_i32, %c0_i32_0 : i32, i32
  }
  func.func @transform_3(%arg0: i32) -> (i32, i32) {
    %c0_i32 = arith.constant 0 : i32
    %c0_i32_0 = arith.constant 0 : i32
    %c0_i32_1 = arith.constant 0 : i32
    return %c0_i32, %c0_i32_0 : i32, i32
  }
  func.func @transform_4(%arg0: i32) -> (i32, i32) {
    %c0_i32 = arith.constant 0 : i32
    %c0_i32_0 = arith.constant 0 : i32
    %c0_i32_1 = arith.constant 0 : i32
    return %c0_i32, %c0_i32_0 : i32, i32
  }
  func.func @transform_5(%arg0: i32) -> (i32, i32) {
    %c0_i32 = arith.constant 0 : i32
    %c0_i32_0 = arith.constant 0 : i32
    %c0_i32_1 = arith.constant 0 : i32
    return %c0_i32, %c0_i32_0 : i32, i32
  }
  func.func @transform_6(%arg0: i32) -> (i32, i32) {
    %c0_i32 = arith.constant 0 : i32
    %c0_i32_0 = arith.constant 0 : i32
    %c0_i32_1 = arith.constant 0 : i32
    return %c0_i32, %c0_i32_0 : i32, i32
  }
  func.func @transform_7(%arg0: i32) -> (i32, i32) {
    %c0_i32 = arith.constant 0 : i32
    %c0_i32_0 = arith.constant 0 : i32
    return %arg0, %c0_i32 : i32, i32
  }
}

</mosaic_0001>

<llo_original>
// kernel: tpu_custom_call.1
$region0: #{tpu_custom_call.1}
  #allocation0 [shape = 'u32[]', space=smem, size = 0x4, offset = 0x4, fixed_abs, tag = 'smem constant byte address 0x4 - core index']
  #allocation1 [shape = 'u32[144,128]{1,0:T(1,128)}', space=vmem, size = 0x12000, scoped, tag = 'internal scratch']
  %s0 = inlined_call_operand.hbm [shape: f32[512,512], index: 0, kind: input, shape index: {}]
  %s1 = inlined_call_operand.hbm [shape: bf16[512,256], index: 1, kind: input, shape index: {}]
  %s2 = inlined_call_operand.vmem [shape: f32[1,256], index: 2, kind: input, shape index: {}]
  %s3 = inlined_call_operand.hbm [shape: bf16[256,128], index: 3, kind: input, shape index: {}]
  %s4 = inlined_call_operand.vmem [shape: f32[1,128], index: 4, kind: input, shape index: {}]
  %s5 = inlined_call_operand.hbm [shape: bf16[128,128], index: 5, kind: input, shape index: {}]
  %s6 = inlined_call_operand.vmem [shape: f32[1,128], index: 6, kind: input, shape index: {}]
  %s7 = inlined_call_operand.hbm [shape: bf16[512,128], index: 7, kind: output, shape index: {}]
  %s8 = sld [smem:[#allocation0]]
  $region77: #{tpu_custom_call.1} parent=0
    _
  %s10 = ssub.s32 1, %s8
  %s11 = scalar_select 0, %s10, %s8
  $region1: #{tpu_custom_call.1} parent=0
    #allocation2 [shape = 'u8[1048576]{0}', space=vmem, size = 0x100000, scoped, tag = 'input window, operand 0']
    #allocation3 [shape = 's32[2]{0}', space=sflag, size = 0x8, scoped, tag = 'scoped memory for tpu_custom_call.1']
    #allocation4 [shape = 's32[2]{0}', space=sflag, size = 0x8, scoped, tag = 'scoped memory for tpu_custom_call.1']
    #allocation5 [shape = 'u8[262144]{0}', space=vmem, size = 0x40000, scoped, tag = 'input window, operand 1, single buffered']
    #allocation6 [shape = 's32[1]{0}', space=sflag, size = 0x4, scoped, tag = 'scoped memory for tpu_custom_call.1']
    #allocation7 [shape = 'u8[65536]{0}', space=vmem, size = 0x10000, scoped, tag = 'input window, operand 3, single buffered']
    #allocation8 [shape = 'u8[32768]{0}', space=vmem, size = 0x8000, scoped, tag = 'input window, operand 5, single buffered']
    #allocation9 [shape = 's32[1]{0}', space=sflag, size = 0x4, scoped, tag = 'scoped memory for tpu_custom_call.1']
    #allocation10 [shape = 'u8[131072]{0}', space=vmem, size = 0x20000, scoped, tag = 'output window, operand 0']
    %12 = vsyncpa [#allocation3], 0
    %s13 = scalar_lea.sflag [#allocation3], 1
    %14 = vsyncpa %s13, 0
    %15 = vsyncpa [#allocation6], 0
    %16 = vsyncpa [#allocation9], 0
    %17 = vsyncpa [#allocation4], 0
    %s18 = scalar_lea.sflag [#allocation4], 1
    %19 = vsyncpa %s18, 0
    loop: start=0, step=1, limit=4
    $region2: #{tpu_custom_call.1} parent=1 // loop_pre_header
      _
    $region3: #{tpu_custom_call.1} parent=1 // loop_header
      %s21 = sphi 0, %s25
      %p22 = scmp.ge.s32.totalorder %s21, 4
      %s31 = sphi 0, %s33
      %s34 = sphi 0, %s31
      %s35 = sphi 0, %s34
      %s51 = sphi 0, %s35
      %s55 = sphi 0, %s55
      %s57 = sphi 0, %s55
      %s58 = sphi 0, %s57
      %s72 = sphi 0, %s58
      %s76 = sphi 0, %s76
      %s78 = sphi 0, %s76
      %s79 = sphi 0, %s78
      %s93 = sphi 0, %s79
      %s97 = sphi 0, %s97
      %s99 = sphi 0, %s97
      %s100 = sphi 0, %s99
      %s114 = sphi 0, %s100
      %s118 = sphi 0, %s118
      %s120 = sphi 0, %s118
      %s121 = sphi 0, %s120
      %s135 = sphi 0, %s121
      %s139 = sphi 0, %s139
      %s141 = sphi 0, %s139
      %s142 = sphi 0, %s141
      %s156 = sphi 0, %s142
      %s160 = sphi 0, %s160
      %s162 = sphi 0, %s160
      %s163 = sphi 0, %s162
      %s177 = sphi 0, %s163
      %s183 = sphi 0, %s185
      %s186 = sphi 0, %s183
      %s187 = sphi 0, %s186
      %s203 = sphi 0, %s187
    $region4: #{tpu_custom_call.1} parent=1 // loop_header_branch
      %24 = sbr.rel (%p22) target = $region8
    $region5: #{tpu_custom_call.1} parent=1 // loop_body
      %s26 = ssub.s32 %s21, 1
      %s27 = ssub.s32 %s21, 2
      %s28 = sadd.s32 %s21, 1
      %s29 = ssub.s32 %s21, %s28
      %p30 = scmp.eq.s32.totalorder %s29, 0
      %s32 = sadd.s32 %s31, 1
      %s33 = scalar_select %p30, %s31, %s32
      %p36 = pneg %p30
      %p37 = scmp.eq.s32.totalorder %s21, 1
      %p38 = por %p36, %p37
      %p39 = scmp.ne.s32.totalorder %s31, %s34
      %p40 = scmp.eq.s32.totalorder %s21, 0
      %p41 = por %p39, %p40
      %p42 = scmp.ne.s32.totalorder %s31, %s34
      %p43 = scmp.eq.s32.totalorder %s26, 1
      %p44 = por %p42, %p43
      %p45 = scmp.ne.s32.totalorder %s34, %s35
      %p46 = scmp.eq.s32.totalorder %s26, 0
      %p47 = por %p45, %p46
      %p48 = scmp.ne.s32.totalorder %s34, %s35
      %p49 = scmp.eq.s32.totalorder %s27, 1
      %p50 = por %p48, %p49
      %p52 = scmp.ne.s32.totalorder %s35, %s51
      %p53 = scmp.eq.s32.totalorder %s27, 0
      %p54 = por %p52, %p53
      %s56 = sadd.s32 %s55, 1
      %p59 = scmp.eq.s32.totalorder %s21, 1
      %p60 = scmp.ne.s32.totalorder %s55, %s57
      %p61 = scmp.eq.s32.totalorder %s21, 0
      %p62 = por %p60, %p61
      %p63 = scmp.ne.s32.totalorder %s55, %s57
      %p64 = scmp.eq.s32.totalorder %s26, 1
      %p65 = por %p63, %p64
      %p66 = scmp.ne.s32.totalorder %s57, %s58
      %p67 = scmp.eq.s32.totalorder %s26, 0
      %p68 = por %p66, %p67
      %p69 = scmp.ne.s32.totalorder %s57, %s58
      %p70 = scmp.eq.s32.totalorder %s27, 1
      %p71 = por %p69, %p70
      %p73 = scmp.ne.s32.totalorder %s58, %s72
      %p74 = scmp.eq.s32.totalorder %s27, 0
      %p75 = por %p73, %p74
      %s77 = sadd.s32 %s76, 1
      %p80 = scmp.eq.s32.totalorder %s21, 1
      %p81 = scmp.ne.s32.totalorder %s76, %s78
      %p82 = scmp.eq.s32.totalorder %s21, 0
      %p83 = por %p81, %p82
      %p84 = scmp.ne.s32.totalorder %s76, %s78
      %p85 = scmp.eq.s32.totalorder %s26, 1
      %p86 = por %p84, %p85
      %p87 = scmp.ne.s32.totalorder %s78, %s79
      %p88 = scmp.eq.s32.totalorder %s26, 0
      %p89 = por %p87, %p88
      %p90 = scmp.ne.s32.totalorder %s78, %s79
      %p91 = scmp.eq.s32.totalorder %s27, 1
      %p92 = por %p90, %p91
      %p94 = scmp.ne.s32.totalorder %s79, %s93
      %p95 = scmp.eq.s32.totalorder %s27, 0
      %p96 = por %p94, %p95
      %s98 = sadd.s32 %s97, 1
      %p101 = scmp.eq.s32.totalorder %s21, 1
      %p102 = scmp.ne.s32.totalorder %s97, %s99
      %p103 = scmp.eq.s32.totalorder %s21, 0
      %p104 = por %p102, %p103
      %p105 = scmp.ne.s32.totalorder %s97, %s99
      %p106 = scmp.eq.s32.totalorder %s26, 1
      %p107 = por %p105, %p106
      %p108 = scmp.ne.s32.totalorder %s99, %s100
      %p109 = scmp.eq.s32.totalorder %s26, 0
      %p110 = por %p108, %p109
      %p111 = scmp.ne.s32.totalorder %s99, %s100
      %p112 = scmp.eq.s32.totalorder %s27, 1
      %p113 = por %p111, %p112
      %p115 = scmp.ne.s32.totalorder %s100, %s114
      %p116 = scmp.eq.s32.totalorder %s27, 0
      %p117 = por %p115, %p116
      %s119 = sadd.s32 %s118, 1
      %p122 = scmp.eq.s32.totalorder %s21, 1
      %p123 = scmp.ne.s32.totalorder %s118, %s120
      %p124 = scmp.eq.s32.totalorder %s21, 0
      %p125 = por %p123, %p124
      %p126 = scmp.ne.s32.totalorder %s118, %s120
      %p127 = scmp.eq.s32.totalorder %s26, 1
      %p128 = por %p126, %p127
      %p129 = scmp.ne.s32.totalorder %s120, %s121
      %p130 = scmp.eq.s32.totalorder %s26, 0
      %p131 = por %p129, %p130
      %p132 = scmp.ne.s32.totalorder %s120, %s121
      %p133 = scmp.eq.s32.totalorder %s27, 1
      %p134 = por %p132, %p133
      %p136 = scmp.ne.s32.totalorder %s121, %s135
      %p137 = scmp.eq.s32.totalorder %s27, 0
      %p138 = por %p136, %p137
      %s140 = sadd.s32 %s139, 1
      %p143 = scmp.eq.s32.totalorder %s21, 1
      %p144 = scmp.ne.s32.totalorder %s139, %s141
      %p145 = scmp.eq.s32.totalorder %s21, 0
      %p146 = por %p144, %p145
      %p147 = scmp.ne.s32.totalorder %s139, %s141
      %p148 = scmp.eq.s32.totalorder %s26, 1
      %p149 = por %p147, %p148
      %p150 = scmp.ne.s32.totalorder %s141, %s142
      %p151 = scmp.eq.s32.totalorder %s26, 0
      %p152 = por %p150, %p151
      %p153 = scmp.ne.s32.totalorder %s141, %s142
      %p154 = scmp.eq.s32.totalorder %s27, 1
      %p155 = por %p153, %p154
      %p157 = scmp.ne.s32.totalorder %s142, %s156
      %p158 = scmp.eq.s32.totalorder %s27, 0
      %p159 = por %p157, %p158
      %s161 = sadd.s32 %s160, 1
      %p164 = scmp.eq.s32.totalorder %s21, 1
      %p165 = scmp.ne.s32.totalorder %s160, %s162
      %p166 = scmp.eq.s32.totalorder %s21, 0
      %p167 = por %p165, %p166
      %p168 = scmp.ne.s32.totalorder %s160, %s162
      %p169 = scmp.eq.s32.totalorder %s26, 1
      %p170 = por %p168, %p169
      %p171 = scmp.ne.s32.totalorder %s162, %s163
      %p172 = scmp.eq.s32.totalorder %s26, 0
      %p173 = por %p171, %p172
      %p174 = scmp.ne.s32.totalorder %s162, %s163
      %p175 = scmp.eq.s32.totalorder %s27, 1
      %p176 = por %p174, %p175
      %p178 = scmp.ne.s32.totalorder %s163, %s177
      %p179 = scmp.eq.s32.totalorder %s27, 0
      %p180 = por %p178, %p179
      %s181 = ssub.s32 %s21, %s28
      %p182 = scmp.eq.s32.totalorder %s181, 0
      %s184 = sadd.s32 %s183, 1
      %s185 = scalar_select %p182, %s183, %s184
      %p188 = pneg %p182
      %p189 = scmp.eq.s32.totalorder %s21, 1
      %p190 = por %p188, %p189
      %p191 = scmp.ne.s32.totalorder %s183, %s186
      %p192 = scmp.eq.s32.totalorder %s21, 0
      %p193 = por %p191, %p192
      %p194 = scmp.ne.s32.totalorder %s183, %s186
      %p195 = scmp.eq.s32.totalorder %s26, 1
      %p196 = por %p194, %p195
      %p197 = scmp.ne.s32.totalorder %s186, %s187
      %p198 = scmp.eq.s32.totalorder %s26, 0
      %p199 = por %p197, %p198
      %p200 = scmp.ne.s32.totalorder %s186, %s187
      %p201 = scmp.eq.s32.totalorder %s27, 1
      %p202 = por %p200, %p201
      %p204 = scmp.ne.s32.totalorder %s187, %s203
      %p205 = scmp.eq.s32.totalorder %s27, 0
      %p206 = por %p204, %p205
      %p207 = scmp.le.s32.totalorder 1, %s21
      %p208 = scmp.lt.s32.totalorder %s21, 3
      %p209 = pnand %p207, %p208
      %p210 = pneg %p209
      // Predicated region
      $region9: #{tpu_custom_call.1} parent=5 // pred_check
        _
      $region10: #{tpu_custom_call.1} parent=5 // pred_check_branch
        %212 = sbr.rel (%p209) target = $region12
      $region11: #{tpu_custom_call.1} parent=5 // pred_region
        %s213 = ssub.s32 %s21, 1
        // Predicated region
        $region13: #{tpu_custom_call.1} parent=11 // pred_check
          %p214 = pneg %p68
        $region14: #{tpu_custom_call.1} parent=11 // pred_check_branch
          %216 = sbr.rel (%p214) target = $region16
        $region15: #{tpu_custom_call.1} parent=11 // pred_region
          %s218 = ssub.s32 8192, 8192
          %219 = vsyncadd [#allocation6], %s218
          %s220 = sshll.u32 [#allocation5], 4
          %s221 = int_to_ptr.vmem [resolvable:$true] %s220
          %226 = dma.hbm_to_vmem [thread:$0]  %s1, 8192, %s221, [#allocation6], 128, 128, 8
        $region16: #{tpu_custom_call.1} parent=11 // pred_fallthru
          _
        // Predicated region
        $region17: #{tpu_custom_call.1} parent=11 // pred_check
          %p227 = pneg %p89
        $region18: #{tpu_custom_call.1} parent=11 // pred_check_branch
          %229 = sbr.rel (%p227) target = $region20
        $region19: #{tpu_custom_call.1} parent=11 // pred_region
          _
        $region20: #{tpu_custom_call.1} parent=11 // pred_fallthru
          _
        // Predicated region
        $region21: #{tpu_custom_call.1} parent=11 // pred_check
          %p230 = pneg %p110
        $region22: #{tpu_custom_call.1} parent=11 // pred_check_branch
          %232 = sbr.rel (%p230) target = $region24
        $region23: #{tpu_custom_call.1} parent=11 // pred_region
          %s234 = ssub.s32 2048, 2048
          %235 = vsyncadd [#allocation6], %s234
          %s236 = sshll.u32 [#allocation7], 4
          %s237 = int_to_ptr.vmem [resolvable:$true] %s236
          %242 = dma.hbm_to_vmem [thread:$0]  %s3, 2048, %s237, [#allocation6], 64, 64, 4
        $region24: #{tpu_custom_call.1} parent=11 // pred_fallthru
          _
        // Predicated region
        $region25: #{tpu_custom_call.1} parent=11 // pred_check
          %p243 = pneg %p131
        $region26: #{tpu_custom_call.1} parent=11 // pred_check_branch
          %245 = sbr.rel (%p243) target = $region28
        $region27: #{tpu_custom_call.1} parent=11 // pred_region
          _
        $region28: #{tpu_custom_call.1} parent=11 // pred_fallthru
          _
        // Predicated region
        $region29: #{tpu_custom_call.1} parent=11 // pred_check
          %p246 = pneg %p152
        $region30: #{tpu_custom_call.1} parent=11 // pred_check_branch
          %248 = sbr.rel (%p246) target = $region32
        $region31: #{tpu_custom_call.1} parent=11 // pred_region
          %s250 = ssub.s32 1024, 1024
          %251 = vsyncadd [#allocation9], %s250
          %s252 = sshll.u32 [#allocation8], 4
          %s253 = int_to_ptr.vmem [resolvable:$true] %s252
          %258 = dma.hbm_to_vmem [thread:$0]  %s5, 1024, %s253, [#allocation9], 64, 64, 4
        $region32: #{tpu_custom_call.1} parent=11 // pred_fallthru
          _
        // Predicated region
        $region33: #{tpu_custom_call.1} parent=11 // pred_check
          %p259 = pneg %p173
        $region34: #{tpu_custom_call.1} parent=11 // pred_check_branch
          %261 = sbr.rel (%p259) target = $region36
        $region35: #{tpu_custom_call.1} parent=11 // pred_region
          _
        $region36: #{tpu_custom_call.1} parent=11 // pred_fallthru
          _
      $region12: #{tpu_custom_call.1} parent=5 // pred_fallthru
        _
      %p262 = scmp.lt.s32.totalorder %s21, 2
      // Predicated region
      $region37: #{tpu_custom_call.1} parent=5 // pred_check
        %p263 = pneg %p262
      $region38: #{tpu_custom_call.1} parent=5 // pred_check_branch
        %265 = sbr.rel (%p263) target = $region40
      $region39: #{tpu_custom_call.1} parent=5 // pred_region
        // Predicated region
        $region41: #{tpu_custom_call.1} parent=39 // pred_check
          %p266 = pneg %p41
        $region42: #{tpu_custom_call.1} parent=39 // pred_check_branch
          %268 = sbr.rel (%p266) target = $region44
        $region43: #{tpu_custom_call.1} parent=39 // pred_region
          %s269 = sand.u32 %s31, 1
          %s270 = scalar_lea.sflag [#allocation3], %s269
          %s271 = sand.u32 %s31, 1
          %s272 = smul.addr %s271, 1024
          %s273 = scalar_lea.vmem [#allocation2], %s272
          %s274 = smul.u32 32, %s21
          %s276 = ssub.s32 16384, 16384
          %277 = vsyncadd %s270, %s276
          %s278 = smul.addr %s274, 4
          %s279 = smul.addr %s278, 128
          %s280 = scalar_lea.hbm %s0, %s279
          %s281 = sshll.u32 %s273, 4
          %s282 = int_to_ptr.vmem [resolvable:$true] %s281
          %287 = dma.hbm_to_vmem [thread:$0]  %s280, 16384, %s282, %s270, 512, 512, 32
        $region44: #{tpu_custom_call.1} parent=39 // pred_fallthru
          _
      $region40: #{tpu_custom_call.1} parent=5 // pred_fallthru
        _
      %p288 = scmp.le.s32.totalorder 1, %s21
      %p289 = scmp.lt.s32.totalorder %s21, 3
      %p290 = pnand %p288, %p289
      %p291 = pneg %p290
      // Predicated region
      $region45: #{tpu_custom_call.1} parent=5 // pred_check
        _
      $region46: #{tpu_custom_call.1} parent=5 // pred_check_branch
        %293 = sbr.rel (%p290) target = $region48
      $region47: #{tpu_custom_call.1} parent=5 // pred_region
        %s294 = ssub.s32 %s21, 1
        %s295 = sand.u32 %s34, 1
        %s296 = scalar_lea.sflag [#allocation3], %s295
        %s297 = sand.u32 %s34, 1
        %s298 = smul.addr %s297, 1024
        %s299 = scalar_lea.vmem [#allocation2], %s298
        // Predicated region
        $region49: #{tpu_custom_call.1} parent=47 // pred_check
          %p300 = pneg %p47
        $region50: #{tpu_custom_call.1} parent=47 // pred_check_branch
          %302 = sbr.rel (%p300) target = $region52
        $region51: #{tpu_custom_call.1} parent=47 // pred_region
          %303 = dma.done %s296, 16384
        $region52: #{tpu_custom_call.1} parent=47 // pred_fallthru
          _
        // Predicated region
        $region53: #{tpu_custom_call.1} parent=47 // pred_check
          %p304 = pneg %p68
        $region54: #{tpu_custom_call.1} parent=47 // pred_check_branch
          %306 = sbr.rel (%p304) target = $region56
        $region55: #{tpu_custom_call.1} parent=47 // pred_region
          %307 = dma.done [#allocation6], 8192
        $region56: #{tpu_custom_call.1} parent=47 // pred_fallthru
          _
        // Predicated region
        $region57: #{tpu_custom_call.1} parent=47 // pred_check
          %p308 = pneg %p110
        $region58: #{tpu_custom_call.1} parent=47 // pred_check_branch
          %310 = sbr.rel (%p308) target = $region60
        $region59: #{tpu_custom_call.1} parent=47 // pred_region
          %311 = dma.done [#allocation6], 2048
        $region60: #{tpu_custom_call.1} parent=47 // pred_fallthru
          _
        // Predicated region
        $region61: #{tpu_custom_call.1} parent=47 // pred_check
          %p312 = pneg %p152
        $region62: #{tpu_custom_call.1} parent=47 // pred_check_branch
          %314 = sbr.rel (%p312) target = $region64
        $region63: #{tpu_custom_call.1} parent=47 // pred_region
          %315 = dma.done [#allocation9], 1024
        $region64: #{tpu_custom_call.1} parent=47 // pred_fallthru
          _
        %s316 = sand.u32 %s34, 1
        %s317 = scalar_lea.sflag [#allocation3], %s316
        %s318 = sand.u32 %s34, 1
        %s319 = smul.addr %s318, 1024
        %s320 = scalar_lea.vmem [#allocation2], %s319
        %p321 = pneg %p47
        %p322 = pneg %p44
        %p323 = pneg %p68
        %p324 = pneg %p65
        %p325 = pneg %p89
        %p326 = pneg %p86
        %p327 = pneg %p110
        %p328 = pneg %p107
        %p329 = pneg %p131
        %p330 = pneg %p128
        %p331 = pneg %p152
        %p332 = pneg %p149
        %p333 = pneg %p173
        %p334 = pneg %p170
        %p335 = pneg %p199
        %p336 = pneg %p196
        %s337 = sand.u32 %s186, 1
        %s338 = scalar_lea.sflag [#allocation4], %s337
        %s339 = sand.u32 %s186, 1
        %s340 = smul.addr %s339, 128
        %s341 = scalar_lea.vmem [#allocation10], %s340
        %s342 = smul.u32 32, %s26
        %s343 = smul.u32 32, %s26
        %v345 = vld [vmem:[%s299] sm:$0xff]
        %v346 = vld [vmem:[%s299 + $0x8] sm:$0xff]
        %v347 = vld [vmem:[%s299 + $0x10] sm:$0xff]
        %v348 = vld [vmem:[%s299 + $0x18] sm:$0xff]
        %v349 = vld [vmem:[%s299 + $0x20] sm:$0xff]
        %v350 = vld [vmem:[%s299 + $0x28] sm:$0xff]
        %v351 = vld [vmem:[%s299 + $0x30] sm:$0xff]
        %v352 = vld [vmem:[%s299 + $0x38] sm:$0xff]
        %v353 = vld [vmem:[%s299 + $0x40] sm:$0xff]
        %v354 = vld [vmem:[%s299 + $0x48] sm:$0xff]
        %v355 = vld [vmem:[%s299 + $0x50] sm:$0xff]
        %v356 = vld [vmem:[%s299 + $0x58] sm:$0xff]
        %v357 = vld [vmem:[%s299 + $0x60] sm:$0xff]
        %v358 = vld [vmem:[%s299 + $0x68] sm:$0xff]
        %v359 = vld [vmem:[%s299 + $0x70] sm:$0xff]
        %v360 = vld [vmem:[%s299 + $0x78] sm:$0xff]
        %v361 = vld [vmem:[%s299 + $0x80] sm:$0xff]
        %v362 = vld [vmem:[%s299 + $0x88] sm:$0xff]
        %v363 = vld [vmem:[%s299 + $0x90] sm:$0xff]
        %v364 = vld [vmem:[%s299 + $0x98] sm:$0xff]
        %v365 = vld [vmem:[%s299 + $0xa0] sm:$0xff]
        %v366 = vld [vmem:[%s299 + $0xa8] sm:$0xff]
        %v367 = vld [vmem:[%s299 + $0xb0] sm:$0xff]
        %v368 = vld [vmem:[%s299 + $0xb8] sm:$0xff]
        %v369 = vld [vmem:[%s299 + $0xc0] sm:$0xff]
        %v370 = vld [vmem:[%s299 + $0xc8] sm:$0xff]
        %v371 = vld [vmem:[%s299 + $0xd0] sm:$0xff]
        %v372 = vld [vmem:[%s299 + $0xd8] sm:$0xff]
        %v373 = vld [vmem:[%s299 + $0xe0] sm:$0xff]
        %v374 = vld [vmem:[%s299 + $0xe8] sm:$0xff]
        %v375 = vld [vmem:[%s299 + $0xf0] sm:$0xff]
        %v376 = vld [vmem:[%s299 + $0xf8] sm:$0xff]
        %v377 = vld [vmem:[%s299 + $0x100] sm:$0xff]
        %v378 = vld [vmem:[%s299 + $0x108] sm:$0xff]
        %v379 = vld [vmem:[%s299 + $0x110] sm:$0xff]
        %v380 = vld [vmem:[%s299 + $0x118] sm:$0xff]
        %v381 = vld [vmem:[%s299 + $0x120] sm:$0xff]
        %v382 = vld [vmem:[%s299 + $0x128] sm:$0xff]
        %v383 = vld [vmem:[%s299 + $0x130] sm:$0xff]
        %v384 = vld [vmem:[%s299 + $0x138] sm:$0xff]
        %v385 = vld [vmem:[%s299 + $0x140] sm:$0xff]
        %v386 = vld [vmem:[%s299 + $0x148] sm:$0xff]
        %v387 = vld [vmem:[%s299 + $0x150] sm:$0xff]
        %v388 = vld [vmem:[%s299 + $0x158] sm:$0xff]
        %v389 = vld [vmem:[%s299 + $0x160] sm:$0xff]
        %v390 = vld [vmem:[%s299 + $0x168] sm:$0xff]
        %v391 = vld [vmem:[%s299 + $0x170] sm:$0xff]
        %v392 = vld [vmem:[%s299 + $0x178] sm:$0xff]
        %v393 = vld [vmem:[%s299 + $0x180] sm:$0xff]
        %v394 = vld [vmem:[%s299 + $0x188] sm:$0xff]
        %v395 = vld [vmem:[%s299 + $0x190] sm:$0xff]
        %v396 = vld [vmem:[%s299 + $0x198] sm:$0xff]
        %v397 = vld [vmem:[%s299 + $0x1a0] sm:$0xff]
        %v398 = vld [vmem:[%s299 + $0x1a8] sm:$0xff]
        %v399 = vld [vmem:[%s299 + $0x1b0] sm:$0xff]
        %v400 = vld [vmem:[%s299 + $0x1b8] sm:$0xff]
        %v401 = vld [vmem:[%s299 + $0x1c0] sm:$0xff]
        %v402 = vld [vmem:[%s299 + $0x1c8] sm:$0xff]
        %v403 = vld [vmem:[%s299 + $0x1d0] sm:$0xff]
        %v404 = vld [vmem:[%s299 + $0x1d8] sm:$0xff]
        %v405 = vld [vmem:[%s299 + $0x1e0] sm:$0xff]
        %v406 = vld [vmem:[%s299 + $0x1e8] sm:$0xff]
        %v407 = vld [vmem:[%s299 + $0x1f0] sm:$0xff]
        %v408 = vld [vmem:[%s299 + $0x1f8] sm:$0xff]
        %v409 = vld [vmem:[%s299 + $0x200] sm:$0xff]
        %v410 = vld [vmem:[%s299 + $0x208] sm:$0xff]
        %v411 = vld [vmem:[%s299 + $0x210] sm:$0xff]
        %v412 = vld [vmem:[%s299 + $0x218] sm:$0xff]
        %v413 = vld [vmem:[%s299 + $0x220] sm:$0xff]
        %v414 = vld [vmem:[%s299 + $0x228] sm:$0xff]
        %v415 = vld [vmem:[%s299 + $0x230] sm:$0xff]
        %v416 = vld [vmem:[%s299 + $0x238] sm:$0xff]
        %v417 = vld [vmem:[%s299 + $0x240] sm:$0xff]
        %v418 = vld [vmem:[%s299 + $0x248] sm:$0xff]
        %v419 = vld [vmem:[%s299 + $0x250] sm:$0xff]
        %v420 = vld [vmem:[%s299 + $0x258] sm:$0xff]
        %v421 = vld [vmem:[%s299 + $0x260] sm:$0xff]
        %v422 = vld [vmem:[%s299 + $0x268] sm:$0xff]
        %v423 = vld [vmem:[%s299 + $0x270] sm:$0xff]
        %v424 = vld [vmem:[%s299 + $0x278] sm:$0xff]
        %v425 = vld [vmem:[%s299 + $0x280] sm:$0xff]
        %v426 = vld [vmem:[%s299 + $0x288] sm:$0xff]
        %v427 = vld [vmem:[%s299 + $0x290] sm:$0xff]
        %v428 = vld [vmem:[%s299 + $0x298] sm:$0xff]
        %v429 = vld [vmem:[%s299 + $0x2a0] sm:$0xff]
        %v430 = vld [vmem:[%s299 + $0x2a8] sm:$0xff]
        %v431 = vld [vmem:[%s299 + $0x2b0] sm:$0xff]
        %v432 = vld [vmem:[%s299 + $0x2b8] sm:$0xff]
        %v433 = vld [vmem:[%s299 + $0x2c0] sm:$0xff]
        %v434 = vld [vmem:[%s299 + $0x2c8] sm:$0xff]
        %v435 = vld [vmem:[%s299 + $0x2d0] sm:$0xff]
        %v436 = vld [vmem:[%s299 + $0x2d8] sm:$0xff]
        %v437 = vld [vmem:[%s299 + $0x2e0] sm:$0xff]
        %v438 = vld [vmem:[%s299 + $0x2e8] sm:$0xff]
        %v439 = vld [vmem:[%s299 + $0x2f0] sm:$0xff]
        %v440 = vld [vmem:[%s299 + $0x2f8] sm:$0xff]
        %v441 = vld [vmem:[%s299 + $0x300] sm:$0xff]
        %v442 = vld [vmem:[%s299 + $0x308] sm:$0xff]
        %v443 = vld [vmem:[%s299 + $0x310] sm:$0xff]
        %v444 = vld [vmem:[%s299 + $0x318] sm:$0xff]
        %v445 = vld [vmem:[%s299 + $0x320] sm:$0xff]
        %v446 = vld [vmem:[%s299 + $0x328] sm:$0xff]
        %v447 = vld [vmem:[%s299 + $0x330] sm:$0xff]
        %v448 = vld [vmem:[%s299 + $0x338] sm:$0xff]
        %v449 = vld [vmem:[%s299 + $0x340] sm:$0xff]
        %v450 = vld [vmem:[%s299 + $0x348] sm:$0xff]
        %v451 = vld [vmem:[%s299 + $0x350] sm:$0xff]
        %v452 = vld [vmem:[%s299 + $0x358] sm:$0xff]
        %v453 = vld [vmem:[%s299 + $0x360] sm:$0xff]
        %v454 = vld [vmem:[%s299 + $0x368] sm:$0xff]
        %v455 = vld [vmem:[%s299 + $0x370] sm:$0xff]
        %v456 = vld [vmem:[%s299 + $0x378] sm:$0xff]
        %v457 = vld [vmem:[%s299 + $0x380] sm:$0xff]
        %v458 = vld [vmem:[%s299 + $0x388] sm:$0xff]
        %v459 = vld [vmem:[%s299 + $0x390] sm:$0xff]
        %v460 = vld [vmem:[%s299 + $0x398] sm:$0xff]
        %v461 = vld [vmem:[%s299 + $0x3a0] sm:$0xff]
        %v462 = vld [vmem:[%s299 + $0x3a8] sm:$0xff]
        %v463 = vld [vmem:[%s299 + $0x3b0] sm:$0xff]
        %v464 = vld [vmem:[%s299 + $0x3b8] sm:$0xff]
        %v465 = vld [vmem:[%s299 + $0x3c0] sm:$0xff]
        %v466 = vld [vmem:[%s299 + $0x3c8] sm:$0xff]
        %v467 = vld [vmem:[%s299 + $0x3d0] sm:$0xff]
        %v468 = vld [vmem:[%s299 + $0x3d8] sm:$0xff]
        %v469 = vld [vmem:[%s299 + $0x3e0] sm:$0xff]
        %v470 = vld [vmem:[%s299 + $0x3e8] sm:$0xff]
        %v471 = vld [vmem:[%s299 + $0x3f0] sm:$0xff]
        %v472 = vld [vmem:[%s299 + $0x3f8] sm:$0xff]
        %v473 = vpack.c.bf16 %v349, %v345
        %v474 = vpack.c.bf16 %v350, %v346
        %v475 = vpack.c.bf16 %v351, %v347
        %v476 = vpack.c.bf16 %v352, %v348
        %v477 = vpack.c.bf16 %v357, %v353
        %v478 = vpack.c.bf16 %v358, %v354
        %v479 = vpack.c.bf16 %v359, %v355
        %v480 = vpack.c.bf16 %v360, %v356
        %v481 = vpack.c.bf16 %v365, %v361
        %v482 = vpack.c.bf16 %v366, %v362
        %v483 = vpack.c.bf16 %v367, %v363
        %v484 = vpack.c.bf16 %v368, %v364
        %v485 = vpack.c.bf16 %v373, %v369
        %v486 = vpack.c.bf16 %v374, %v370
        %v487 = vpack.c.bf16 %v375, %v371
        %v488 = vpack.c.bf16 %v376, %v372
        %v489 = vpack.c.bf16 %v381, %v377
        %v490 = vpack.c.bf16 %v382, %v378
        %v491 = vpack.c.bf16 %v383, %v379
        %v492 = vpack.c.bf16 %v384, %v380
        %v493 = vpack.c.bf16 %v389, %v385
        %v494 = vpack.c.bf16 %v390, %v386
        %v495 = vpack.c.bf16 %v391, %v387
        %v496 = vpack.c.bf16 %v392, %v388
        %v497 = vpack.c.bf16 %v397, %v393
        %v498 = vpack.c.bf16 %v398, %v394
        %v499 = vpack.c.bf16 %v399, %v395
        %v500 = vpack.c.bf16 %v400, %v396
        %v501 = vpack.c.bf16 %v405, %v401
        %v502 = vpack.c.bf16 %v406, %v402
        %v503 = vpack.c.bf16 %v407, %v403
        %v504 = vpack.c.bf16 %v408, %v404
        %v505 = vpack.c.bf16 %v413, %v409
        %v506 = vpack.c.bf16 %v414, %v410
        %v507 = vpack.c.bf16 %v415, %v411
        %v508 = vpack.c.bf16 %v416, %v412
        %v509 = vpack.c.bf16 %v421, %v417
        %v510 = vpack.c.bf16 %v422, %v418
        %v511 = vpack.c.bf16 %v423, %v419
        %v512 = vpack.c.bf16 %v424, %v420
        %v513 = vpack.c.bf16 %v429, %v425
        %v514 = vpack.c.bf16 %v430, %v426
        %v515 = vpack.c.bf16 %v431, %v427
        %v516 = vpack.c.bf16 %v432, %v428
        %v517 = vpack.c.bf16 %v437, %v433
        %v518 = vpack.c.bf16 %v438, %v434
        %v519 = vpack.c.bf16 %v439, %v435
        %v520 = vpack.c.bf16 %v440, %v436
        %v521 = vpack.c.bf16 %v445, %v441
        %v522 = vpack.c.bf16 %v446, %v442
        %v523 = vpack.c.bf16 %v447, %v443
        %v524 = vpack.c.bf16 %v448, %v444
        %v525 = vpack.c.bf16 %v453, %v449
        %v526 = vpack.c.bf16 %v454, %v450
        %v527 = vpack.c.bf16 %v455, %v451
        %v528 = vpack.c.bf16 %v456, %v452
        %v529 = vpack.c.bf16 %v461, %v457
        %v530 = vpack.c.bf16 %v462, %v458
        %v531 = vpack.c.bf16 %v463, %v459
        %v532 = vpack.c.bf16 %v464, %v460
        %v533 = vpack.c.bf16 %v469, %v465
        %v534 = vpack.c.bf16 %v470, %v466
        %v535 = vpack.c.bf16 %v471, %v467
        %v536 = vpack.c.bf16 %v472, %v468
        %v537 = vld [vmem:[#allocation5] sm:$0xff]
        %v538 = vld [vmem:[#allocation5 + $0x8] sm:$0xff]
        %v539 = vld [vmem:[#allocation5 + $0x10] sm:$0xff]
        %v540 = vld [vmem:[#allocation5 + $0x18] sm:$0xff]
        %v541 = vld [vmem:[#allocation5 + $0x20] sm:$0xff]
        %v542 = vld [vmem:[#allocation5 + $0x28] sm:$0xff]
        %v543 = vld [vmem:[#allocation5 + $0x30] sm:$0xff]
        %v544 = vld [vmem:[#allocation5 + $0x38] sm:$0xff]
        %v545 = vld [vmem:[#allocation5 + $0x40] sm:$0xff]
        %v546 = vld [vmem:[#allocation5 + $0x48] sm:$0xff]
        %v547 = vld [vmem:[#allocation5 + $0x50] sm:$0xff]
        %v548 = vld [vmem:[#allocation5 + $0x58] sm:$0xff]
        %v549 = vld [vmem:[#allocation5 + $0x60] sm:$0xff]
        %v550 = vld [vmem:[#allocation5 + $0x68] sm:$0xff]
        %v551 = vld [vmem:[#allocation5 + $0x70] sm:$0xff]
        %v552 = vld [vmem:[#allocation5 + $0x78] sm:$0xff]
        %v553 = vld [vmem:[#allocation5 + $0x80] sm:$0xff]
        %v554 = vld [vmem:[#allocation5 + $0x88] sm:$0xff]
        %v555 = vld [vmem:[#allocation5 + $0x90] sm:$0xff]
        %v556 = vld [vmem:[#allocation5 + $0x98] sm:$0xff]
        %v557 = vld [vmem:[#allocation5 + $0xa0] sm:$0xff]
        %v558 = vld [vmem:[#allocation5 + $0xa8] sm:$0xff]
        %v559 = vld [vmem:[#allocation5 + $0xb0] sm:$0xff]
        %v560 = vld [vmem:[#allocation5 + $0xb8] sm:$0xff]
        %v561 = vld [vmem:[#allocation5 + $0xc0] sm:$0xff]
        %v562 = vld [vmem:[#allocation5 + $0xc8] sm:$0xff]
        %v563 = vld [vmem:[#allocation5 + $0xd0] sm:$0xff]
        %v564 = vld [vmem:[#allocation5 + $0xd8] sm:$0xff]
        %v565 = vld [vmem:[#allocation5 + $0xe0] sm:$0xff]
        %v566 = vld [vmem:[#allocation5 + $0xe8] sm:$0xff]
        %v567 = vld [vmem:[#allocation5 + $0xf0] sm:$0xff]
        %v568 = vld [vmem:[#allocation5 + $0xf8] sm:$0xff]
        %v569 = vld [vmem:[#allocation5 + $0x100] sm:$0xff]
        %v570 = vld [vmem:[#allocation5 + $0x108] sm:$0xff]
        %v571 = vld [vmem:[#allocation5 + $0x110] sm:$0xff]
        %v572 = vld [vmem:[#allocation5 + $0x118] sm:$0xff]
        %v573 = vld [vmem:[#allocation5 + $0x120] sm:$0xff]
        %v574 = vld [vmem:[#allocation5 + $0x128] sm:$0xff]
        %v575 = vld [vmem:[#allocation5 + $0x130] sm:$0xff]
        %v576 = vld [vmem:[#allocation5 + $0x138] sm:$0xff]
        %v577 = vld [vmem:[#allocation5 + $0x140] sm:$0xff]
        %v578 = vld [vmem:[#allocation5 + $0x148] sm:$0xff]
        %v579 = vld [vmem:[#allocation5 + $0x150] sm:$0xff]
        %v580 = vld [vmem:[#allocation5 + $0x158] sm:$0xff]
        %v581 = vld [vmem:[#allocation5 + $0x160] sm:$0xff]
        %v582 = vld [vmem:[#allocation5 + $0x168] sm:$0xff]
        %v583 = vld [vmem:[#allocation5 + $0x170] sm:$0xff]
        %v584 = vld [vmem:[#allocation5 + $0x178] sm:$0xff]
        %v585 = vld [vmem:[#allocation5 + $0x180] sm:$0xff]
        %v586 = vld [vmem:[#allocation5 + $0x188] sm:$0xff]
        %v587 = vld [vmem:[#allocation5 + $0x190] sm:$0xff]
        %v588 = vld [vmem:[#allocation5 + $0x198] sm:$0xff]
        %v589 = vld [vmem:[#allocation5 + $0x1a0] sm:$0xff]
        %v590 = vld [vmem:[#allocation5 + $0x1a8] sm:$0xff]
        %v591 = vld [vmem:[#allocation5 + $0x1b0] sm:$0xff]
        %v592 = vld [vmem:[#allocation5 + $0x1b8] sm:$0xff]
        %v593 = vld [vmem:[#allocation5 + $0x1c0] sm:$0xff]
        %v594 = vld [vmem:[#allocation5 + $0x1c8] sm:$0xff]
        %v595 = vld [vmem:[#allocation5 + $0x1d0] sm:$0xff]
        %v596 = vld [vmem:[#allocation5 + $0x1d8] sm:$0xff]
        %v597 = vld [vmem:[#allocation5 + $0x1e0] sm:$0xff]
        %v598 = vld [vmem:[#allocation5 + $0x1e8] sm:$0xff]
        %v599 = vld [vmem:[#allocation5 + $0x1f0] sm:$0xff]
        %v600 = vld [vmem:[#allocation5 + $0x1f8] sm:$0xff]
        %v601 = vld [vmem:[%s2] sm:$0x3]
        %v603 = vlaneseq
        %v604 = vshrl.u32 %v603, 7
        %v605 = vsub.s32 0, %v604
        %v606 = vrot.slane %v601, %v605
        %v607 = vlaneseq
        %v608 = vshrl.u32 %v607, 7
        %v609 = vsub.s32 1, %v608
        %v610 = vrot.slane %v601, %v609
        %v677 = vunpack.c.l.b16 %v537
        %v678 = vunpack.c.h.b16 %v537
        %v679 = vunpack.c.l.b16 %v538
        %v680 = vunpack.c.h.b16 %v538
        %v681 = vunpack.c.l.b16 %v539
        %v682 = vunpack.c.h.b16 %v539
        %v683 = vunpack.c.l.b16 %v540
        %v684 = vunpack.c.h.b16 %v540
        %v685 = vunpack.c.l.b16 %v541
        %v686 = vunpack.c.h.b16 %v541
        %v687 = vunpack.c.l.b16 %v542
        %v688 = vunpack.c.h.b16 %v542
        %v689 = vunpack.c.l.b16 %v543
        %v690 = vunpack.c.h.b16 %v543
        %v691 = vunpack.c.l.b16 %v544
        %v692 = vunpack.c.h.b16 %v544
        %v693 = vunpack.c.l.b16 %v545
        %v694 = vunpack.c.h.b16 %v545
        %v695 = vunpack.c.l.b16 %v546
        %v696 = vunpack.c.h.b16 %v546
        %v697 = vunpack.c.l.b16 %v547
        %v698 = vunpack.c.h.b16 %v547
        %v699 = vunpack.c.l.b16 %v548
        %v700 = vunpack.c.h.b16 %v548
        %v701 = vunpack.c.l.b16 %v549
        %v702 = vunpack.c.h.b16 %v549
        %v703 = vunpack.c.l.b16 %v550
        %v704 = vunpack.c.h.b16 %v550
        %v705 = vunpack.c.l.b16 %v551
        %v706 = vunpack.c.h.b16 %v551
        %v707 = vunpack.c.l.b16 %v552
        %v708 = vunpack.c.h.b16 %v552
        %v709 = vunpack.c.l.b16 %v553
        %v710 = vunpack.c.h.b16 %v553
        %v711 = vunpack.c.l.b16 %v554
        %v712 = vunpack.c.h.b16 %v554
        %v713 = vunpack.c.l.b16 %v555
        %v714 = vunpack.c.h.b16 %v555
        %v715 = vunpack.c.l.b16 %v556
        %v716 = vunpack.c.h.b16 %v556
        %v717 = vunpack.c.l.b16 %v557
        %v718 = vunpack.c.h.b16 %v557
        %v719 = vunpack.c.l.b16 %v558
        %v720 = vunpack.c.h.b16 %v558
        %v721 = vunpack.c.l.b16 %v559
        %v722 = vunpack.c.h.b16 %v559
        %v723 = vunpack.c.l.b16 %v560
        %v724 = vunpack.c.h.b16 %v560
        %v725 = vunpack.c.l.b16 %v561
        %v726 = vunpack.c.h.b16 %v561
        %v727 = vunpack.c.l.b16 %v562
        %v728 = vunpack.c.h.b16 %v562
        %v729 = vunpack.c.l.b16 %v563
        %v730 = vunpack.c.h.b16 %v563
        %v731 = vunpack.c.l.b16 %v564
        %v732 = vunpack.c.h.b16 %v564
        %v733 = vunpack.c.l.b16 %v565
        %v734 = vunpack.c.h.b16 %v565
        %v735 = vunpack.c.l.b16 %v566
        %v736 = vunpack.c.h.b16 %v566
        %v737 = vunpack.c.l.b16 %v567
        %v738 = vunpack.c.h.b16 %v567
        %v739 = vunpack.c.l.b16 %v568
        %v740 = vunpack.c.h.b16 %v568
        %v741 = vunpack.c.l.b16 %v569
        %v742 = vunpack.c.h.b16 %v569
        %v743 = vunpack.c.l.b16 %v570
        %v744 = vunpack.c.h.b16 %v570
        %v745 = vunpack.c.l.b16 %v571
        %v746 = vunpack.c.h.b16 %v571
        %v747 = vunpack.c.l.b16 %v572
        %v748 = vunpack.c.h.b16 %v572
        %v749 = vunpack.c.l.b16 %v573
        %v750 = vunpack.c.h.b16 %v573
        %v751 = vunpack.c.l.b16 %v574
        %v752 = vunpack.c.h.b16 %v574
        %v753 = vunpack.c.l.b16 %v575
        %v754 = vunpack.c.h.b16 %v575
        %v755 = vunpack.c.l.b16 %v576
        %v756 = vunpack.c.h.b16 %v576
        %v757 = vunpack.c.l.b16 %v577
        %v758 = vunpack.c.h.b16 %v577
        %v759 = vunpack.c.l.b16 %v578
        %v760 = vunpack.c.h.b16 %v578
        %v761 = vunpack.c.l.b16 %v579
        %v762 = vunpack.c.h.b16 %v579
        %v763 = vunpack.c.l.b16 %v580
        %v764 = vunpack.c.h.b16 %v580
        %v765 = vunpack.c.l.b16 %v581
        %v766 = vunpack.c.h.b16 %v581
        %v767 = vunpack.c.l.b16 %v582
        %v768 = vunpack.c.h.b16 %v582
        %v769 = vunpack.c.l.b16 %v583
        %v770 = vunpack.c.h.b16 %v583
        %v771 = vunpack.c.l.b16 %v584
        %v772 = vunpack.c.h.b16 %v584
        %v773 = vunpack.c.l.b16 %v585
        %v774 = vunpack.c.h.b16 %v585
        %v775 = vunpack.c.l.b16 %v586
        %v776 = vunpack.c.h.b16 %v586
        %v777 = vunpack.c.l.b16 %v587
        %v778 = vunpack.c.h.b16 %v587
        %v779 = vunpack.c.l.b16 %v588
        %v780 = vunpack.c.h.b16 %v588
        %v781 = vunpack.c.l.b16 %v589
        %v782 = vunpack.c.h.b16 %v589
        %v783 = vunpack.c.l.b16 %v590
        %v784 = vunpack.c.h.b16 %v590
        %v785 = vunpack.c.l.b16 %v591
        %v786 = vunpack.c.h.b16 %v591
        %v787 = vunpack.c.l.b16 %v592
        %v788 = vunpack.c.h.b16 %v592
        %v789 = vunpack.c.l.b16 %v593
        %v790 = vunpack.c.h.b16 %v593
        %v791 = vunpack.c.l.b16 %v594
        %v792 = vunpack.c.h.b16 %v594
        %v793 = vunpack.c.l.b16 %v595
        %v794 = vunpack.c.h.b16 %v595
        %v795 = vunpack.c.l.b16 %v596
        %v796 = vunpack.c.h.b16 %v596
        %v797 = vunpack.c.l.b16 %v597
        %v798 = vunpack.c.h.b16 %v597
        %v799 = vunpack.c.l.b16 %v598
        %v800 = vunpack.c.h.b16 %v598
        %v801 = vunpack.c.l.b16 %v599
        %v802 = vunpack.c.h.b16 %v599
        %v803 = vunpack.c.l.b16 %v600
        %v804 = vunpack.c.h.b16 %v600
        %v805 = vpack.c.b16 %v679, %v677
        %v806 = vpack.c.b16 %v680, %v678
        %v807 = vpack.c.b16 %v683, %v681
        %v808 = vpack.c.b16 %v684, %v682
        %v809 = vpack.c.b16 %v687, %v685
        %v810 = vpack.c.b16 %v688, %v686
        %v811 = vpack.c.b16 %v691, %v689
        %v812 = vpack.c.b16 %v692, %v690
        %v813 = vpack.c.b16 %v695, %v693
        %v814 = vpack.c.b16 %v696, %v694
        %v815 = vpack.c.b16 %v699, %v697
        %v816 = vpack.c.b16 %v700, %v698
        %v817 = vpack.c.b16 %v703, %v701
        %v818 = vpack.c.b16 %v704, %v702
        %v819 = vpack.c.b16 %v707, %v705
        %v820 = vpack.c.b16 %v708, %v706
        %v821 = vpack.c.b16 %v711, %v709
        %v822 = vpack.c.b16 %v712, %v710
        %v823 = vpack.c.b16 %v715, %v713
        %v824 = vpack.c.b16 %v716, %v714
        %v825 = vpack.c.b16 %v719, %v717
        %v826 = vpack.c.b16 %v720, %v718
        %v827 = vpack.c.b16 %v723, %v721
        %v828 = vpack.c.b16 %v724, %v722
        %v829 = vpack.c.b16 %v727, %v725
        %v830 = vpack.c.b16 %v728, %v726
        %v831 = vpack.c.b16 %v731, %v729
        %v832 = vpack.c.b16 %v732, %v730
        %v833 = vpack.c.b16 %v735, %v733
        %v834 = vpack.c.b16 %v736, %v734
        %v835 = vpack.c.b16 %v739, %v737
        %v836 = vpack.c.b16 %v740, %v738
        %v837 = vpack.c.b16 %v743, %v741
        %v838 = vpack.c.b16 %v744, %v742
        %v839 = vpack.c.b16 %v747, %v745
        %v840 = vpack.c.b16 %v748, %v746
        %v841 = vpack.c.b16 %v751, %v749
        %v842 = vpack.c.b16 %v752, %v750
        %v843 = vpack.c.b16 %v755, %v753
        %v844 = vpack.c.b16 %v756, %v754
        %v845 = vpack.c.b16 %v759, %v757
        %v846 = vpack.c.b16 %v760, %v758
        %v847 = vpack.c.b16 %v763, %v761
        %v848 = vpack.c.b16 %v764, %v762
        %v849 = vpack.c.b16 %v767, %v765
        %v850 = vpack.c.b16 %v768, %v766
        %v851 = vpack.c.b16 %v771, %v769
        %v852 = vpack.c.b16 %v772, %v770
        %v853 = vpack.c.b16 %v775, %v773
        %v854 = vpack.c.b16 %v776, %v774
        %v855 = vpack.c.b16 %v779, %v777
        %v856 = vpack.c.b16 %v780, %v778
        %v857 = vpack.c.b16 %v783, %v781
        %v858 = vpack.c.b16 %v784, %v782
        %v859 = vpack.c.b16 %v787, %v785
        %v860 = vpack.c.b16 %v788, %v786
        %v861 = vpack.c.b16 %v791, %v789
        %v862 = vpack.c.b16 %v792, %v790
        %v863 = vpack.c.b16 %v795, %v793
        %v864 = vpack.c.b16 %v796, %v794
        %v865 = vpack.c.b16 %v799, %v797
        %v866 = vpack.c.b16 %v800, %v798
        %v867 = vpack.c.b16 %v803, %v801
        %v868 = vpack.c.b16 %v804, %v802
        %933 = vmatprep.subr.bf16.mxu0 %v820
        %934 = vmatpush1.bf16.msra.mxu0 %v819
        %935 = vmatprep.subr.bf16.mxu0 %v818
        %936 = vmatpush1.bf16.msra.mxu0 %v817
        %937 = vmatprep.subr.bf16.mxu0 %v816
        %938 = vmatpush1.bf16.msra.mxu0 %v815
        %939 = vmatprep.subr.bf16.mxu0 %v814
        %940 = vmatpush1.bf16.msra.mxu0 %v813
        %941 = vmatprep.subr.bf16.mxu0 %v812
        %942 = vmatpush1.bf16.msra.mxu0 %v811
        %943 = vmatprep.subr.bf16.mxu0 %v810
        %944 = vmatpush1.bf16.msra.mxu0 %v809
        %945 = vmatprep.subr.bf16.mxu0 %v808
        %946 = vmatpush1.bf16.msra.mxu0 %v807
        %947 = vmatprep.subr.bf16.mxu0 %v806
        %948 = vmatpush1.bf16.msra.mxu0 %v805
        %949 = vmatprep.subr.bf16.mxu0 %v836
        %950 = vmatpush2.bf16.msra.mxu0 %v835
        %951 = vmatprep.subr.bf16.mxu0 %v834
        %952 = vmatpush2.bf16.msra.mxu0 %v833
        %953 = vmatprep.subr.bf16.mxu0 %v832
        %954 = vmatpush2.bf16.msra.mxu0 %v831
        %955 = vmatprep.subr.bf16.mxu0 %v830
        %956 = vmatpush2.bf16.msra.mxu0 %v829
        %957 = vmatprep.subr.bf16.mxu0 %v828
        %958 = vmatpush2.bf16.msra.mxu0 %v827
        %959 = vmatprep.subr.bf16.mxu0 %v826
        %960 = vmatpush2.bf16.msra.mxu0 %v825
        %961 = vmatprep.subr.bf16.mxu0 %v824
        %962 = vmatpush2.bf16.msra.mxu0 %v823
        %963 = vmatprep.subr.bf16.mxu0 %v822
        %964 = vmatpush2.bf16.msra.mxu0 %v821
        %965 = vmatprep.mubr.bf16.mxu0 %v474
        %966 = vmatmul.mubr.bf16.gmra.mxu0 %v473
        %v967 = vpop.f32.mrf.mxu0
        %v968 = vadd.f32 %v606, %v967
        %v969 = vpop.f32.mrf.mxu0
        %v970 = vadd.f32 %v610, %v969
        %v971 = vpop.f32.mrf.mxu0
        %v972 = vadd.f32 %v606, %v971
        %v973 = vpop.f32.mrf.mxu0
        %v974 = vadd.f32 %v610, %v973
        %975 = vmatprep.mubr.bf16.mxu0 %v478
        %976 = vmatmul.mubr.bf16.gmra.mxu0 %v477
        %v977 = vpop.f32.mrf.mxu0
        %v978 = vadd.f32 %v606, %v977
        %v979 = vpop.f32.mrf.mxu0
        %v980 = vadd.f32 %v610, %v979
        %v981 = vpop.f32.mrf.mxu0
        %v982 = vadd.f32 %v606, %v981
        %v983 = vpop.f32.mrf.mxu0
        %v984 = vadd.f32 %v610, %v983
        %985 = vmatprep.mubr.bf16.mxu0 %v482
        %986 = vmatmul.mubr.bf16.gmra.mxu0 %v481
        %v987 = vpop.f32.mrf.mxu0
        %v988 = vadd.f32 %v606, %v987
        %v989 = vpop.f32.mrf.mxu0
        %v990 = vadd.f32 %v610, %v989
        %v991 = vpop.f32.mrf.mxu0
        %v992 = vadd.f32 %v606, %v991
        %v993 = vpop.f32.mrf.mxu0
        %v994 = vadd.f32 %v610, %v993
        %995 = vmatprep.mubr.bf16.mxu0 %v486
        %996 = vmatmul.mubr.bf16.gmra.mxu0 %v485
        %v997 = vpop.f32.mrf.mxu0
        %v998 = vadd.f32 %v606, %v997
        %v999 = vpop.f32.mrf.mxu0
        %v1000 = vadd.f32 %v610, %v999
        %v1001 = vpop.f32.mrf.mxu0
        %v1002 = vadd.f32 %v606, %v1001
        %v1003 = vpop.f32.mrf.mxu0
        %v1004 = vadd.f32 %v610, %v1003
        %1005 = vmatprep.mubr.bf16.mxu0 %v490
        %1006 = vmatmul.mubr.bf16.gmra.mxu0 %v489
        %v1007 = vpop.f32.mrf.mxu0
        %v1008 = vadd.f32 %v606, %v1007
        %v1009 = vpop.f32.mrf.mxu0
        %v1010 = vadd.f32 %v610, %v1009
        %v1011 = vpop.f32.mrf.mxu0
        %v1012 = vadd.f32 %v606, %v1011
        %v1013 = vpop.f32.mrf.mxu0
        %v1014 = vadd.f32 %v610, %v1013
        %1015 = vmatprep.mubr.bf16.mxu0 %v494
        %1016 = vmatmul.mubr.bf16.gmra.mxu0 %v493
        %v1017 = vpop.f32.mrf.mxu0
        %v1018 = vadd.f32 %v606, %v1017
        %v1019 = vpop.f32.mrf.mxu0
        %v1020 = vadd.f32 %v610, %v1019
        %v1021 = vpop.f32.mrf.mxu0
        %v1022 = vadd.f32 %v606, %v1021
        %v1023 = vpop.f32.mrf.mxu0
        %v1024 = vadd.f32 %v610, %v1023
        %1025 = vmatprep.mubr.bf16.mxu0 %v498
        %1026 = vmatmul.mubr.bf16.gmra.mxu0 %v497
        %v1027 = vpop.f32.mrf.mxu0
        %v1028 = vadd.f32 %v606, %v1027
        %v1029 = vpop.f32.mrf.mxu0
        %v1030 = vadd.f32 %v610, %v1029
        %v1031 = vpop.f32.mrf.mxu0
        %v1032 = vadd.f32 %v606, %v1031
        %v1033 = vpop.f32.mrf.mxu0
        %v1034 = vadd.f32 %v610, %v1033
        %1035 = vmatprep.mubr.bf16.mxu0 %v502
        %1036 = vmatmul.mubr.bf16.gmra.mxu0 %v501
        %v1037 = vpop.f32.mrf.mxu0
        %v1038 = vadd.f32 %v606, %v1037
        %v1039 = vpop.f32.mrf.mxu0
        %v1040 = vadd.f32 %v610, %v1039
        %v1041 = vpop.f32.mrf.mxu0
        %v1042 = vadd.f32 %v606, %v1041
        %v1043 = vpop.f32.mrf.mxu0
        %v1044 = vadd.f32 %v610, %v1043
        %1045 = vmatprep.mubr.bf16.mxu0 %v506
        %1046 = vmatmul.mubr.bf16.gmra.mxu0 %v505
        %v1047 = vpop.f32.mrf.mxu0
        %v1048 = vadd.f32 %v606, %v1047
        %v1049 = vpop.f32.mrf.mxu0
        %v1050 = vadd.f32 %v610, %v1049
        %v1051 = vpop.f32.mrf.mxu0
        %v1052 = vadd.f32 %v606, %v1051
        %v1053 = vpop.f32.mrf.mxu0
        %v1054 = vadd.f32 %v610, %v1053
        %1055 = vmatprep.mubr.bf16.mxu0 %v510
        %1056 = vmatmul.mubr.bf16.gmra.mxu0 %v509
        %v1057 = vpop.f32.mrf.mxu0
        %v1058 = vadd.f32 %v606, %v1057
        %v1059 = vpop.f32.mrf.mxu0
        %v1060 = vadd.f32 %v610, %v1059
        %v1061 = vpop.f32.mrf.mxu0
        %v1062 = vadd.f32 %v606, %v1061
        %v1063 = vpop.f32.mrf.mxu0
        %v1064 = vadd.f32 %v610, %v1063
        %1065 = vmatprep.mubr.bf16.mxu0 %v514
        %1066 = vmatmul.mubr.bf16.gmra.mxu0 %v513
        %v1067 = vpop.f32.mrf.mxu0
        %v1068 = vadd.f32 %v606, %v1067
        %v1069 = vpop.f32.mrf.mxu0
        %v1070 = vadd.f32 %v610, %v1069
        %v1071 = vpop.f32.mrf.mxu0
        %v1072 = vadd.f32 %v606, %v1071
        %v1073 = vpop.f32.mrf.mxu0
        %v1074 = vadd.f32 %v610, %v1073
        %1075 = vmatprep.mubr.bf16.mxu0 %v518
        %1076 = vmatmul.mubr.bf16.gmra.mxu0 %v517
        %v1077 = vpop.f32.mrf.mxu0
        %v1078 = vadd.f32 %v606, %v1077
        %v1079 = vpop.f32.mrf.mxu0
        %v1080 = vadd.f32 %v610, %v1079
        %v1081 = vpop.f32.mrf.mxu0
        %v1082 = vadd.f32 %v606, %v1081
        %v1083 = vpop.f32.mrf.mxu0
        %v1084 = vadd.f32 %v610, %v1083
        %1085 = vmatprep.mubr.bf16.mxu0 %v522
        %1086 = vmatmul.mubr.bf16.gmra.mxu0 %v521
        %v1087 = vpop.f32.mrf.mxu0
        %v1088 = vadd.f32 %v606, %v1087
        %v1089 = vpop.f32.mrf.mxu0
        %v1090 = vadd.f32 %v610, %v1089
        %v1091 = vpop.f32.mrf.mxu0
        %v1092 = vadd.f32 %v606, %v1091
        %v1093 = vpop.f32.mrf.mxu0
        %v1094 = vadd.f32 %v610, %v1093
        %1095 = vmatprep.mubr.bf16.mxu0 %v526
        %1096 = vmatmul.mubr.bf16.gmra.mxu0 %v525
        %v1097 = vpop.f32.mrf.mxu0
        %v1098 = vadd.f32 %v606, %v1097
        %v1099 = vpop.f32.mrf.mxu0
        %v1100 = vadd.f32 %v610, %v1099
        %v1101 = vpop.f32.mrf.mxu0
        %v1102 = vadd.f32 %v606, %v1101
        %v1103 = vpop.f32.mrf.mxu0
        %v1104 = vadd.f32 %v610, %v1103
        %1105 = vmatprep.mubr.bf16.mxu0 %v530
        %1106 = vmatmul.mubr.bf16.gmra.mxu0 %v529
        %v1107 = vpop.f32.mrf.mxu0
        %v1108 = vadd.f32 %v606, %v1107
        %v1109 = vpop.f32.mrf.mxu0
        %v1110 = vadd.f32 %v610, %v1109
        %v1111 = vpop.f32.mrf.mxu0
        %v1112 = vadd.f32 %v606, %v1111
        %v1113 = vpop.f32.mrf.mxu0
        %v1114 = vadd.f32 %v610, %v1113
        %1115 = vmatprep.mubr.bf16.mxu0 %v534
        %1116 = vmatmul.mubr.bf16.gmra.mxu0 %v533
        %v1117 = vpop.f32.mrf.mxu0
        %v1118 = vadd.f32 %v606, %v1117
        %v1119 = vpop.f32.mrf.mxu0
        %v1120 = vadd.f32 %v610, %v1119
        %v1121 = vpop.f32.mrf.mxu0
        %v1122 = vadd.f32 %v606, %v1121
        %v1123 = vpop.f32.mrf.mxu0
        %v1124 = vadd.f32 %v610, %v1123
        %1125 = vdwg.mxu0
        %1126 = vmatprep.subr.bf16.mxu0 %v852
        %1127 = vmatpush1.bf16.msra.mxu0 %v851
        %1128 = vmatprep.subr.bf16.mxu0 %v850
        %1129 = vmatpush1.bf16.msra.mxu0 %v849
        %1130 = vmatprep.subr.bf16.mxu0 %v848
        %1131 = vmatpush1.bf16.msra.mxu0 %v847
        %1132 = vmatprep.subr.bf16.mxu0 %v846
        %1133 = vmatpush1.bf16.msra.mxu0 %v845
        %1134 = vmatprep.subr.bf16.mxu0 %v844
        %1135 = vmatpush1.bf16.msra.mxu0 %v843
        %1136 = vmatprep.subr.bf16.mxu0 %v842
        %1137 = vmatpush1.bf16.msra.mxu0 %v841
        %1138 = vmatprep.subr.bf16.mxu0 %v840
        %1139 = vmatpush1.bf16.msra.mxu0 %v839
        %1140 = vmatprep.subr.bf16.mxu0 %v838
        %1141 = vmatpush1.bf16.msra.mxu0 %v837
        %1142 = vmatprep.subr.bf16.mxu0 %v868
        %1143 = vmatpush2.bf16.msra.mxu0 %v867
        %1144 = vmatprep.subr.bf16.mxu0 %v866
        %1145 = vmatpush2.bf16.msra.mxu0 %v865
        %1146 = vmatprep.subr.bf16.mxu0 %v864
        %1147 = vmatpush2.bf16.msra.mxu0 %v863
        %1148 = vmatprep.subr.bf16.mxu0 %v862
        %1149 = vmatpush2.bf16.msra.mxu0 %v861
        %1150 = vmatprep.subr.bf16.mxu0 %v860
        %1151 = vmatpush2.bf16.msra.mxu0 %v859
        %1152 = vmatprep.subr.bf16.mxu0 %v858
        %1153 = vmatpush2.bf16.msra.mxu0 %v857
        %1154 = vmatprep.subr.bf16.mxu0 %v856
        %1155 = vmatpush2.bf16.msra.mxu0 %v855
        %1156 = vmatprep.subr.bf16.mxu0 %v854
        %1157 = vmatpush2.bf16.msra.mxu0 %v853
        %1158 = vmatprep.mubr.bf16.mxu0 %v476
        %1159 = vmatmul.mubr.bf16.gmra.mxu0 %v475
        %v1160 = vpop.f32.mrf.mxu0
        %v1161 = vadd.f32 %v968, %v1160
        %v1162 = vpop.f32.mrf.mxu0
        %v1163 = vadd.f32 %v970, %v1162
        %v1164 = vpop.f32.mrf.mxu0
        %v1165 = vadd.f32 %v972, %v1164
        %v1166 = vpop.f32.mrf.mxu0
        %v1167 = vadd.f32 %v974, %v1166
        %1168 = vmatprep.mubr.bf16.mxu0 %v480
        %1169 = vmatmul.mubr.bf16.gmra.mxu0 %v479
        %v1170 = vpop.f32.mrf.mxu0
        %v1171 = vadd.f32 %v978, %v1170
        %v1172 = vpop.f32.mrf.mxu0
        %v1173 = vadd.f32 %v980, %v1172
        %v1174 = vpop.f32.mrf.mxu0
        %v1175 = vadd.f32 %v982, %v1174
        %v1176 = vpop.f32.mrf.mxu0
        %v1177 = vadd.f32 %v984, %v1176
        %1178 = vmatprep.mubr.bf16.mxu0 %v484
        %1179 = vmatmul.mubr.bf16.gmra.mxu0 %v483
        %v1180 = vpop.f32.mrf.mxu0
        %v1181 = vadd.f32 %v988, %v1180
        %v1182 = vpop.f32.mrf.mxu0
        %v1183 = vadd.f32 %v990, %v1182
        %v1184 = vpop.f32.mrf.mxu0
        %v1185 = vadd.f32 %v992, %v1184
        %v1186 = vpop.f32.mrf.mxu0
        %v1187 = vadd.f32 %v994, %v1186
        %1188 = vmatprep.mubr.bf16.mxu0 %v488
        %1189 = vmatmul.mubr.bf16.gmra.mxu0 %v487
        %v1190 = vpop.f32.mrf.mxu0
        %v1191 = vadd.f32 %v998, %v1190
        %v1192 = vpop.f32.mrf.mxu0
        %v1193 = vadd.f32 %v1000, %v1192
        %v1194 = vpop.f32.mrf.mxu0
        %v1195 = vadd.f32 %v1002, %v1194
        %v1196 = vpop.f32.mrf.mxu0
        %v1197 = vadd.f32 %v1004, %v1196
        %1198 = vmatprep.mubr.bf16.mxu0 %v492
        %1199 = vmatmul.mubr.bf16.gmra.mxu0 %v491
        %v1200 = vpop.f32.mrf.mxu0
        %v1201 = vadd.f32 %v1008, %v1200
        %v1202 = vpop.f32.mrf.mxu0
        %v1203 = vadd.f32 %v1010, %v1202
        %v1204 = vpop.f32.mrf.mxu0
        %v1205 = vadd.f32 %v1012, %v1204
        %v1206 = vpop.f32.mrf.mxu0
        %v1207 = vadd.f32 %v1014, %v1206
        %1208 = vmatprep.mubr.bf16.mxu0 %v496
        %1209 = vmatmul.mubr.bf16.gmra.mxu0 %v495
        %v1210 = vpop.f32.mrf.mxu0
        %v1211 = vadd.f32 %v1018, %v1210
        %v1212 = vpop.f32.mrf.mxu0
        %v1213 = vadd.f32 %v1020, %v1212
        %v1214 = vpop.f32.mrf.mxu0
        %v1215 = vadd.f32 %v1022, %v1214
        %v1216 = vpop.f32.mrf.mxu0
        %v1217 = vadd.f32 %v1024, %v1216
        %1218 = vmatprep.mubr.bf16.mxu0 %v500
        %1219 = vmatmul.mubr.bf16.gmra.mxu0 %v499
        %v1220 = vpop.f32.mrf.mxu0
        %v1221 = vadd.f32 %v1028, %v1220
        %v1222 = vpop.f32.mrf.mxu0
        %v1223 = vadd.f32 %v1030, %v1222
        %v1224 = vpop.f32.mrf.mxu0
        %v1225 = vadd.f32 %v1032, %v1224
        %v1226 = vpop.f32.mrf.mxu0
        %v1227 = vadd.f32 %v1034, %v1226
        %1228 = vmatprep.mubr.bf16.mxu0 %v504
        %1229 = vmatmul.mubr.bf16.gmra.mxu0 %v503
        %v1230 = vpop.f32.mrf.mxu0
        %v1231 = vadd.f32 %v1038, %v1230
        %v1232 = vpop.f32.mrf.mxu0
        %v1233 = vadd.f32 %v1040, %v1232
        %v1234 = vpop.f32.mrf.mxu0
        %v1235 = vadd.f32 %v1042, %v1234
        %v1236 = vpop.f32.mrf.mxu0
        %v1237 = vadd.f32 %v1044, %v1236
        %1238 = vmatprep.mubr.bf16.mxu0 %v508
        %1239 = vmatmul.mubr.bf16.gmra.mxu0 %v507
        %v1240 = vpop.f32.mrf.mxu0
        %v1241 = vadd.f32 %v1048, %v1240
        %v1242 = vpop.f32.mrf.mxu0
        %v1243 = vadd.f32 %v1050, %v1242
        %v1244 = vpop.f32.mrf.mxu0
        %v1245 = vadd.f32 %v1052, %v1244
        %v1246 = vpop.f32.mrf.mxu0
        %v1247 = vadd.f32 %v1054, %v1246
        %1248 = vmatprep.mubr.bf16.mxu0 %v512
        %1249 = vmatmul.mubr.bf16.gmra.mxu0 %v511
        %v1250 = vpop.f32.mrf.mxu0
        %v1251 = vadd.f32 %v1058, %v1250
        %v1252 = vpop.f32.mrf.mxu0
        %v1253 = vadd.f32 %v1060, %v1252
        %v1254 = vpop.f32.mrf.mxu0
        %v1255 = vadd.f32 %v1062, %v1254
        %v1256 = vpop.f32.mrf.mxu0
        %v1257 = vadd.f32 %v1064, %v1256
        %1258 = vmatprep.mubr.bf16.mxu0 %v516
        %1259 = vmatmul.mubr.bf16.gmra.mxu0 %v515
        %v1260 = vpop.f32.mrf.mxu0
        %v1261 = vadd.f32 %v1068, %v1260
        %v1262 = vpop.f32.mrf.mxu0
        %v1263 = vadd.f32 %v1070, %v1262
        %v1264 = vpop.f32.mrf.mxu0
        %v1265 = vadd.f32 %v1072, %v1264
        %v1266 = vpop.f32.mrf.mxu0
        %v1267 = vadd.f32 %v1074, %v1266
        %1268 = vmatprep.mubr.bf16.mxu0 %v520
        %1269 = vmatmul.mubr.bf16.gmra.mxu0 %v519
        %v1270 = vpop.f32.mrf.mxu0
        %v1271 = vadd.f32 %v1078, %v1270
        %v1272 = vpop.f32.mrf.mxu0
        %v1273 = vadd.f32 %v1080, %v1272
        %v1274 = vpop.f32.mrf.mxu0
        %v1275 = vadd.f32 %v1082, %v1274
        %v1276 = vpop.f32.mrf.mxu0
        %v1277 = vadd.f32 %v1084, %v1276
        %1278 = vmatprep.mubr.bf16.mxu0 %v524
        %1279 = vmatmul.mubr.bf16.gmra.mxu0 %v523
        %v1280 = vpop.f32.mrf.mxu0
        %v1281 = vadd.f32 %v1088, %v1280
        %v1282 = vpop.f32.mrf.mxu0
        %v1283 = vadd.f32 %v1090, %v1282
        %v1284 = vpop.f32.mrf.mxu0
        %v1285 = vadd.f32 %v1092, %v1284
        %v1286 = vpop.f32.mrf.mxu0
        %v1287 = vadd.f32 %v1094, %v1286
        %1288 = vmatprep.mubr.bf16.mxu0 %v528
        %1289 = vmatmul.mubr.bf16.gmra.mxu0 %v527
        %v1290 = vpop.f32.mrf.mxu0
        %v1291 = vadd.f32 %v1098, %v1290
        %v1292 = vpop.f32.mrf.mxu0
        %v1293 = vadd.f32 %v1100, %v1292
        %v1294 = vpop.f32.mrf.mxu0
        %v1295 = vadd.f32 %v1102, %v1294
        %v1296 = vpop.f32.mrf.mxu0
        %v1297 = vadd.f32 %v1104, %v1296
        %1298 = vmatprep.mubr.bf16.mxu0 %v532
        %1299 = vmatmul.mubr.bf16.gmra.mxu0 %v531
        %v1300 = vpop.f32.mrf.mxu0
        %v1301 = vadd.f32 %v1108, %v1300
        %v1302 = vpop.f32.mrf.mxu0
        %v1303 = vadd.f32 %v1110, %v1302
        %v1304 = vpop.f32.mrf.mxu0
        %v1305 = vadd.f32 %v1112, %v1304
        %v1306 = vpop.f32.mrf.mxu0
        %v1307 = vadd.f32 %v1114, %v1306
        %1308 = vmatprep.mubr.bf16.mxu0 %v536
        %1309 = vmatmul.mubr.bf16.gmra.mxu0 %v535
        %v1310 = vpop.f32.mrf.mxu0
        %v1311 = vadd.f32 %v1118, %v1310
        %v1312 = vpop.f32.mrf.mxu0
        %v1313 = vadd.f32 %v1120, %v1312
        %v1314 = vpop.f32.mrf.mxu0
        %v1315 = vadd.f32 %v1122, %v1314
        %v1316 = vpop.f32.mrf.mxu0
        %v1317 = vadd.f32 %v1124, %v1316
        %1318 = vdwg.mxu0
        %v1319 = vmax.f32 %v1161, 0.0
        %v1320 = vmax.f32 %v1163, 0.0
        %v1321 = vmax.f32 %v1165, 0.0
        %v1322 = vmax.f32 %v1167, 0.0
        %v1323 = vmax.f32 %v1171, 0.0
        %v1324 = vmax.f32 %v1173, 0.0
        %v1325 = vmax.f32 %v1175, 0.0
        %v1326 = vmax.f32 %v1177, 0.0
        %v1327 = vmax.f32 %v1181, 0.0
        %v1328 = vmax.f32 %v1183, 0.0
        %v1329 = vmax.f32 %v1185, 0.0
        %v1330 = vmax.f32 %v1187, 0.0
        %v1331 = vmax.f32 %v1191, 0.0
        %v1332 = vmax.f32 %v1193, 0.0
        %v1333 = vmax.f32 %v1195, 0.0
        %v1334 = vmax.f32 %v1197, 0.0
        %v1335 = vmax.f32 %v1201, 0.0
        %v1336 = vmax.f32 %v1203, 0.0
        %v1337 = vmax.f32 %v1205, 0.0
        %v1338 = vmax.f32 %v1207, 0.0
        %v1339 = vmax.f32 %v1211, 0.0
        %v1340 = vmax.f32 %v1213, 0.0
        %v1341 = vmax.f32 %v1215, 0.0
        %v1342 = vmax.f32 %v1217, 0.0
        %v1343 = vmax.f32 %v1221, 0.0
        %v1344 = vmax.f32 %v1223, 0.0
        %v1345 = vmax.f32 %v1225, 0.0
        %v1346 = vmax.f32 %v1227, 0.0
        %v1347 = vmax.f32 %v1231, 0.0
        %v1348 = vmax.f32 %v1233, 0.0
        %v1349 = vmax.f32 %v1235, 0.0
        %v1350 = vmax.f32 %v1237, 0.0
        %v1351 = vmax.f32 %v1241, 0.0
        %v1352 = vmax.f32 %v1243, 0.0
        %v1353 = vmax.f32 %v1245, 0.0
        %v1354 = vmax.f32 %v1247, 0.0
        %v1355 = vmax.f32 %v1251, 0.0
        %v1356 = vmax.f32 %v1253, 0.0
        %v1357 = vmax.f32 %v1255, 0.0
        %v1358 = vmax.f32 %v1257, 0.0
        %v1359 = vmax.f32 %v1261, 0.0
        %v1360 = vmax.f32 %v1263, 0.0
        %v1361 = vmax.f32 %v1265, 0.0
        %v1362 = vmax.f32 %v1267, 0.0
        %v1363 = vmax.f32 %v1271, 0.0
        %v1364 = vmax.f32 %v1273, 0.0
        %v1365 = vmax.f32 %v1275, 0.0
        %v1366 = vmax.f32 %v1277, 0.0
        %v1367 = vmax.f32 %v1281, 0.0
        %v1368 = vmax.f32 %v1283, 0.0
        %v1369 = vmax.f32 %v1285, 0.0
        %v1370 = vmax.f32 %v1287, 0.0
        %v1371 = vmax.f32 %v1291, 0.0
        %v1372 = vmax.f32 %v1293, 0.0
        %v1373 = vmax.f32 %v1295, 0.0
        %v1374 = vmax.f32 %v1297, 0.0
        %v1375 = vmax.f32 %v1301, 0.0
        %v1376 = vmax.f32 %v1303, 0.0
        %v1377 = vmax.f32 %v1305, 0.0
        %v1378 = vmax.f32 %v1307, 0.0
        %v1379 = vmax.f32 %v1311, 0.0
        %v1380 = vmax.f32 %v1313, 0.0
        %v1381 = vmax.f32 %v1315, 0.0
        %v1382 = vmax.f32 %v1317, 0.0
        %v1383 = vpack.c.bf16 %v1321, %v1319
        %v1384 = vpack.c.bf16 %v1322, %v1320
        %v1385 = vpack.c.bf16 %v1325, %v1323
        %v1386 = vpack.c.bf16 %v1326, %v1324
        %v1387 = vpack.c.bf16 %v1329, %v1327
        %v1388 = vpack.c.bf16 %v1330, %v1328
        %v1389 = vpack.c.bf16 %v1333, %v1331
        %v1390 = vpack.c.bf16 %v1334, %v1332
        %v1391 = vpack.c.bf16 %v1337, %v1335
        %v1392 = vpack.c.bf16 %v1338, %v1336
        %v1393 = vpack.c.bf16 %v1341, %v1339
        %v1394 = vpack.c.bf16 %v1342, %v1340
        %v1395 = vpack.c.bf16 %v1345, %v1343
        %v1396 = vpack.c.bf16 %v1346, %v1344
        %v1397 = vpack.c.bf16 %v1349, %v1347
        %v1398 = vpack.c.bf16 %v1350, %v1348
        %v1399 = vpack.c.bf16 %v1353, %v1351
        %v1400 = vpack.c.bf16 %v1354, %v1352
        %v1401 = vpack.c.bf16 %v1357, %v1355
        %v1402 = vpack.c.bf16 %v1358, %v1356
        %v1403 = vpack.c.bf16 %v1361, %v1359
        %v1404 = vpack.c.bf16 %v1362, %v1360
        %v1405 = vpack.c.bf16 %v1365, %v1363
        %v1406 = vpack.c.bf16 %v1366, %v1364
        %v1407 = vpack.c.bf16 %v1369, %v1367
        %v1408 = vpack.c.bf16 %v1370, %v1368
        %v1409 = vpack.c.bf16 %v1373, %v1371
        %v1410 = vpack.c.bf16 %v1374, %v1372
        %v1411 = vpack.c.bf16 %v1377, %v1375
        %v1412 = vpack.c.bf16 %v1378, %v1376
        %v1413 = vpack.c.bf16 %v1381, %v1379
        %v1414 = vpack.c.bf16 %v1382, %v1380
        %v1415 = vld [vmem:[#allocation7] sm:$0xf]
        %v1416 = vld [vmem:[#allocation7 + $0x4] sm:$0xf]
        %v1417 = vld [vmem:[#allocation7 + $0x8] sm:$0xf]
        %v1418 = vld [vmem:[#allocation7 + $0xc] sm:$0xf]
        %v1419 = vld [vmem:[#allocation7 + $0x10] sm:$0xf]
        %v1420 = vld [vmem:[#allocation7 + $0x14] sm:$0xf]
        %v1421 = vld [vmem:[#allocation7 + $0x18] sm:$0xf]
        %v1422 = vld [vmem:[#allocation7 + $0x1c] sm:$0xf]
        %v1423 = vld [vmem:[#allocation7 + $0x20] sm:$0xf]
        %v1424 = vld [vmem:[#allocation7 + $0x24] sm:$0xf]
        %v1425 = vld [vmem:[#allocation7 + $0x28] sm:$0xf]
        %v1426 = vld [vmem:[#allocation7 + $0x2c] sm:$0xf]
        %v1427 = vld [vmem:[#allocation7 + $0x30] sm:$0xf]
        %v1428 = vld [vmem:[#allocation7 + $0x34] sm:$0xf]
        %v1429 = vld [vmem:[#allocation7 + $0x38] sm:$0xf]
        %v1430 = vld [vmem:[#allocation7 + $0x3c] sm:$0xf]
        %v1431 = vld [vmem:[#allocation7 + $0x40] sm:$0xf]
        %v1432 = vld [vmem:[#allocation7 + $0x44] sm:$0xf]
        %v1433 = vld [vmem:[#allocation7 + $0x48] sm:$0xf]
        %v1434 = vld [vmem:[#allocation7 + $0x4c] sm:$0xf]
        %v1435 = vld [vmem:[#allocation7 + $0x50] sm:$0xf]
        %v1436 = vld [vmem:[#allocation7 + $0x54] sm:$0xf]
        %v1437 = vld [vmem:[#allocation7 + $0x58] sm:$0xf]
        %v1438 = vld [vmem:[#allocation7 + $0x5c] sm:$0xf]
        %v1439 = vld [vmem:[#allocation7 + $0x60] sm:$0xf]
        %v1440 = vld [vmem:[#allocation7 + $0x64] sm:$0xf]
        %v1441 = vld [vmem:[#allocation7 + $0x68] sm:$0xf]
        %v1442 = vld [vmem:[#allocation7 + $0x6c] sm:$0xf]
        %v1443 = vld [vmem:[#allocation7 + $0x70] sm:$0xf]
        %v1444 = vld [vmem:[#allocation7 + $0x74] sm:$0xf]
        %v1445 = vld [vmem:[#allocation7 + $0x78] sm:$0xf]
        %v1446 = vld [vmem:[#allocation7 + $0x7c] sm:$0xf]
        %v1447 = vld [vmem:[%s4] sm:$0x1]
        %v1449 = vlaneseq
        %v1450 = vshrl.u32 %v1449, 7
        %v1451 = vsub.s32 0, %v1450
        %v1452 = vrot.slane %v1447, %v1451
        %v1486 = vunpack.c.l.b16 %v1415
        %v1487 = vunpack.c.l.b16 %v1416
        %v1488 = vunpack.c.l.b16 %v1417
        %v1489 = vunpack.c.l.b16 %v1418
        %v1490 = vunpack.c.l.b16 %v1419
        %v1491 = vunpack.c.l.b16 %v1420
        %v1492 = vunpack.c.l.b16 %v1421
        %v1493 = vunpack.c.l.b16 %v1422
        %v1494 = vunpack.c.l.b16 %v1423
        %v1495 = vunpack.c.l.b16 %v1424
        %v1496 = vunpack.c.l.b16 %v1425
        %v1497 = vunpack.c.l.b16 %v1426
        %v1498 = vunpack.c.l.b16 %v1427
        %v1499 = vunpack.c.l.b16 %v1428
        %v1500 = vunpack.c.l.b16 %v1429
        %v1501 = vunpack.c.l.b16 %v1430
        %v1502 = vunpack.c.l.b16 %v1431
        %v1503 = vunpack.c.l.b16 %v1432
        %v1504 = vunpack.c.l.b16 %v1433
        %v1505 = vunpack.c.l.b16 %v1434
        %v1506 = vunpack.c.l.b16 %v1435
        %v1507 = vunpack.c.l.b16 %v1436
        %v1508 = vunpack.c.l.b16 %v1437
        %v1509 = vunpack.c.l.b16 %v1438
        %v1510 = vunpack.c.l.b16 %v1439
        %v1511 = vunpack.c.l.b16 %v1440
        %v1512 = vunpack.c.l.b16 %v1441
        %v1513 = vunpack.c.l.b16 %v1442
        %v1514 = vunpack.c.l.b16 %v1443
        %v1515 = vunpack.c.l.b16 %v1444
        %v1516 = vunpack.c.l.b16 %v1445
        %v1517 = vunpack.c.l.b16 %v1446
        %v1518 = vpack.c.b16 %v1487, %v1486
        %v1519 = vpack.c.b16 %v1489, %v1488
        %v1520 = vpack.c.b16 %v1491, %v1490
        %v1521 = vpack.c.b16 %v1493, %v1492
        %v1522 = vpack.c.b16 %v1495, %v1494
        %v1523 = vpack.c.b16 %v1497, %v1496
        %v1524 = vpack.c.b16 %v1499, %v1498
        %v1525 = vpack.c.b16 %v1501, %v1500
        %v1526 = vpack.c.b16 %v1503, %v1502
        %v1527 = vpack.c.b16 %v1505, %v1504
        %v1528 = vpack.c.b16 %v1507, %v1506
        %v1529 = vpack.c.b16 %v1509, %v1508
        %v1530 = vpack.c.b16 %v1511, %v1510
        %v1531 = vpack.c.b16 %v1513, %v1512
        %v1532 = vpack.c.b16 %v1515, %v1514
        %v1533 = vpack.c.b16 %v1517, %v1516
        %1550 = vmatprep.subr.bf16.mxu0 0
        %1551 = vmatpush1.bf16.msra.mxu0 %v1525
        %1552 = vmatprep.subr.bf16.mxu0 0
        %1553 = vmatpush1.bf16.msra.mxu0 %v1524
        %1554 = vmatprep.subr.bf16.mxu0 0
        %1555 = vmatpush1.bf16.msra.mxu0 %v1523
        %1556 = vmatprep.subr.bf16.mxu0 0
        %1557 = vmatpush1.bf16.msra.mxu0 %v1522
        %1558 = vmatprep.subr.bf16.mxu0 0
        %1559 = vmatpush1.bf16.msra.mxu0 %v1521
        %1560 = vmatprep.subr.bf16.mxu0 0
        %1561 = vmatpush1.bf16.msra.mxu0 %v1520
        %1562 = vmatprep.subr.bf16.mxu0 0
        %1563 = vmatpush1.bf16.msra.mxu0 %v1519
        %1564 = vmatprep.subr.bf16.mxu0 0
        %1565 = vmatpush1.bf16.msra.mxu0 %v1518
        %1566 = vmatprep.subr.bf16.mxu0 0
        %1567 = vmatpush2.bf16.msra.mxu0 %v1533
        %1568 = vmatprep.subr.bf16.mxu0 0
        %1569 = vmatpush2.bf16.msra.mxu0 %v1532
        %1570 = vmatprep.subr.bf16.mxu0 0
        %1571 = vmatpush2.bf16.msra.mxu0 %v1531
        %1572 = vmatprep.subr.bf16.mxu0 0
        %1573 = vmatpush2.bf16.msra.mxu0 %v1530
        %1574 = vmatprep.subr.bf16.mxu0 0
        %1575 = vmatpush2.bf16.msra.mxu0 %v1529
        %1576 = vmatprep.subr.bf16.mxu0 0
        %1577 = vmatpush2.bf16.msra.mxu0 %v1528
        %1578 = vmatprep.subr.bf16.mxu0 0
        %1579 = vmatpush2.bf16.msra.mxu0 %v1527
        %1580 = vmatprep.subr.bf16.mxu0 0
        %1581 = vmatpush2.bf16.msra.mxu0 %v1526
        %1582 = vmatprep.mubr.bf16.mxu0 %v1384
        %1583 = vmatmul.mubr.bf16.gmra.mxu0 %v1383
        %v1584 = vpop.f32.mrf.mxu0
        %v1585 = vadd.f32 %v1452, %v1584
        %v1586 = vpop.f32.mrf.mxu0
        %v1587 = vpop.f32.mrf.mxu0
        %v1588 = vadd.f32 %v1452, %v1587
        %v1589 = vpop.f32.mrf.mxu0
        %1590 = vmatprep.mubr.bf16.mxu0 %v1386
        %1591 = vmatmul.mubr.bf16.gmra.mxu0 %v1385
        %v1592 = vpop.f32.mrf.mxu0
        %v1593 = vadd.f32 %v1452, %v1592
        %v1594 = vpop.f32.mrf.mxu0
        %v1595 = vpop.f32.mrf.mxu0
        %v1596 = vadd.f32 %v1452, %v1595
        %v1597 = vpop.f32.mrf.mxu0
        %1598 = vmatprep.mubr.bf16.mxu0 %v1388
        %1599 = vmatmul.mubr.bf16.gmra.mxu0 %v1387
        %v1600 = vpop.f32.mrf.mxu0
        %v1601 = vadd.f32 %v1452, %v1600
        %v1602 = vpop.f32.mrf.mxu0
        %v1603 = vpop.f32.mrf.mxu0
        %v1604 = vadd.f32 %v1452, %v1603
        %v1605 = vpop.f32.mrf.mxu0
        %1606 = vmatprep.mubr.bf16.mxu0 %v1390
        %1607 = vmatmul.mubr.bf16.gmra.mxu0 %v1389
        %v1608 = vpop.f32.mrf.mxu0
        %v1609 = vadd.f32 %v1452, %v1608
        %v1610 = vpop.f32.mrf.mxu0
        %v1611 = vpop.f32.mrf.mxu0
        %v1612 = vadd.f32 %v1452, %v1611
        %v1613 = vpop.f32.mrf.mxu0
        %1614 = vmatprep.mubr.bf16.mxu0 %v1392
        %1615 = vmatmul.mubr.bf16.gmra.mxu0 %v1391
        %v1616 = vpop.f32.mrf.mxu0
        %v1617 = vadd.f32 %v1452, %v1616
        %v1618 = vpop.f32.mrf.mxu0
        %v1619 = vpop.f32.mrf.mxu0
        %v1620 = vadd.f32 %v1452, %v1619
        %v1621 = vpop.f32.mrf.mxu0
        %1622 = vmatprep.mubr.bf16.mxu0 %v1394
        %1623 = vmatmul.mubr.bf16.gmra.mxu0 %v1393
        %v1624 = vpop.f32.mrf.mxu0
        %v1625 = vadd.f32 %v1452, %v1624
        %v1626 = vpop.f32.mrf.mxu0
        %v1627 = vpop.f32.mrf.mxu0
        %v1628 = vadd.f32 %v1452, %v1627
        %v1629 = vpop.f32.mrf.mxu0
        %1630 = vmatprep.mubr.bf16.mxu0 %v1396
        %1631 = vmatmul.mubr.bf16.gmra.mxu0 %v1395
        %v1632 = vpop.f32.mrf.mxu0
        %v1633 = vadd.f32 %v1452, %v1632
        %v1634 = vpop.f32.mrf.mxu0
        %v1635 = vpop.f32.mrf.mxu0
        %v1636 = vadd.f32 %v1452, %v1635
        %v1637 = vpop.f32.mrf.mxu0
        %1638 = vmatprep.mubr.bf16.mxu0 %v1398
        %1639 = vmatmul.mubr.bf16.gmra.mxu0 %v1397
        %v1640 = vpop.f32.mrf.mxu0
        %v1641 = vadd.f32 %v1452, %v1640
        %v1642 = vpop.f32.mrf.mxu0
        %v1643 = vpop.f32.mrf.mxu0
        %v1644 = vadd.f32 %v1452, %v1643
        %v1645 = vpop.f32.mrf.mxu0
        %1646 = vmatprep.mubr.bf16.mxu0 %v1400
        %1647 = vmatmul.mubr.bf16.gmra.mxu0 %v1399
        %v1648 = vpop.f32.mrf.mxu0
        %v1649 = vadd.f32 %v1452, %v1648
        %v1650 = vpop.f32.mrf.mxu0
        %v1651 = vpop.f32.mrf.mxu0
        %v1652 = vadd.f32 %v1452, %v1651
        %v1653 = vpop.f32.mrf.mxu0
        %1654 = vmatprep.mubr.bf16.mxu0 %v1402
        %1655 = vmatmul.mubr.bf16.gmra.mxu0 %v1401
        %v1656 = vpop.f32.mrf.mxu0
        %v1657 = vadd.f32 %v1452, %v1656
        %v1658 = vpop.f32.mrf.mxu0
        %v1659 = vpop.f32.mrf.mxu0
        %v1660 = vadd.f32 %v1452, %v1659
        %v1661 = vpop.f32.mrf.mxu0
        %1662 = vmatprep.mubr.bf16.mxu0 %v1404
        %1663 = vmatmul.mubr.bf16.gmra.mxu0 %v1403
        %v1664 = vpop.f32.mrf.mxu0
        %v1665 = vadd.f32 %v1452, %v1664
        %v1666 = vpop.f32.mrf.mxu0
        %v1667 = vpop.f32.mrf.mxu0
        %v1668 = vadd.f32 %v1452, %v1667
        %v1669 = vpop.f32.mrf.mxu0
        %1670 = vmatprep.mubr.bf16.mxu0 %v1406
        %1671 = vmatmul.mubr.bf16.gmra.mxu0 %v1405
        %v1672 = vpop.f32.mrf.mxu0
        %v1673 = vadd.f32 %v1452, %v1672
        %v1674 = vpop.f32.mrf.mxu0
        %v1675 = vpop.f32.mrf.mxu0
        %v1676 = vadd.f32 %v1452, %v1675
        %v1677 = vpop.f32.mrf.mxu0
        %1678 = vmatprep.mubr.bf16.mxu0 %v1408
        %1679 = vmatmul.mubr.bf16.gmra.mxu0 %v1407
        %v1680 = vpop.f32.mrf.mxu0
        %v1681 = vadd.f32 %v1452, %v1680
        %v1682 = vpop.f32.mrf.mxu0
        %v1683 = vpop.f32.mrf.mxu0
        %v1684 = vadd.f32 %v1452, %v1683
        %v1685 = vpop.f32.mrf.mxu0
        %1686 = vmatprep.mubr.bf16.mxu0 %v1410
        %1687 = vmatmul.mubr.bf16.gmra.mxu0 %v1409
        %v1688 = vpop.f32.mrf.mxu0
        %v1689 = vadd.f32 %v1452, %v1688
        %v1690 = vpop.f32.mrf.mxu0
        %v1691 = vpop.f32.mrf.mxu0
        %v1692 = vadd.f32 %v1452, %v1691
        %v1693 = vpop.f32.mrf.mxu0
        %1694 = vmatprep.mubr.bf16.mxu0 %v1412
        %1695 = vmatmul.mubr.bf16.gmra.mxu0 %v1411
        %v1696 = vpop.f32.mrf.mxu0
        %v1697 = vadd.f32 %v1452, %v1696
        %v1698 = vpop.f32.mrf.mxu0
        %v1699 = vpop.f32.mrf.mxu0
        %v1700 = vadd.f32 %v1452, %v1699
        %v1701 = vpop.f32.mrf.mxu0
        %1702 = vmatprep.mubr.bf16.mxu0 %v1414
        %1703 = vmatmul.mubr.bf16.gmra.mxu0 %v1413
        %v1704 = vpop.f32.mrf.mxu0
        %v1705 = vadd.f32 %v1452, %v1704
        %v1706 = vpop.f32.mrf.mxu0
        %v1707 = vpop.f32.mrf.mxu0
        %v1708 = vadd.f32 %v1452, %v1707
        %v1709 = vpop.f32.mrf.mxu0
        %1710 = vdwg.mxu0
        %v1711 = vmax.f32 %v1585, 0.0
        %v1712 = vmax.f32 %v1588, 0.0
        %v1713 = vmax.f32 %v1593, 0.0
        %v1714 = vmax.f32 %v1596, 0.0
        %v1715 = vmax.f32 %v1601, 0.0
        %v1716 = vmax.f32 %v1604, 0.0
        %v1717 = vmax.f32 %v1609, 0.0
        %v1718 = vmax.f32 %v1612, 0.0
        %v1719 = vmax.f32 %v1617, 0.0
        %v1720 = vmax.f32 %v1620, 0.0
        %v1721 = vmax.f32 %v1625, 0.0
        %v1722 = vmax.f32 %v1628, 0.0
        %v1723 = vmax.f32 %v1633, 0.0
        %v1724 = vmax.f32 %v1636, 0.0
        %v1725 = vmax.f32 %v1641, 0.0
        %v1726 = vmax.f32 %v1644, 0.0
        %v1727 = vmax.f32 %v1649, 0.0
        %v1728 = vmax.f32 %v1652, 0.0
        %v1729 = vmax.f32 %v1657, 0.0
        %v1730 = vmax.f32 %v1660, 0.0
        %v1731 = vmax.f32 %v1665, 0.0
        %v1732 = vmax.f32 %v1668, 0.0
        %v1733 = vmax.f32 %v1673, 0.0
        %v1734 = vmax.f32 %v1676, 0.0
        %v1735 = vmax.f32 %v1681, 0.0
        %v1736 = vmax.f32 %v1684, 0.0
        %v1737 = vmax.f32 %v1689, 0.0
        %v1738 = vmax.f32 %v1692, 0.0
        %v1739 = vmax.f32 %v1697, 0.0
        %v1740 = vmax.f32 %v1700, 0.0
        %v1741 = vmax.f32 %v1705, 0.0
        %v1742 = vmax.f32 %v1708, 0.0
        %v1743 = vpack.c.bf16 %v1712, %v1711
        %v1744 = vpack.c.bf16 %v1714, %v1713
        %v1745 = vpack.c.bf16 %v1716, %v1715
        %v1746 = vpack.c.bf16 %v1718, %v1717
        %v1747 = vpack.c.bf16 %v1720, %v1719
        %v1748 = vpack.c.bf16 %v1722, %v1721
        %v1749 = vpack.c.bf16 %v1724, %v1723
        %v1750 = vpack.c.bf16 %v1726, %v1725
        %v1751 = vpack.c.bf16 %v1728, %v1727
        %v1752 = vpack.c.bf16 %v1730, %v1729
        %v1753 = vpack.c.bf16 %v1732, %v1731
        %v1754 = vpack.c.bf16 %v1734, %v1733
        %v1755 = vpack.c.bf16 %v1736, %v1735
        %v1756 = vpack.c.bf16 %v1738, %v1737
        %v1757 = vpack.c.bf16 %v1740, %v1739
        %v1758 = vpack.c.bf16 %v1742, %v1741
        %v1759 = vld [vmem:[#allocation8] sm:$0xf]
        %v1760 = vld [vmem:[#allocation8 + $0x4] sm:$0xf]
        %v1761 = vld [vmem:[#allocation8 + $0x8] sm:$0xf]
        %v1762 = vld [vmem:[#allocation8 + $0xc] sm:$0xf]
        %v1763 = vld [vmem:[#allocation8 + $0x10] sm:$0xf]
        %v1764 = vld [vmem:[#allocation8 + $0x14] sm:$0xf]
        %v1765 = vld [vmem:[#allocation8 + $0x18] sm:$0xf]
        %v1766 = vld [vmem:[#allocation8 + $0x1c] sm:$0xf]
        %v1767 = vld [vmem:[#allocation8 + $0x20] sm:$0xf]
        %v1768 = vld [vmem:[#allocation8 + $0x24] sm:$0xf]
        %v1769 = vld [vmem:[#allocation8 + $0x28] sm:$0xf]
        %v1770 = vld [vmem:[#allocation8 + $0x2c] sm:$0xf]
        %v1771 = vld [vmem:[#allocation8 + $0x30] sm:$0xf]
        %v1772 = vld [vmem:[#allocation8 + $0x34] sm:$0xf]
        %v1773 = vld [vmem:[#allocation8 + $0x38] sm:$0xf]
        %v1774 = vld [vmem:[#allocation8 + $0x3c] sm:$0xf]
        %v1775 = vld [vmem:[%s6] sm:$0x1]
        %v1777 = vlaneseq
        %v1778 = vshrl.u32 %v1777, 7
        %v1779 = vsub.s32 0, %v1778
        %v1780 = vrot.slane %v1775, %v1779
        %v1798 = vunpack.c.l.b16 %v1759
        %v1799 = vunpack.c.l.b16 %v1760
        %v1800 = vunpack.c.l.b16 %v1761
        %v1801 = vunpack.c.l.b16 %v1762
        %v1802 = vunpack.c.l.b16 %v1763
        %v1803 = vunpack.c.l.b16 %v1764
        %v1804 = vunpack.c.l.b16 %v1765
        %v1805 = vunpack.c.l.b16 %v1766
        %v1806 = vunpack.c.l.b16 %v1767
        %v1807 = vunpack.c.l.b16 %v1768
        %v1808 = vunpack.c.l.b16 %v1769
        %v1809 = vunpack.c.l.b16 %v1770
        %v1810 = vunpack.c.l.b16 %v1771
        %v1811 = vunpack.c.l.b16 %v1772
        %v1812 = vunpack.c.l.b16 %v1773
        %v1813 = vunpack.c.l.b16 %v1774
        %v1814 = vpack.c.b16 %v1799, %v1798
        %v1815 = vpack.c.b16 %v1801, %v1800
        %v1816 = vpack.c.b16 %v1803, %v1802
        %v1817 = vpack.c.b16 %v1805, %v1804
        %v1818 = vpack.c.b16 %v1807, %v1806
        %v1819 = vpack.c.b16 %v1809, %v1808
        %v1820 = vpack.c.b16 %v1811, %v1810
        %v1821 = vpack.c.b16 %v1813, %v1812
        %1830 = vmatprep.subr.bf16.mxu0 0
        %1831 = vmatpush1.bf16.msra.mxu0 %v1821
        %1832 = vmatprep.subr.bf16.mxu0 0
        %1833 = vmatpush1.bf16.msra.mxu0 %v1820
        %1834 = vmatprep.subr.bf16.mxu0 0
        %1835 = vmatpush1.bf16.msra.mxu0 %v1819
        %1836 = vmatprep.subr.bf16.mxu0 0
        %1837 = vmatpush1.bf16.msra.mxu0 %v1818
        %1838 = vmatprep.subr.bf16.mxu0 0
        %1839 = vmatpush1.bf16.msra.mxu0 %v1817
        %1840 = vmatprep.subr.bf16.mxu0 0
        %1841 = vmatpush1.bf16.msra.mxu0 %v1816
        %1842 = vmatprep.subr.bf16.mxu0 0
        %1843 = vmatpush1.bf16.msra.mxu0 %v1815
        %1844 = vmatprep.subr.bf16.mxu0 0
        %1845 = vmatpush1.bf16.msra.mxu0 %v1814
        %1846 = vmatprep.subr.bf16.mxu0 0
        %1847 = vmatpush2.bf16.msra.mxu0 0
        %1848 = vmatprep.subr.bf16.mxu0 0
        %1849 = vmatpush2.bf16.msra.mxu0 0
        %1850 = vmatprep.subr.bf16.mxu0 0
        %1851 = vmatpush2.bf16.msra.mxu0 0
        %1852 = vmatprep.subr.bf16.mxu0 0
        %1853 = vmatpush2.bf16.msra.mxu0 0
        %1854 = vmatprep.subr.bf16.mxu0 0
        %1855 = vmatpush2.bf16.msra.mxu0 0
        %1856 = vmatprep.subr.bf16.mxu0 0
        %1857 = vmatpush2.bf16.msra.mxu0 0
        %1858 = vmatprep.subr.bf16.mxu0 0
        %1859 = vmatpush2.bf16.msra.mxu0 0
        %1860 = vmatprep.subr.bf16.mxu0 0
        %1861 = vmatpush2.bf16.msra.mxu0 0
        %1862 = vmatprep.mubr.bf16.mxu0 0
        %1863 = vmatmul.mubr.bf16.gmra.mxu0 %v1743
        %v1864 = vpop.f32.mrf.mxu0
        %v1865 = vadd.f32 %v1780, %v1864
        %v1866 = vpop.f32.mrf.mxu0
        %v1867 = vpop.f32.mrf.mxu0
        %v1868 = vadd.f32 %v1780, %v1867
        %v1869 = vpop.f32.mrf.mxu0
        %1870 = vmatprep.mubr.bf16.mxu0 0
        %1871 = vmatmul.mubr.bf16.gmra.mxu0 %v1744
        %v1872 = vpop.f32.mrf.mxu0
        %v1873 = vadd.f32 %v1780, %v1872
        %v1874 = vpop.f32.mrf.mxu0
        %v1875 = vpop.f32.mrf.mxu0
        %v1876 = vadd.f32 %v1780, %v1875
        %v1877 = vpop.f32.mrf.mxu0
        %1878 = vmatprep.mubr.bf16.mxu0 0
        %1879 = vmatmul.mubr.bf16.gmra.mxu0 %v1745
        %v1880 = vpop.f32.mrf.mxu0
        %v1881 = vadd.f32 %v1780, %v1880
        %v1882 = vpop.f32.mrf.mxu0
        %v1883 = vpop.f32.mrf.mxu0
        %v1884 = vadd.f32 %v1780, %v1883
        %v1885 = vpop.f32.mrf.mxu0
        %1886 = vmatprep.mubr.bf16.mxu0 0
        %1887 = vmatmul.mubr.bf16.gmra.mxu0 %v1746
        %v1888 = vpop.f32.mrf.mxu0
        %v1889 = vadd.f32 %v1780, %v1888
        %v1890 = vpop.f32.mrf.mxu0
        %v1891 = vpop.f32.mrf.mxu0
        %v1892 = vadd.f32 %v1780, %v1891
        %v1893 = vpop.f32.mrf.mxu0
        %1894 = vmatprep.mubr.bf16.mxu0 0
        %1895 = vmatmul.mubr.bf16.gmra.mxu0 %v1747
        %v1896 = vpop.f32.mrf.mxu0
        %v1897 = vadd.f32 %v1780, %v1896
        %v1898 = vpop.f32.mrf.mxu0
        %v1899 = vpop.f32.mrf.mxu0
        %v1900 = vadd.f32 %v1780, %v1899
        %v1901 = vpop.f32.mrf.mxu0
        %1902 = vmatprep.mubr.bf16.mxu0 0
        %1903 = vmatmul.mubr.bf16.gmra.mxu0 %v1748
        %v1904 = vpop.f32.mrf.mxu0
        %v1905 = vadd.f32 %v1780, %v1904
        %v1906 = vpop.f32.mrf.mxu0
        %v1907 = vpop.f32.mrf.mxu0
        %v1908 = vadd.f32 %v1780, %v1907
        %v1909 = vpop.f32.mrf.mxu0
        %1910 = vmatprep.mubr.bf16.mxu0 0
        %1911 = vmatmul.mubr.bf16.gmra.mxu0 %v1749
        %v1912 = vpop.f32.mrf.mxu0
        %v1913 = vadd.f32 %v1780, %v1912
        %v1914 = vpop.f32.mrf.mxu0
        %v1915 = vpop.f32.mrf.mxu0
        %v1916 = vadd.f32 %v1780, %v1915
        %v1917 = vpop.f32.mrf.mxu0
        %1918 = vmatprep.mubr.bf16.mxu0 0
        %1919 = vmatmul.mubr.bf16.gmra.mxu0 %v1750
        %v1920 = vpop.f32.mrf.mxu0
        %v1921 = vadd.f32 %v1780, %v1920
        %v1922 = vpop.f32.mrf.mxu0
        %v1923 = vpop.f32.mrf.mxu0
        %v1924 = vadd.f32 %v1780, %v1923
        %v1925 = vpop.f32.mrf.mxu0
        %1926 = vmatprep.mubr.bf16.mxu0 0
        %1927 = vmatmul.mubr.bf16.gmra.mxu0 %v1751
        %v1928 = vpop.f32.mrf.mxu0
        %v1929 = vadd.f32 %v1780, %v1928
        %v1930 = vpop.f32.mrf.mxu0
        %v1931 = vpop.f32.mrf.mxu0
        %v1932 = vadd.f32 %v1780, %v1931
        %v1933 = vpop.f32.mrf.mxu0
        %1934 = vmatprep.mubr.bf16.mxu0 0
        %1935 = vmatmul.mubr.bf16.gmra.mxu0 %v1752
        %v1936 = vpop.f32.mrf.mxu0
        %v1937 = vadd.f32 %v1780, %v1936
        %v1938 = vpop.f32.mrf.mxu0
        %v1939 = vpop.f32.mrf.mxu0
        %v1940 = vadd.f32 %v1780, %v1939
        %v1941 = vpop.f32.mrf.mxu0
        %1942 = vmatprep.mubr.bf16.mxu0 0
        %1943 = vmatmul.mubr.bf16.gmra.mxu0 %v1753
        %v1944 = vpop.f32.mrf.mxu0
        %v1945 = vadd.f32 %v1780, %v1944
        %v1946 = vpop.f32.mrf.mxu0
        %v1947 = vpop.f32.mrf.mxu0
        %v1948 = vadd.f32 %v1780, %v1947
        %v1949 = vpop.f32.mrf.mxu0
        %1950 = vmatprep.mubr.bf16.mxu0 0
        %1951 = vmatmul.mubr.bf16.gmra.mxu0 %v1754
        %v1952 = vpop.f32.mrf.mxu0
        %v1953 = vadd.f32 %v1780, %v1952
        %v1954 = vpop.f32.mrf.mxu0
        %v1955 = vpop.f32.mrf.mxu0
        %v1956 = vadd.f32 %v1780, %v1955
        %v1957 = vpop.f32.mrf.mxu0
        %1958 = vmatprep.mubr.bf16.mxu0 0
        %1959 = vmatmul.mubr.bf16.gmra.mxu0 %v1755
        %v1960 = vpop.f32.mrf.mxu0
        %v1961 = vadd.f32 %v1780, %v1960
        %v1962 = vpop.f32.mrf.mxu0
        %v1963 = vpop.f32.mrf.mxu0
        %v1964 = vadd.f32 %v1780, %v1963
        %v1965 = vpop.f32.mrf.mxu0
        %1966 = vmatprep.mubr.bf16.mxu0 0
        %1967 = vmatmul.mubr.bf16.gmra.mxu0 %v1756
        %v1968 = vpop.f32.mrf.mxu0
        %v1969 = vadd.f32 %v1780, %v1968
        %v1970 = vpop.f32.mrf.mxu0
        %v1971 = vpop.f32.mrf.mxu0
        %v1972 = vadd.f32 %v1780, %v1971
        %v1973 = vpop.f32.mrf.mxu0
        %1974 = vmatprep.mubr.bf16.mxu0 0
        %1975 = vmatmul.mubr.bf16.gmra.mxu0 %v1757
        %v1976 = vpop.f32.mrf.mxu0
        %v1977 = vadd.f32 %v1780, %v1976
        %v1978 = vpop.f32.mrf.mxu0
        %v1979 = vpop.f32.mrf.mxu0
        %v1980 = vadd.f32 %v1780, %v1979
        %v1981 = vpop.f32.mrf.mxu0
        %1982 = vmatprep.mubr.bf16.mxu0 0
        %1983 = vmatmul.mubr.bf16.gmra.mxu0 %v1758
        %v1984 = vpop.f32.mrf.mxu0
        %v1985 = vadd.f32 %v1780, %v1984
        %v1986 = vpop.f32.mrf.mxu0
        %v1987 = vpop.f32.mrf.mxu0
        %v1988 = vadd.f32 %v1780, %v1987
        %v1989 = vpop.f32.mrf.mxu0
        %1990 = vdwg.mxu0
        %v1991 = vpack.c.bf16 %v1868, %v1865
        %v1992 = vpack.c.bf16 %v1876, %v1873
        %v1993 = vpack.c.bf16 %v1884, %v1881
        %v1994 = vpack.c.bf16 %v1892, %v1889
        %v1995 = vpack.c.bf16 %v1900, %v1897
        %v1996 = vpack.c.bf16 %v1908, %v1905
        %v1997 = vpack.c.bf16 %v1916, %v1913
        %v1998 = vpack.c.bf16 %v1924, %v1921
        %v1999 = vpack.c.bf16 %v1932, %v1929
        %v2000 = vpack.c.bf16 %v1940, %v1937
        %v2001 = vpack.c.bf16 %v1948, %v1945
        %v2002 = vpack.c.bf16 %v1956, %v1953
        %v2003 = vpack.c.bf16 %v1964, %v1961
        %v2004 = vpack.c.bf16 %v1972, %v1969
        %v2005 = vpack.c.bf16 %v1980, %v1977
        %v2006 = vpack.c.bf16 %v1988, %v1985
        %v2023 = vunpack.c.l.b16 %v1991
        %v2024 = vunpack.c.h.b16 %v1991
        %v2025 = vunpack.c.l.b16 %v1992
        %v2026 = vunpack.c.h.b16 %v1992
        %v2027 = vunpack.c.l.b16 %v1993
        %v2028 = vunpack.c.h.b16 %v1993
        %v2029 = vunpack.c.l.b16 %v1994
        %v2030 = vunpack.c.h.b16 %v1994
        %v2031 = vunpack.c.l.b16 %v1995
        %v2032 = vunpack.c.h.b16 %v1995
        %v2033 = vunpack.c.l.b16 %v1996
        %v2034 = vunpack.c.h.b16 %v1996
        %v2035 = vunpack.c.l.b16 %v1997
        %v2036 = vunpack.c.h.b16 %v1997
        %v2037 = vunpack.c.l.b16 %v1998
        %v2038 = vunpack.c.h.b16 %v1998
        %v2039 = vunpack.c.l.b16 %v1999
        %v2040 = vunpack.c.h.b16 %v1999
        %v2041 = vunpack.c.l.b16 %v2000
        %v2042 = vunpack.c.h.b16 %v2000
        %v2043 = vunpack.c.l.b16 %v2001
        %v2044 = vunpack.c.h.b16 %v2001
        %v2045 = vunpack.c.l.b16 %v2002
        %v2046 = vunpack.c.h.b16 %v2002
        %v2047 = vunpack.c.l.b16 %v2003
        %v2048 = vunpack.c.h.b16 %v2003
        %v2049 = vunpack.c.l.b16 %v2004
        %v2050 = vunpack.c.h.b16 %v2004
        %v2051 = vunpack.c.l.b16 %v2005
        %v2052 = vunpack.c.h.b16 %v2005
        %v2053 = vunpack.c.l.b16 %v2006
        %v2054 = vunpack.c.h.b16 %v2006
        %v2055 = vpack.c.b16 %v2023, %v2023
        %v2056 = vpack.c.b16 %v2024, %v2024
        %v2057 = vpack.c.b16 %v2025, %v2025
        %v2058 = vpack.c.b16 %v2026, %v2026
        %v2059 = vpack.c.b16 %v2027, %v2027
        %v2060 = vpack.c.b16 %v2028, %v2028
        %v2061 = vpack.c.b16 %v2029, %v2029
        %v2062 = vpack.c.b16 %v2030, %v2030
        %v2063 = vpack.c.b16 %v2031, %v2031
        %v2064 = vpack.c.b16 %v2032, %v2032
        %v2065 = vpack.c.b16 %v2033, %v2033
        %v2066 = vpack.c.b16 %v2034, %v2034
        %v2067 = vpack.c.b16 %v2035, %v2035
        %v2068 = vpack.c.b16 %v2036, %v2036
        %v2069 = vpack.c.b16 %v2037, %v2037
        %v2070 = vpack.c.b16 %v2038, %v2038
        %v2071 = vpack.c.b16 %v2039, %v2039
        %v2072 = vpack.c.b16 %v2040, %v2040
        %v2073 = vpack.c.b16 %v2041, %v2041
        %v2074 = vpack.c.b16 %v2042, %v2042
        %v2075 = vpack.c.b16 %v2043, %v2043
        %v2076 = vpack.c.b16 %v2044, %v2044
        %v2077 = vpack.c.b16 %v2045, %v2045
        %v2078 = vpack.c.b16 %v2046, %v2046
        %v2079 = vpack.c.b16 %v2047, %v2047
        %v2080 = vpack.c.b16 %v2048, %v2048
        %v2081 = vpack.c.b16 %v2049, %v2049
        %v2082 = vpack.c.b16 %v2050, %v2050
        %v2083 = vpack.c.b16 %v2051, %v2051
        %v2084 = vpack.c.b16 %v2052, %v2052
        %v2085 = vpack.c.b16 %v2053, %v2053
        %v2086 = vpack.c.b16 %v2054, %v2054
        %2119 = vst [vmem:[%s341] sm:$0xf] %v2055
        %2120 = vst [vmem:[%s341 + $0x4] sm:$0xf] %v2056
        %2121 = vst [vmem:[%s341 + $0x8] sm:$0xf] %v2057
        %2122 = vst [vmem:[%s341 + $0xc] sm:$0xf] %v2058
        %2123 = vst [vmem:[%s341 + $0x10] sm:$0xf] %v2059
        %2124 = vst [vmem:[%s341 + $0x14] sm:$0xf] %v2060
        %2125 = vst [vmem:[%s341 + $0x18] sm:$0xf] %v2061
        %2126 = vst [vmem:[%s341 + $0x1c] sm:$0xf] %v2062
        %2127 = vst [vmem:[%s341 + $0x20] sm:$0xf] %v2063
        %2128 = vst [vmem:[%s341 + $0x24] sm:$0xf] %v2064
        %2129 = vst [vmem:[%s341 + $0x28] sm:$0xf] %v2065
        %2130 = vst [vmem:[%s341 + $0x2c] sm:$0xf] %v2066
        %2131 = vst [vmem:[%s341 + $0x30] sm:$0xf] %v2067
        %2132 = vst [vmem:[%s341 + $0x34] sm:$0xf] %v2068
        %2133 = vst [vmem:[%s341 + $0x38] sm:$0xf] %v2069
        %2134 = vst [vmem:[%s341 + $0x3c] sm:$0xf] %v2070
        %2135 = vst [vmem:[%s341 + $0x40] sm:$0xf] %v2071
        %2136 = vst [vmem:[%s341 + $0x44] sm:$0xf] %v2072
        %2137 = vst [vmem:[%s341 + $0x48] sm:$0xf] %v2073
        %2138 = vst [vmem:[%s341 + $0x4c] sm:$0xf] %v2074
        %2139 = vst [vmem:[%s341 + $0x50] sm:$0xf] %v2075
        %2140 = vst [vmem:[%s341 + $0x54] sm:$0xf] %v2076
        %2141 = vst [vmem:[%s341 + $0x58] sm:$0xf] %v2077
        %2142 = vst [vmem:[%s341 + $0x5c] sm:$0xf] %v2078
        %2143 = vst [vmem:[%s341 + $0x60] sm:$0xf] %v2079
        %2144 = vst [vmem:[%s341 + $0x64] sm:$0xf] %v2080
        %2145 = vst [vmem:[%s341 + $0x68] sm:$0xf] %v2081
        %2146 = vst [vmem:[%s341 + $0x6c] sm:$0xf] %v2082
        %2147 = vst [vmem:[%s341 + $0x70] sm:$0xf] %v2083
        %2148 = vst [vmem:[%s341 + $0x74] sm:$0xf] %v2084
        %2149 = vst [vmem:[%s341 + $0x78] sm:$0xf] %v2085
        %2150 = vst [vmem:[%s341 + $0x7c] sm:$0xf] %v2086
        %s2151 = sand.u32 %s186, 1
        %s2152 = scalar_lea.sflag [#allocation4], %s2151
        %s2153 = sand.u32 %s186, 1
        %s2154 = smul.addr %s2153, 128
        %s2155 = scalar_lea.vmem [#allocation10], %s2154
        // Predicated region
        $region65: #{tpu_custom_call.1} parent=47 // pred_check
          %p2156 = pneg %p196
        $region66: #{tpu_custom_call.1} parent=47 // pred_check_branch
          %2158 = sbr.rel (%p2156) target = $region68
        $region67: #{tpu_custom_call.1} parent=47 // pred_region
          %s2159 = smul.u32 32, %s26
          %s2161 = ssub.s32 2048, 2048
          %2162 = vsyncadd %s2152, %s2161
          %s2163 = smul.addr %s2159, 64
          %s2164 = scalar_lea.hbm %s7, %s2163
          %s2165 = sshll.u32 %s2155, 4
          %s2166 = int_to_ptr.vmem [resolvable:$true] %s2165
          %2171 = dma.vmem_to_hbm [thread:$0]  %s2166, 2048, %s2164, %s2152, 64, 64, 4
        $region68: #{tpu_custom_call.1} parent=47 // pred_fallthru
          _
      $region48: #{tpu_custom_call.1} parent=5 // pred_fallthru
        _
      %p2172 = scmp.le.s32.totalorder 2, %s21
      // Predicated region
      $region69: #{tpu_custom_call.1} parent=5 // pred_check
        %p2173 = pneg %p2172
      $region70: #{tpu_custom_call.1} parent=5 // pred_check_branch
        %2175 = sbr.rel (%p2173) target = $region72
      $region71: #{tpu_custom_call.1} parent=5 // pred_region
        %s2176 = ssub.s32 %s21, 2
        // Predicated region
        $region73: #{tpu_custom_call.1} parent=71 // pred_check
          %p2177 = pneg %p202
        $region74: #{tpu_custom_call.1} parent=71 // pred_check_branch
          %2179 = sbr.rel (%p2177) target = $region76
        $region75: #{tpu_custom_call.1} parent=71 // pred_region
          %s2180 = sand.u32 %s187, 1
          %s2181 = scalar_lea.sflag [#allocation4], %s2180
          %s2182 = sand.u32 %s187, 1
          %s2183 = smul.addr %s2182, 128
          %s2184 = scalar_lea.vmem [#allocation10], %s2183
          %2185 = dma.done %s2181, 2048
        $region76: #{tpu_custom_call.1} parent=71 // pred_fallthru
          _
      $region72: #{tpu_custom_call.1} parent=5 // pred_fallthru
        _
    $region6: #{tpu_custom_call.1} parent=1 // loop_footer
      %s25 = sadd.s32 1, %s21
    $region7: #{tpu_custom_call.1} parent=1 // loop_footer_branch
      %20 = sbr.rel target = $region3
    $region8: #{tpu_custom_call.1} parent=1 // loop_exit
      _
    %2186 = vsyncpa [#allocation3], 1
    %s2187 = scalar_lea.sflag [#allocation3], 1
    %2188 = vsyncpa %s2187, 1
    %2189 = vsyncpa [#allocation6], 1
    %2190 = vsyncpa [#allocation9], 1
    %2191 = vsyncpa [#allocation4], 1
    %s2192 = scalar_lea.sflag [#allocation4], 1
    %2193 = vsyncpa %s2192, 1

// kernel: tpu_custom_call.1
$region0: #{tpu_custom_call.1}
  #allocation0 [shape = 'u32[]', space=smem, size = 0x4, offset = 0x4, fixed_abs, tag = 'smem constant byte address 0x4 - core index']
  #allocation1 [shape = 'u32[144,128]{1,0:T(1,128)}', space=vmem, size = 0x12000, scoped, tag = 'internal scratch']
  %s0 = inlined_call_operand.hbm [shape: f32[512,512], index: 0, kind: input, shape index: {}]
  %s1 = inlined_call_operand.hbm [shape: bf16[512,256], index: 1, kind: input, shape index: {}]
  %s2 = inlined_call_operand.vmem [shape: f32[1,256], index: 2, kind: input, shape index: {}]
  %s3 = inlined_call_operand.hbm [shape: bf16[256,128], index: 3, kind: input, shape index: {}]
  %s4 = inlined_call_operand.vmem [shape: f32[1,128], index: 4, kind: input, shape index: {}]
  %s5 = inlined_call_operand.hbm [shape: bf16[128,128], index: 5, kind: input, shape index: {}]
  %s6 = inlined_call_operand.vmem [shape: f32[1,128], index: 6, kind: input, shape index: {}]
  %s7 = inlined_call_operand.hbm [shape: bf16[512,128], index: 7, kind: output, shape index: {}]
  %s8 = sld [smem:[#allocation0]]
  $region77: #{tpu_custom_call.1} parent=0
    _
  %s10 = ssub.s32 1, %s8
  %s11 = scalar_select 0, %s10, %s8
  $region1: #{tpu_custom_call.1} parent=0
    #allocation2 [shape = 'u8[1048576]{0}', space=vmem, size = 0x100000, scoped, tag = 'input window, operand 0']
    #allocation3 [shape = 's32[2]{0}', space=sflag, size = 0x8, scoped, tag = 'scoped memory for tpu_custom_call.1']
    #allocation4 [shape = 's32[2]{0}', space=sflag, size = 0x8, scoped, tag = 'scoped memory for tpu_custom_call.1']
    #allocation5 [shape = 'u8[262144]{0}', space=vmem, size = 0x40000, scoped, tag = 'input window, operand 1, single buffered']
    #allocation6 [shape = 's32[1]{0}', space=sflag, size = 0x4, scoped, tag = 'scoped memory for tpu_custom_call.1']
    #allocation7 [shape = 'u8[65536]{0}', space=vmem, size = 0x10000, scoped, tag = 'input window, operand 3, single buffered']
    #allocation8 [shape = 'u8[32768]{0}', space=vmem, size = 0x8000, scoped, tag = 'input window, operand 5, single buffered']
    #allocation9 [shape = 's32[1]{0}', space=sflag, size = 0x4, scoped, tag = 'scoped memory for tpu_custom_call.1']
    #allocation10 [shape = 'u8[131072]{0}', space=vmem, size = 0x20000, scoped, tag = 'output window, operand 0']
    %12 = vsyncpa [#allocation3], 0
    %s13 = scalar_lea.sflag [#allocation3], 1
    %14 = vsyncpa %s13, 0
    %15 = vsyncpa [#allocation6], 0
    %16 = vsyncpa [#allocation9], 0
    %17 = vsyncpa [#allocation4], 0
    %s18 = scalar_lea.sflag [#allocation4], 1
    %19 = vsyncpa %s18, 0
    loop: start=0, step=1, limit=4
    $region2: #{tpu_custom_call.1} parent=1 // loop_pre_header
      _
    $region3: #{tpu_custom_call.1} parent=1 // loop_header
      %s21 = sphi 0, %s25
      %p22 = scmp.ge.s32.totalorder %s21, 4
      %s31 = sphi 0, %s33
      %s34 = sphi 0, %s31
      %s35 = sphi 0, %s34
      %s51 = sphi 0, %s35
      %s55 = sphi 0, %s55
      %s57 = sphi 0, %s55
      %s58 = sphi 0, %s57
      %s72 = sphi 0, %s58
      %s76 = sphi 0, %s76
      %s78 = sphi 0, %s76
      %s79 = sphi 0, %s78
      %s93 = sphi 0, %s79
      %s97 = sphi 0, %s97
      %s99 = sphi 0, %s97
      %s100 = sphi 0, %s99
      %s114 = sphi 0, %s100
      %s118 = sphi 0, %s118
      %s120 = sphi 0, %s118
      %s121 = sphi 0, %s120
      %s135 = sphi 0, %s121
      %s139 = sphi 0, %s139
      %s141 = sphi 0, %s139
      %s142 = sphi 0, %s141
      %s156 = sphi 0, %s142
      %s160 = sphi 0, %s160
      %s162 = sphi 0, %s160
      %s163 = sphi 0, %s162
      %s177 = sphi 0, %s163
      %s183 = sphi 0, %s185
      %s186 = sphi 0, %s183
      %s187 = sphi 0, %s186
      %s203 = sphi 0, %s187
    $region4: #{tpu_custom_call.1} parent=1 // loop_header_branch
      %24 = sbr.rel (%p22) target = $region8
    $region5: #{tpu_custom_call.1} parent=1 // loop_body
      %s26 = ssub.s32 %s21, 1
      %s27 = ssub.s32 %s21, 2
      %s28 = sadd.s32 %s21, 1
      %s29 = ssub.s32 %s21, %s28
      %p30 = scmp.eq.s32.totalorder %s29, 0
      %s32 = sadd.s32 %s31, 1
      %s33 = scalar_select %p30, %s31, %s32
      %p36 = pneg %p30
      %p37 = scmp.eq.s32.totalorder %s21, 1
      %p38 = por %p36, %p37
      %p39 = scmp.ne.s32.totalorder %s31, %s34
      %p40 = scmp.eq.s32.totalorder %s21, 0
      %p41 = por %p39, %p40
      %p42 = scmp.ne.s32.totalorder %s31, %s34
      %p43 = scmp.eq.s32.totalorder %s26, 1
      %p44 = por %p42, %p43
      %p45 = scmp.ne.s32.totalorder %s34, %s35
      %p46 = scmp.eq.s32.totalorder %s26, 0
      %p47 = por %p45, %p46
      %p48 = scmp.ne.s32.totalorder %s34, %s35
      %p49 = scmp.eq.s32.totalorder %s27, 1
      %p50 = por %p48, %p49
      %p52 = scmp.ne.s32.totalorder %s35, %s51
      %p53 = scmp.eq.s32.totalorder %s27, 0
      %p54 = por %p52, %p53
      %s56 = sadd.s32 %s55, 1
      %p59 = scmp.eq.s32.totalorder %s21, 1
      %p60 = scmp.ne.s32.totalorder %s55, %s57
      %p61 = scmp.eq.s32.totalorder %s21, 0
      %p62 = por %p60, %p61
      %p63 = scmp.ne.s32.totalorder %s55, %s57
      %p64 = scmp.eq.s32.totalorder %s26, 1
      %p65 = por %p63, %p64
      %p66 = scmp.ne.s32.totalorder %s57, %s58
      %p67 = scmp.eq.s32.totalorder %s26, 0
      %p68 = por %p66, %p67
      %p69 = scmp.ne.s32.totalorder %s57, %s58
      %p70 = scmp.eq.s32.totalorder %s27, 1
      %p71 = por %p69, %p70
      %p73 = scmp.ne.s32.totalorder %s58, %s72
      %p74 = scmp.eq.s32.totalorder %s27, 0
      %p75 = por %p73, %p74
      %s77 = sadd.s32 %s76, 1
      %p80 = scmp.eq.s32.totalorder %s21, 1
      %p81 = scmp.ne.s32.totalorder %s76, %s78
      %p82 = scmp.eq.s32.totalorder %s21, 0
      %p83 = por %p81, %p82
      %p84 = scmp.ne.s32.totalorder %s76, %s78
      %p85 = scmp.eq.s32.totalorder %s26, 1
      %p86 = por %p84, %p85
      %p87 = scmp.ne.s32.totalorder %s78, %s79
      %p88 = scmp.eq.s32.totalorder %s26, 0
      %p89 = por %p87, %p88
      %p90 = scmp.ne.s32.totalorder %s78, %s79
      %p91 = scmp.eq.s32.totalorder %s27, 1
      %p92 = por %p90, %p91
      %p94 = scmp.ne.s32.totalorder %s79, %s93
      %p95 = scmp.eq.s32.totalorder %s27, 0
      %p96 = por %p94, %p95
      %s98 = sadd.s32 %s97, 1
      %p101 = scmp.eq.s32.totalorder %s21, 1
      %p102 = scmp.ne.s32.totalorder %s97, %s99
      %p103 = scmp.eq.s32.totalorder %s21, 0
      %p104 = por %p102, %p103
      %p105 = scmp.ne.s32.totalorder %s97, %s99
      %p106 = scmp.eq.s32.totalorder %s26, 1
      %p107 = por %p105, %p106
      %p108 = scmp.ne.s32.totalorder %s99, %s100
      %p109 = scmp.eq.s32.totalorder %s26, 0
      %p110 = por %p108, %p109
      %p111 = scmp.ne.s32.totalorder %s99, %s100
      %p112 = scmp.eq.s32.totalorder %s27, 1
      %p113 = por %p111, %p112
      %p115 = scmp.ne.s32.totalorder %s100, %s114
      %p116 = scmp.eq.s32.totalorder %s27, 0
      %p117 = por %p115, %p116
      %s119 = sadd.s32 %s118, 1
      %p122 = scmp.eq.s32.totalorder %s21, 1
      %p123 = scmp.ne.s32.totalorder %s118, %s120
      %p124 = scmp.eq.s32.totalorder %s21, 0
      %p125 = por %p123, %p124
      %p126 = scmp.ne.s32.totalorder %s118, %s120
      %p127 = scmp.eq.s32.totalorder %s26, 1
      %p128 = por %p126, %p127
      %p129 = scmp.ne.s32.totalorder %s120, %s121
      %p130 = scmp.eq.s32.totalorder %s26, 0
      %p131 = por %p129, %p130
      %p132 = scmp.ne.s32.totalorder %s120, %s121
      %p133 = scmp.eq.s32.totalorder %s27, 1
      %p134 = por %p132, %p133
      %p136 = scmp.ne.s32.totalorder %s121, %s135
      %p137 = scmp.eq.s32.totalorder %s27, 0
      %p138 = por %p136, %p137
      %s140 = sadd.s32 %s139, 1
      %p143 = scmp.eq.s32.totalorder %s21, 1
      %p144 = scmp.ne.s32.totalorder %s139, %s141
      %p145 = scmp.eq.s32.totalorder %s21, 0
      %p146 = por %p144, %p145
      %p147 = scmp.ne.s32.totalorder %s139, %s141
      %p148 = scmp.eq.s32.totalorder %s26, 1
      %p149 = por %p147, %p148
      %p150 = scmp.ne.s32.totalorder %s141, %s142
      %p151 = scmp.eq.s32.totalorder %s26, 0
      %p152 = por %p150, %p151
      %p153 = scmp.ne.s32.totalorder %s141, %s142
      %p154 = scmp.eq.s32.totalorder %s27, 1
      %p155 = por %p153, %p154
      %p157 = scmp.ne.s32.totalorder %s142, %s156
      %p158 = scmp.eq.s32.totalorder %s27, 0
      %p159 = por %p157, %p158
      %s161 = sadd.s32 %s160, 1
      %p164 = scmp.eq.s32.totalorder %s21, 1
      %p165 = scmp.ne.s32.totalorder %s160, %s162
      %p166 = scmp.eq.s32.totalorder %s21, 0
      %p167 = por %p165, %p166
      %p168 = scmp.ne.s32.totalorder %s160, %s162
      %p169 = scmp.eq.s32.totalorder %s26, 1
      %p170 = por %p168, %p169
      %p171 = scmp.ne.s32.totalorder %s162, %s163
      %p172 = scmp.eq.s32.totalorder %s26, 0
      %p173 = por %p171, %p172
      %p174 = scmp.ne.s32.totalorder %s162, %s163
      %p175 = scmp.eq.s32.totalorder %s27, 1
      %p176 = por %p174, %p175
      %p178 = scmp.ne.s32.totalorder %s163, %s177
      %p179 = scmp.eq.s32.totalorder %s27, 0
      %p180 = por %p178, %p179
      %s181 = ssub.s32 %s21, %s28
      %p182 = scmp.eq.s32.totalorder %s181, 0
      %s184 = sadd.s32 %s183, 1
      %s185 = scalar_select %p182, %s183, %s184
      %p188 = pneg %p182
      %p189 = scmp.eq.s32.totalorder %s21, 1
      %p190 = por %p188, %p189
      %p191 = scmp.ne.s32.totalorder %s183, %s186
      %p192 = scmp.eq.s32.totalorder %s21, 0
      %p193 = por %p191, %p192
      %p194 = scmp.ne.s32.totalorder %s183, %s186
      %p195 = scmp.eq.s32.totalorder %s26, 1
      %p196 = por %p194, %p195
      %p197 = scmp.ne.s32.totalorder %s186, %s187
      %p198 = scmp.eq.s32.totalorder %s26, 0
      %p199 = por %p197, %p198
      %p200 = scmp.ne.s32.totalorder %s186, %s187
      %p201 = scmp.eq.s32.totalorder %s27, 1
      %p202 = por %p200, %p201
      %p204 = scmp.ne.s32.totalorder %s187, %s203
      %p205 = scmp.eq.s32.totalorder %s27, 0
      %p206 = por %p204, %p205
      %p207 = scmp.le.s32.totalorder 1, %s21
      %p208 = scmp.lt.s32.totalorder %s21, 3
      %p209 = pnand %p207, %p208
      %p210 = pneg %p209
      // Predicated region
      $region9: #{tpu_custom_call.1} parent=5 // pred_check
        _
      $region10: #{tpu_custom_call.1} parent=5 // pred_check_branch
        %212 = sbr.rel (%p209) target = $region12
      $region11: #{tpu_custom_call.1} parent=5 // pred_region
        %s213 = ssub.s32 %s21, 1
        // Predicated region
        $region13: #{tpu_custom_call.1} parent=11 // pred_check
          %p214 = pneg %p68
        $region14: #{tpu_custom_call.1} parent=11 // pred_check_branch
          %216 = sbr.rel (%p214) target = $region16
        $region15: #{tpu_custom_call.1} parent=11 // pred_region
          %s218 = ssub.s32 8192, 8192
          %219 = vsyncadd [#allocation6], %s218
          %s220 = sshll.u32 [#allocation5], 4
          %s221 = int_to_ptr.vmem [resolvable:$true] %s220
          %226 = dma.hbm_to_vmem [thread:$0]  %s1, 8192, %s221, [#allocation6], 128, 128, 8
        $region16: #{tpu_custom_call.1} parent=11 // pred_fallthru
          _
        // Predicated region
        $region17: #{tpu_custom_call.1} parent=11 // pred_check
          %p227 = pneg %p89
        $region18: #{tpu_custom_call.1} parent=11 // pred_check_branch
          %229 = sbr.rel (%p227) target = $region20
        $region19: #{tpu_custom_call.1} parent=11 // pred_region
          _
        $region20: #{tpu_custom_call.1} parent=11 // pred_fallthru
          _
        // Predicated region
        $region21: #{tpu_custom_call.1} parent=11 // pred_check
          %p230 = pneg %p110
        $region22: #{tpu_custom_call.1} parent=11 // pred_check_branch
          %232 = sbr.rel (%p230) target = $region24
        $region23: #{tpu_custom_call.1} parent=11 // pred_region
          %s234 = ssub.s32 2048, 2048
          %235 = vsyncadd [#allocation6], %s234
          %s236 = sshll.u32 [#allocation7], 4
          %s237 = int_to_ptr.vmem [resolvable:$true] %s236
          %242 = dma.hbm_to_vmem [thread:$0]  %s3, 2048, %s237, [#allocation6], 64, 64, 4
        $region24: #{tpu_custom_call.1} parent=11 // pred_fallthru
          _
        // Predicated region
        $region25: #{tpu_custom_call.1} parent=11 // pred_check
          %p243 = pneg %p131
        $region26: #{tpu_custom_call.1} parent=11 // pred_check_branch
          %245 = sbr.rel (%p243) target = $region28
        $region27: #{tpu_custom_call.1} parent=11 // pred_region
          _
        $region28: #{tpu_custom_call.1} parent=11 // pred_fallthru
          _
        // Predicated region
        $region29: #{tpu_custom_call.1} parent=11 // pred_check
          %p246 = pneg %p152
        $region30: #{tpu_custom_call.1} parent=11 // pred_check_branch
          %248 = sbr.rel (%p246) target = $region32
        $region31: #{tpu_custom_call.1} parent=11 // pred_region
          %s250 = ssub.s32 1024, 1024
          %251 = vsyncadd [#allocation9], %s250
          %s252 = sshll.u32 [#allocation8], 4
          %s253 = int_to_ptr.vmem [resolvable:$true] %s252
          %258 = dma.hbm_to_vmem [thread:$0]  %s5, 1024, %s253, [#allocation9], 64, 64, 4
        $region32: #{tpu_custom_call.1} parent=11 // pred_fallthru
          _
        // Predicated region
        $region33: #{tpu_custom_call.1} parent=11 // pred_check
          %p259 = pneg %p173
        $region34: #{tpu_custom_call.1} parent=11 // pred_check_branch
          %261 = sbr.rel (%p259) target = $region36
        $region35: #{tpu_custom_call.1} parent=11 // pred_region
          _
        $region36: #{tpu_custom_call.1} parent=11 // pred_fallthru
          _
      $region12: #{tpu_custom_call.1} parent=5 // pred_fallthru
        _
      %p262 = scmp.lt.s32.totalorder %s21, 2
      // Predicated region
      $region37: #{tpu_custom_call.1} parent=5 // pred_check
        %p263 = pneg %p262
      $region38: #{tpu_custom_call.1} parent=5 // pred_check_branch
        %265 = sbr.rel (%p263) target = $region40
      $region39: #{tpu_custom_call.1} parent=5 // pred_region
        // Predicated region
        $region41: #{tpu_custom_call.1} parent=39 // pred_check
          %p266 = pneg %p41
        $region42: #{tpu_custom_call.1} parent=39 // pred_check_branch
          %268 = sbr.rel (%p266) target = $region44
        $region43: #{tpu_custom_call.1} parent=39 // pred_region
          %s269 = sand.u32 %s31, 1
          %s270 = scalar_lea.sflag [#allocation3], %s269
          %s271 = sand.u32 %s31, 1
          %s272 = smul.addr %s271, 1024
          %s273 = scalar_lea.vmem [#allocation2], %s272
          %s274 = smul.u32 32, %s21
          %s276 = ssub.s32 16384, 16384
          %277 = vsyncadd %s270, %s276
          %s278 = smul.addr %s274, 4
          %s279 = smul.addr %s278, 128
          %s280 = scalar_lea.hbm %s0, %s279
          %s281 = sshll.u32 %s273, 4
          %s282 = int_to_ptr.vmem [resolvable:$true] %s281
          %287 = dma.hbm_to_vmem [thread:$0]  %s280, 16384, %s282, %s270, 512, 512, 32
        $region44: #{tpu_custom_call.1} parent=39 // pred_fallthru
          _
      $region40: #{tpu_custom_call.1} parent=5 // pred_fallthru
        _
      %p288 = scmp.le.s32.totalorder 1, %s21
      %p289 = scmp.lt.s32.totalorder %s21, 3
      %p290 = pnand %p288, %p289
      %p291 = pneg %p290
      // Predicated region
      $region45: #{tpu_custom_call.1} parent=5 // pred_check
        _
      $region46: #{tpu_custom_call.1} parent=5 // pred_check_branch
        %293 = sbr.rel (%p290) target = $region48
      $region47: #{tpu_custom_call.1} parent=5 // pred_region
        %s294 = ssub.s32 %s21, 1
        %s295 = sand.u32 %s34, 1
        %s296 = scalar_lea.sflag [#allocation3], %s295
        %s297 = sand.u32 %s34, 1
        %s298 = smul.addr %s297, 1024
        %s299 = scalar_lea.vmem [#allocation2], %s298
        // Predicated region
        $region49: #{tpu_custom_call.1} parent=47 // pred_check
          %p300 = pneg %p47
        $region50: #{tpu_custom_call.1} parent=47 // pred_check_branch
          %302 = sbr.rel (%p300) target = $region52
        $region51: #{tpu_custom_call.1} parent=47 // pred_region
          %303 = dma.done %s296, 16384
        $region52: #{tpu_custom_call.1} parent=47 // pred_fallthru
          _
        // Predicated region
        $region53: #{tpu_custom_call.1} parent=47 // pred_check
          %p304 = pneg %p68
        $region54: #{tpu_custom_call.1} parent=47 // pred_check_branch
          %306 = sbr.rel (%p304) target = $region56
        $region55: #{tpu_custom_call.1} parent=47 // pred_region
          %307 = dma.done [#allocation6], 8192
        $region56: #{tpu_custom_call.1} parent=47 // pred_fallthru
          _
        // Predicated region
        $region57: #{tpu_custom_call.1} parent=47 // pred_check
          %p308 = pneg %p110
        $region58: #{tpu_custom_call.1} parent=47 // pred_check_branch
          %310 = sbr.rel (%p308) target = $region60
        $region59: #{tpu_custom_call.1} parent=47 // pred_region
          %311 = dma.done [#allocation6], 2048
        $region60: #{tpu_custom_call.1} parent=47 // pred_fallthru
          _
        // Predicated region
        $region61: #{tpu_custom_call.1} parent=47 // pred_check
          %p312 = pneg %p152
        $region62: #{tpu_custom_call.1} parent=47 // pred_check_branch
          %314 = sbr.rel (%p312) target = $region64
        $region63: #{tpu_custom_call.1} parent=47 // pred_region
          %315 = dma.done [#allocation9], 1024
        $region64: #{tpu_custom_call.1} parent=47 // pred_fallthru
          _
        %s316 = sand.u32 %s34, 1
        %s317 = scalar_lea.sflag [#allocation3], %s316
        %s318 = sand.u32 %s34, 1
        %s319 = smul.addr %s318, 1024
        %s320 = scalar_lea.vmem [#allocation2], %s319
        %p321 = pneg %p47
        %p322 = pneg %p44
        %p323 = pneg %p68
        %p324 = pneg %p65
        %p325 = pneg %p89
        %p326 = pneg %p86
        %p327 = pneg %p110
        %p328 = pneg %p107
        %p329 = pneg %p131
        %p330 = pneg %p128
        %p331 = pneg %p152
        %p332 = pneg %p149
        %p333 = pneg %p173
        %p334 = pneg %p170
        %p335 = pneg %p199
        %p336 = pneg %p196
        %s337 = sand.u32 %s186, 1
        %s338 = scalar_lea.sflag [#allocation4], %s337
        %s339 = sand.u32 %s186, 1
        %s340 = smul.addr %s339, 128
        %s341 = scalar_lea.vmem [#allocation10], %s340
        %s342 = smul.u32 32, %s26
        %s343 = smul.u32 32, %s26
        %v345 = vld [vmem:[%s299] sm:$0xff]
        %v346 = vld [vmem:[%s299 + $0x8] sm:$0xff]
        %v347 = vld [vmem:[%s299 + $0x10] sm:$0xff]
        %v348 = vld [vmem:[%s299 + $0x18] sm:$0xff]
        %v349 = vld [vmem:[%s299 + $0x20] sm:$0xff]
        %v350 = vld [vmem:[%s299 + $0x28] sm:$0xff]
        %v351 = vld [vmem:[%s299 + $0x30] sm:$0xff]
        %v352 = vld [vmem:[%s299 + $0x38] sm:$0xff]
        %v353 = vld [vmem:[%s299 + $0x40] sm:$0xff]
        %v354 = vld [vmem:[%s299 + $0x48] sm:$0xff]
        %v355 = vld [vmem:[%s299 + $0x50] sm:$0xff]
        %v356 = vld [vmem:[%s299 + $0x58] sm:$0xff]
        %v357 = vld [vmem:[%s299 + $0x60] sm:$0xff]
        %v358 = vld [vmem:[%s299 + $0x68] sm:$0xff]
        %v359 = vld [vmem:[%s299 + $0x70] sm:$0xff]
        %v360 = vld [vmem:[%s299 + $0x78] sm:$0xff]
        %v361 = vld [vmem:[%s299 + $0x80] sm:$0xff]
        %v362 = vld [vmem:[%s299 + $0x88] sm:$0xff]
        %v363 = vld [vmem:[%s299 + $0x90] sm:$0xff]
        %v364 = vld [vmem:[%s299 + $0x98] sm:$0xff]
        %v365 = vld [vmem:[%s299 + $0xa0] sm:$0xff]
        %v366 = vld [vmem:[%s299 + $0xa8] sm:$0xff]
        %v367 = vld [vmem:[%s299 + $0xb0] sm:$0xff]
        %v368 = vld [vmem:[%s299 + $0xb8] sm:$0xff]
        %v369 = vld [vmem:[%s299 + $0xc0] sm:$0xff]
        %v370 = vld [vmem:[%s299 + $0xc8] sm:$0xff]
        %v371 = vld [vmem:[%s299 + $0xd0] sm:$0xff]
        %v372 = vld [vmem:[%s299 + $0xd8] sm:$0xff]
        %v373 = vld [vmem:[%s299 + $0xe0] sm:$0xff]
        %v374 = vld [vmem:[%s299 + $0xe8] sm:$0xff]
        %v375 = vld [vmem:[%s299 + $0xf0] sm:$0xff]
        %v376 = vld [vmem:[%s299 + $0xf8] sm:$0xff]
        %v377 = vld [vmem:[%s299 + $0x100] sm:$0xff]
        %v378 = vld [vmem:[%s299 + $0x108] sm:$0xff]
        %v379 = vld [vmem:[%s299 + $0x110] sm:$0xff]
        %v380 = vld [vmem:[%s299 + $0x118] sm:$0xff]
        %v381 = vld [vmem:[%s299 + $0x120] sm:$0xff]
        %v382 = vld [vmem:[%s299 + $0x128] sm:$0xff]
        %v383 = vld [vmem:[%s299 + $0x130] sm:$0xff]
        %v384 = vld [vmem:[%s299 + $0x138] sm:$0xff]
        %v385 = vld [vmem:[%s299 + $0x140] sm:$0xff]
        %v386 = vld [vmem:[%s299 + $0x148] sm:$0xff]
        %v387 = vld [vmem:[%s299 + $0x150] sm:$0xff]
        %v388 = vld [vmem:[%s299 + $0x158] sm:$0xff]
        %v389 = vld [vmem:[%s299 + $0x160] sm:$0xff]
        %v390 = vld [vmem:[%s299 + $0x168] sm:$0xff]
        %v391 = vld [vmem:[%s299 + $0x170] sm:$0xff]
        %v392 = vld [vmem:[%s299 + $0x178] sm:$0xff]
        %v393 = vld [vmem:[%s299 + $0x180] sm:$0xff]
        %v394 = vld [vmem:[%s299 + $0x188] sm:$0xff]
        %v395 = vld [vmem:[%s299 + $0x190] sm:$0xff]
        %v396 = vld [vmem:[%s299 + $0x198] sm:$0xff]
        %v397 = vld [vmem:[%s299 + $0x1a0] sm:$0xff]
        %v398 = vld [vmem:[%s299 + $0x1a8] sm:$0xff]
        %v399 = vld [vmem:[%s299 + $0x1b0] sm:$0xff]
        %v400 = vld [vmem:[%s299 + $0x1b8] sm:$0xff]
        %v401 = vld [vmem:[%s299 + $0x1c0] sm:$0xff]
        %v402 = vld [vmem:[%s299 + $0x1c8] sm:$0xff]
        %v403 = vld [vmem:[%s299 + $0x1d0] sm:$0xff]
        %v404 = vld [vmem:[%s299 + $0x1d8] sm:$0xff]
        %v405 = vld [vmem:[%s299 + $0x1e0] sm:$0xff]
        %v406 = vld [vmem:[%s299 + $0x1e8] sm:$0xff]
        %v407 = vld [vmem:[%s299 + $0x1f0] sm:$0xff]
        %v408 = vld [vmem:[%s299 + $0x1f8] sm:$0xff]
        %v409 = vld [vmem:[%s299 + $0x200] sm:$0xff]
        %v410 = vld [vmem:[%s299 + $0x208] sm:$0xff]
        %v411 = vld [vmem:[%s299 + $0x210] sm:$0xff]
        %v412 = vld [vmem:[%s299 + $0x218] sm:$0xff]
        %v413 = vld [vmem:[%s299 + $0x220] sm:$0xff]
        %v414 = vld [vmem:[%s299 + $0x228] sm:$0xff]
        %v415 = vld [vmem:[%s299 + $0x230] sm:$0xff]
        %v416 = vld [vmem:[%s299 + $0x238] sm:$0xff]
        %v417 = vld [vmem:[%s299 + $0x240] sm:$0xff]
        %v418 = vld [vmem:[%s299 + $0x248] sm:$0xff]
        %v419 = vld [vmem:[%s299 + $0x250] sm:$0xff]
        %v420 = vld [vmem:[%s299 + $0x258] sm:$0xff]
        %v421 = vld [vmem:[%s299 + $0x260] sm:$0xff]
        %v422 = vld [vmem:[%s299 + $0x268] sm:$0xff]
        %v423 = vld [vmem:[%s299 + $0x270] sm:$0xff]
        %v424 = vld [vmem:[%s299 + $0x278] sm:$0xff]
        %v425 = vld [vmem:[%s299 + $0x280] sm:$0xff]
        %v426 = vld [vmem:[%s299 + $0x288] sm:$0xff]
        %v427 = vld [vmem:[%s299 + $0x290] sm:$0xff]
        %v428 = vld [vmem:[%s299 + $0x298] sm:$0xff]
        %v429 = vld [vmem:[%s299 + $0x2a0] sm:$0xff]
        %v430 = vld [vmem:[%s299 + $0x2a8] sm:$0xff]
        %v431 = vld [vmem:[%s299 + $0x2b0] sm:$0xff]
        %v432 = vld [vmem:[%s299 + $0x2b8] sm:$0xff]
        %v433 = vld [vmem:[%s299 + $0x2c0] sm:$0xff]
        %v434 = vld [vmem:[%s299 + $0x2c8] sm:$0xff]
        %v435 = vld [vmem:[%s299 + $0x2d0] sm:$0xff]
        %v436 = vld [vmem:[%s299 + $0x2d8] sm:$0xff]
        %v437 = vld [vmem:[%s299 + $0x2e0] sm:$0xff]
        %v438 = vld [vmem:[%s299 + $0x2e8] sm:$0xff]
        %v439 = vld [vmem:[%s299 + $0x2f0] sm:$0xff]
        %v440 = vld [vmem:[%s299 + $0x2f8] sm:$0xff]
        %v441 = vld [vmem:[%s299 + $0x300] sm:$0xff]
        %v442 = vld [vmem:[%s299 + $0x308] sm:$0xff]
        %v443 = vld [vmem:[%s299 + $0x310] sm:$0xff]
        %v444 = vld [vmem:[%s299 + $0x318] sm:$0xff]
        %v445 = vld [vmem:[%s299 + $0x320] sm:$0xff]
        %v446 = vld [vmem:[%s299 + $0x328] sm:$0xff]
        %v447 = vld [vmem:[%s299 + $0x330] sm:$0xff]
        %v448 = vld [vmem:[%s299 + $0x338] sm:$0xff]
        %v449 = vld [vmem:[%s299 + $0x340] sm:$0xff]
        %v450 = vld [vmem:[%s299 + $0x348] sm:$0xff]
        %v451 = vld [vmem:[%s299 + $0x350] sm:$0xff]
        %v452 = vld [vmem:[%s299 + $0x358] sm:$0xff]
        %v453 = vld [vmem:[%s299 + $0x360] sm:$0xff]
        %v454 = vld [vmem:[%s299 + $0x368] sm:$0xff]
        %v455 = vld [vmem:[%s299 + $0x370] sm:$0xff]
        %v456 = vld [vmem:[%s299 + $0x378] sm:$0xff]
        %v457 = vld [vmem:[%s299 + $0x380] sm:$0xff]
        %v458 = vld [vmem:[%s299 + $0x388] sm:$0xff]
        %v459 = vld [vmem:[%s299 + $0x390] sm:$0xff]
        %v460 = vld [vmem:[%s299 + $0x398] sm:$0xff]
        %v461 = vld [vmem:[%s299 + $0x3a0] sm:$0xff]
        %v462 = vld [vmem:[%s299 + $0x3a8] sm:$0xff]
        %v463 = vld [vmem:[%s299 + $0x3b0] sm:$0xff]
        %v464 = vld [vmem:[%s299 + $0x3b8] sm:$0xff]
        %v465 = vld [vmem:[%s299 + $0x3c0] sm:$0xff]
        %v466 = vld [vmem:[%s299 + $0x3c8] sm:$0xff]
        %v467 = vld [vmem:[%s299 + $0x3d0] sm:$0xff]
        %v468 = vld [vmem:[%s299 + $0x3d8] sm:$0xff]
        %v469 = vld [vmem:[%s299 + $0x3e0] sm:$0xff]
        %v470 = vld [vmem:[%s299 + $0x3e8] sm:$0xff]
        %v471 = vld [vmem:[%s299 + $0x3f0] sm:$0xff]
        %v472 = vld [vmem:[%s299 + $0x3f8] sm:$0xff]
        %v473 = vpack.c.bf16 %v349, %v345
        %v474 = vpack.c.bf16 %v350, %v346
        %v475 = vpack.c.bf16 %v351, %v347
        %v476 = vpack.c.bf16 %v352, %v348
        %v477 = vpack.c.bf16 %v357, %v353
        %v478 = vpack.c.bf16 %v358, %v354
        %v479 = vpack.c.bf16 %v359, %v355
        %v480 = vpack.c.bf16 %v360, %v356
        %v481 = vpack.c.bf16 %v365, %v361
        %v482 = vpack.c.bf16 %v366, %v362
        %v483 = vpack.c.bf16 %v367, %v363
        %v484 = vpack.c.bf16 %v368, %v364
        %v485 = vpack.c.bf16 %v373, %v369
        %v486 = vpack.c.bf16 %v374, %v370
        %v487 = vpack.c.bf16 %v375, %v371
        %v488 = vpack.c.bf16 %v376, %v372
        %v489 = vpack.c.bf16 %v381, %v377
        %v490 = vpack.c.bf16 %v382, %v378
        %v491 = vpack.c.bf16 %v383, %v379
        %v492 = vpack.c.bf16 %v384, %v380
        %v493 = vpack.c.bf16 %v389, %v385
        %v494 = vpack.c.bf16 %v390, %v386
        %v495 = vpack.c.bf16 %v391, %v387
        %v496 = vpack.c.bf16 %v392, %v388
        %v497 = vpack.c.bf16 %v397, %v393
        %v498 = vpack.c.bf16 %v398, %v394
        %v499 = vpack.c.bf16 %v399, %v395
        %v500 = vpack.c.bf16 %v400, %v396
        %v501 = vpack.c.bf16 %v405, %v401
        %v502 = vpack.c.bf16 %v406, %v402
        %v503 = vpack.c.bf16 %v407, %v403
        %v504 = vpack.c.bf16 %v408, %v404
        %v505 = vpack.c.bf16 %v413, %v409
        %v506 = vpack.c.bf16 %v414, %v410
        %v507 = vpack.c.bf16 %v415, %v411
        %v508 = vpack.c.bf16 %v416, %v412
        %v509 = vpack.c.bf16 %v421, %v417
        %v510 = vpack.c.bf16 %v422, %v418
        %v511 = vpack.c.bf16 %v423, %v419
        %v512 = vpack.c.bf16 %v424, %v420
        %v513 = vpack.c.bf16 %v429, %v425
        %v514 = vpack.c.bf16 %v430, %v426
        %v515 = vpack.c.bf16 %v431, %v427
        %v516 = vpack.c.bf16 %v432, %v428
        %v517 = vpack.c.bf16 %v437, %v433
        %v518 = vpack.c.bf16 %v438, %v434
        %v519 = vpack.c.bf16 %v439, %v435
        %v520 = vpack.c.bf16 %v440, %v436
        %v521 = vpack.c.bf16 %v445, %v441
        %v522 = vpack.c.bf16 %v446, %v442
        %v523 = vpack.c.bf16 %v447, %v443
        %v524 = vpack.c.bf16 %v448, %v444
        %v525 = vpack.c.bf16 %v453, %v449
        %v526 = vpack.c.bf16 %v454, %v450
        %v527 = vpack.c.bf16 %v455, %v451
        %v528 = vpack.c.bf16 %v456, %v452
        %v529 = vpack.c.bf16 %v461, %v457
        %v530 = vpack.c.bf16 %v462, %v458
        %v531 = vpack.c.bf16 %v463, %v459
        %v532 = vpack.c.bf16 %v464, %v460
        %v533 = vpack.c.bf16 %v469, %v465
        %v534 = vpack.c.bf16 %v470, %v466
        %v535 = vpack.c.bf16 %v471, %v467
        %v536 = vpack.c.bf16 %v472, %v468
        %v537 = vld [vmem:[#allocation5] sm:$0xff]
        %v538 = vld [vmem:[#allocation5 + $0x8] sm:$0xff]
        %v539 = vld [vmem:[#allocation5 + $0x10] sm:$0xff]
        %v540 = vld [vmem:[#allocation5 + $0x18] sm:$0xff]
        %v541 = vld [vmem:[#allocation5 + $0x20] sm:$0xff]
        %v542 = vld [vmem:[#allocation5 + $0x28] sm:$0xff]
        %v543 = vld [vmem:[#allocation5 + $0x30] sm:$0xff]
        %v544 = vld [vmem:[#allocation5 + $0x38] sm:$0xff]
        %v545 = vld [vmem:[#allocation5 + $0x40] sm:$0xff]
        %v546 = vld [vmem:[#allocation5 + $0x48] sm:$0xff]
        %v547 = vld [vmem:[#allocation5 + $0x50] sm:$0xff]
        %v548 = vld [vmem:[#allocation5 + $0x58] sm:$0xff]
        %v549 = vld [vmem:[#allocation5 + $0x60] sm:$0xff]
        %v550 = vld [vmem:[#allocation5 + $0x68] sm:$0xff]
        %v551 = vld [vmem:[#allocation5 + $0x70] sm:$0xff]
        %v552 = vld [vmem:[#allocation5 + $0x78] sm:$0xff]
        %v553 = vld [vmem:[#allocation5 + $0x80] sm:$0xff]
        %v554 = vld [vmem:[#allocation5 + $0x88] sm:$0xff]
        %v555 = vld [vmem:[#allocation5 + $0x90] sm:$0xff]
        %v556 = vld [vmem:[#allocation5 + $0x98] sm:$0xff]
        %v557 = vld [vmem:[#allocation5 + $0xa0] sm:$0xff]
        %v558 = vld [vmem:[#allocation5 + $0xa8] sm:$0xff]
        %v559 = vld [vmem:[#allocation5 + $0xb0] sm:$0xff]
        %v560 = vld [vmem:[#allocation5 + $0xb8] sm:$0xff]
        %v561 = vld [vmem:[#allocation5 + $0xc0] sm:$0xff]
        %v562 = vld [vmem:[#allocation5 + $0xc8] sm:$0xff]
        %v563 = vld [vmem:[#allocation5 + $0xd0] sm:$0xff]
        %v564 = vld [vmem:[#allocation5 + $0xd8] sm:$0xff]
        %v565 = vld [vmem:[#allocation5 + $0xe0] sm:$0xff]
        %v566 = vld [vmem:[#allocation5 + $0xe8] sm:$0xff]
        %v567 = vld [vmem:[#allocation5 + $0xf0] sm:$0xff]
        %v568 = vld [vmem:[#allocation5 + $0xf8] sm:$0xff]
        %v569 = vld [vmem:[#allocation5 + $0x100] sm:$0xff]
        %v570 = vld [vmem:[#allocation5 + $0x108] sm:$0xff]
        %v571 = vld [vmem:[#allocation5 + $0x110] sm:$0xff]
        %v572 = vld [vmem:[#allocation5 + $0x118] sm:$0xff]
        %v573 = vld [vmem:[#allocation5 + $0x120] sm:$0xff]
        %v574 = vld [vmem:[#allocation5 + $0x128] sm:$0xff]
        %v575 = vld [vmem:[#allocation5 + $0x130] sm:$0xff]
        %v576 = vld [vmem:[#allocation5 + $0x138] sm:$0xff]
        %v577 = vld [vmem:[#allocation5 + $0x140] sm:$0xff]
        %v578 = vld [vmem:[#allocation5 + $0x148] sm:$0xff]
        %v579 = vld [vmem:[#allocation5 + $0x150] sm:$0xff]
        %v580 = vld [vmem:[#allocation5 + $0x158] sm:$0xff]
        %v581 = vld [vmem:[#allocation5 + $0x160] sm:$0xff]
        %v582 = vld [vmem:[#allocation5 + $0x168] sm:$0xff]
        %v583 = vld [vmem:[#allocation5 + $0x170] sm:$0xff]
        %v584 = vld [vmem:[#allocation5 + $0x178] sm:$0xff]
        %v585 = vld [vmem:[#allocation5 + $0x180] sm:$0xff]
        %v586 = vld [vmem:[#allocation5 + $0x188] sm:$0xff]
        %v587 = vld [vmem:[#allocation5 + $0x190] sm:$0xff]
        %v588 = vld [vmem:[#allocation5 + $0x198] sm:$0xff]
        %v589 = vld [vmem:[#allocation5 + $0x1a0] sm:$0xff]
        %v590 = vld [vmem:[#allocation5 + $0x1a8] sm:$0xff]
        %v591 = vld [vmem:[#allocation5 + $0x1b0] sm:$0xff]
        %v592 = vld [vmem:[#allocation5 + $0x1b8] sm:$0xff]
        %v593 = vld [vmem:[#allocation5 + $0x1c0] sm:$0xff]
        %v594 = vld [vmem:[#allocation5 + $0x1c8] sm:$0xff]
        %v595 = vld [vmem:[#allocation5 + $0x1d0] sm:$0xff]
        %v596 = vld [vmem:[#allocation5 + $0x1d8] sm:$0xff]
        %v597 = vld [vmem:[#allocation5 + $0x1e0] sm:$0xff]
        %v598 = vld [vmem:[#allocation5 + $0x1e8] sm:$0xff]
        %v599 = vld [vmem:[#allocation5 + $0x1f0] sm:$0xff]
        %v600 = vld [vmem:[#allocation5 + $0x1f8] sm:$0xff]
        %v601 = vld [vmem:[%s2] sm:$0x3]
        %v603 = vlaneseq
        %v604 = vshrl.u32 %v603, 7
        %v605 = vsub.s32 0, %v604
        %v606 = vrot.slane %v601, %v605
        %v607 = vlaneseq
        %v608 = vshrl.u32 %v607, 7
        %v609 = vsub.s32 1, %v608
        %v610 = vrot.slane %v601, %v609
        %v677 = vunpack.c.l.b16 %v537
        %v678 = vunpack.c.h.b16 %v537
        %v679 = vunpack.c.l.b16 %v538
        %v680 = vunpack.c.h.b16 %v538
        %v681 = vunpack.c.l.b16 %v539
        %v682 = vunpack.c.h.b16 %v539
        %v683 = vunpack.c.l.b16 %v540
        %v684 = vunpack.c.h.b16 %v540
        %v685 = vunpack.c.l.b16 %v541
        %v686 = vunpack.c.h.b16 %v541
        %v687 = vunpack.c.l.b16 %v542
        %v688 = vunpack.c.h.b16 %v542
        %v689 = vunpack.c.l.b16 %v543
        %v690 = vunpack.c.h.b16 %v543
        %v691 = vunpack.c.l.b16 %v544
        %v692 = vunpack.c.h.b16 %v544
        %v693 = vunpack.c.l.b16 %v545
        %v694 = vunpack.c.h.b16 %v545
        %v695 = vunpack.c.l.b16 %v546
        %v696 = vunpack.c.h.b16 %v546
        %v697 = vunpack.c.l.b16 %v547
        %v698 = vunpack.c.h.b16 %v547
        %v699 = vunpack.c.l.b16 %v548
        %v700 = vunpack.c.h.b16 %v548
        %v701 = vunpack.c.l.b16 %v549
        %v702 = vunpack.c.h.b16 %v549
        %v703 = vunpack.c.l.b16 %v550
        %v704 = vunpack.c.h.b16 %v550
        %v705 = vunpack.c.l.b16 %v551
        %v706 = vunpack.c.h.b16 %v551
        %v707 = vunpack.c.l.b16 %v552
        %v708 = vunpack.c.h.b16 %v552
        %v709 = vunpack.c.l.b16 %v553
        %v710 = vunpack.c.h.b16 %v553
        %v711 = vunpack.c.l.b16 %v554
        %v712 = vunpack.c.h.b16 %v554
        %v713 = vunpack.c.l.b16 %v555
        %v714 = vunpack.c.h.b16 %v555
        %v715 = vunpack.c.l.b16 %v556
        %v716 = vunpack.c.h.b16 %v556
        %v717 = vunpack.c.l.b16 %v557
        %v718 = vunpack.c.h.b16 %v557
        %v719 = vunpack.c.l.b16 %v558
        %v720 = vunpack.c.h.b16 %v558
        %v721 = vunpack.c.l.b16 %v559
        %v722 = vunpack.c.h.b16 %v559
        %v723 = vunpack.c.l.b16 %v560
        %v724 = vunpack.c.h.b16 %v560
        %v725 = vunpack.c.l.b16 %v561
        %v726 = vunpack.c.h.b16 %v561
        %v727 = vunpack.c.l.b16 %v562
        %v728 = vunpack.c.h.b16 %v562
        %v729 = vunpack.c.l.b16 %v563
        %v730 = vunpack.c.h.b16 %v563
        %v731 = vunpack.c.l.b16 %v564
        %v732 = vunpack.c.h.b16 %v564
        %v733 = vunpack.c.l.b16 %v565
        %v734 = vunpack.c.h.b16 %v565
        %v735 = vunpack.c.l.b16 %v566
        %v736 = vunpack.c.h.b16 %v566
        %v737 = vunpack.c.l.b16 %v567
        %v738 = vunpack.c.h.b16 %v567
        %v739 = vunpack.c.l.b16 %v568
        %v740 = vunpack.c.h.b16 %v568
        %v741 = vunpack.c.l.b16 %v569
        %v742 = vunpack.c.h.b16 %v569
        %v743 = vunpack.c.l.b16 %v570
        %v744 = vunpack.c.h.b16 %v570
        %v745 = vunpack.c.l.b16 %v571
        %v746 = vunpack.c.h.b16 %v571
        %v747 = vunpack.c.l.b16 %v572
        %v748 = vunpack.c.h.b16 %v572
        %v749 = vunpack.c.l.b16 %v573
        %v750 = vunpack.c.h.b16 %v573
        %v751 = vunpack.c.l.b16 %v574
        %v752 = vunpack.c.h.b16 %v574
        %v753 = vunpack.c.l.b16 %v575
        %v754 = vunpack.c.h.b16 %v575
        %v755 = vunpack.c.l.b16 %v576
        %v756 = vunpack.c.h.b16 %v576
        %v757 = vunpack.c.l.b16 %v577
        %v758 = vunpack.c.h.b16 %v577
        %v759 = vunpack.c.l.b16 %v578
        %v760 = vunpack.c.h.b16 %v578
        %v761 = vunpack.c.l.b16 %v579
        %v762 = vunpack.c.h.b16 %v579
        %v763 = vunpack.c.l.b16 %v580
        %v764 = vunpack.c.h.b16 %v580
        %v765 = vunpack.c.l.b16 %v581
        %v766 = vunpack.c.h.b16 %v581
        %v767 = vunpack.c.l.b16 %v582
        %v768 = vunpack.c.h.b16 %v582
        %v769 = vunpack.c.l.b16 %v583
        %v770 = vunpack.c.h.b16 %v583
        %v771 = vunpack.c.l.b16 %v584
        %v772 = vunpack.c.h.b16 %v584
        %v773 = vunpack.c.l.b16 %v585
        %v774 = vunpack.c.h.b16 %v585
        %v775 = vunpack.c.l.b16 %v586
        %v776 = vunpack.c.h.b16 %v586
        %v777 = vunpack.c.l.b16 %v587
        %v778 = vunpack.c.h.b16 %v587
        %v779 = vunpack.c.l.b16 %v588
        %v780 = vunpack.c.h.b16 %v588
        %v781 = vunpack.c.l.b16 %v589
        %v782 = vunpack.c.h.b16 %v589
        %v783 = vunpack.c.l.b16 %v590
        %v784 = vunpack.c.h.b16 %v590
        %v785 = vunpack.c.l.b16 %v591
        %v786 = vunpack.c.h.b16 %v591
        %v787 = vunpack.c.l.b16 %v592
        %v788 = vunpack.c.h.b16 %v592
        %v789 = vunpack.c.l.b16 %v593
        %v790 = vunpack.c.h.b16 %v593
        %v791 = vunpack.c.l.b16 %v594
        %v792 = vunpack.c.h.b16 %v594
        %v793 = vunpack.c.l.b16 %v595
        %v794 = vunpack.c.h.b16 %v595
        %v795 = vunpack.c.l.b16 %v596
        %v796 = vunpack.c.h.b16 %v596
        %v797 = vunpack.c.l.b16 %v597
        %v798 = vunpack.c.h.b16 %v597
        %v799 = vunpack.c.l.b16 %v598
        %v800 = vunpack.c.h.b16 %v598
        %v801 = vunpack.c.l.b16 %v599
        %v802 = vunpack.c.h.b16 %v599
        %v803 = vunpack.c.l.b16 %v600
        %v804 = vunpack.c.h.b16 %v600
        %v805 = vpack.c.b16 %v679, %v677
        %v806 = vpack.c.b16 %v680, %v678
        %v807 = vpack.c.b16 %v683, %v681
        %v808 = vpack.c.b16 %v684, %v682
        %v809 = vpack.c.b16 %v687, %v685
        %v810 = vpack.c.b16 %v688, %v686
        %v811 = vpack.c.b16 %v691, %v689
        %v812 = vpack.c.b16 %v692, %v690
        %v813 = vpack.c.b16 %v695, %v693
        %v814 = vpack.c.b16 %v696, %v694
        %v815 = vpack.c.b16 %v699, %v697
        %v816 = vpack.c.b16 %v700, %v698
        %v817 = vpack.c.b16 %v703, %v701
        %v818 = vpack.c.b16 %v704, %v702
        %v819 = vpack.c.b16 %v707, %v705
        %v820 = vpack.c.b16 %v708, %v706
        %v821 = vpack.c.b16 %v711, %v709
        %v822 = vpack.c.b16 %v712, %v710
        %v823 = vpack.c.b16 %v715, %v713
        %v824 = vpack.c.b16 %v716, %v714
        %v825 = vpack.c.b16 %v719, %v717
        %v826 = vpack.c.b16 %v720, %v718
        %v827 = vpack.c.b16 %v723, %v721
        %v828 = vpack.c.b16 %v724, %v722
        %v829 = vpack.c.b16 %v727, %v725
        %v830 = vpack.c.b16 %v728, %v726
        %v831 = vpack.c.b16 %v731, %v729
        %v832 = vpack.c.b16 %v732, %v730
        %v833 = vpack.c.b16 %v735, %v733
        %v834 = vpack.c.b16 %v736, %v734
        %v835 = vpack.c.b16 %v739, %v737
        %v836 = vpack.c.b16 %v740, %v738
        %v837 = vpack.c.b16 %v743, %v741
        %v838 = vpack.c.b16 %v744, %v742
        %v839 = vpack.c.b16 %v747, %v745
        %v840 = vpack.c.b16 %v748, %v746
        %v841 = vpack.c.b16 %v751, %v749
        %v842 = vpack.c.b16 %v752, %v750
        %v843 = vpack.c.b16 %v755, %v753
        %v844 = vpack.c.b16 %v756, %v754
        %v845 = vpack.c.b16 %v759, %v757
        %v846 = vpack.c.b16 %v760, %v758
        %v847 = vpack.c.b16 %v763, %v761
        %v848 = vpack.c.b16 %v764, %v762
        %v849 = vpack.c.b16 %v767, %v765
        %v850 = vpack.c.b16 %v768, %v766
        %v851 = vpack.c.b16 %v771, %v769
        %v852 = vpack.c.b16 %v772, %v770
        %v853 = vpack.c.b16 %v775, %v773
        %v854 = vpack.c.b16 %v776, %v774
        %v855 = vpack.c.b16 %v779, %v777
        %v856 = vpack.c.b16 %v780, %v778
        %v857 = vpack.c.b16 %v783, %v781
        %v858 = vpack.c.b16 %v784, %v782
        %v859 = vpack.c.b16 %v787, %v785
        %v860 = vpack.c.b16 %v788, %v786
        %v861 = vpack.c.b16 %v791, %v789
        %v862 = vpack.c.b16 %v792, %v790
        %v863 = vpack.c.b16 %v795, %v793
        %v864 = vpack.c.b16 %v796, %v794
        %v865 = vpack.c.b16 %v799, %v797
        %v866 = vpack.c.b16 %v800, %v798
        %v867 = vpack.c.b16 %v803, %v801
        %v868 = vpack.c.b16 %v804, %v802
        %933 = vmatprep.subr.bf16.mxu0 %v820
        %934 = vmatpush1.bf16.msra.mxu0 %v819
        %935 = vmatprep.subr.bf16.mxu0 %v818
        %936 = vmatpush1.bf16.msra.mxu0 %v817
        %937 = vmatprep.subr.bf16.mxu0 %v816
        %938 = vmatpush1.bf16.msra.mxu0 %v815
        %939 = vmatprep.subr.bf16.mxu0 %v814
        %940 = vmatpush1.bf16.msra.mxu0 %v813
        %941 = vmatprep.subr.bf16.mxu0 %v812
        %942 = vmatpush1.bf16.msra.mxu0 %v811
        %943 = vmatprep.subr.bf16.mxu0 %v810
        %944 = vmatpush1.bf16.msra.mxu0 %v809
        %945 = vmatprep.subr.bf16.mxu0 %v808
        %946 = vmatpush1.bf16.msra.mxu0 %v807
        %947 = vmatprep.subr.bf16.mxu0 %v806
        %948 = vmatpush1.bf16.msra.mxu0 %v805
        %949 = vmatprep.subr.bf16.mxu0 %v836
        %950 = vmatpush2.bf16.msra.mxu0 %v835
        %951 = vmatprep.subr.bf16.mxu0 %v834
        %952 = vmatpush2.bf16.msra.mxu0 %v833
        %953 = vmatprep.subr.bf16.mxu0 %v832
        %954 = vmatpush2.bf16.msra.mxu0 %v831
        %955 = vmatprep.subr.bf16.mxu0 %v830
        %956 = vmatpush2.bf16.msra.mxu0 %v829
        %957 = vmatprep.subr.bf16.mxu0 %v828
        %958 = vmatpush2.bf16.msra.mxu0 %v827
        %959 = vmatprep.subr.bf16.mxu0 %v826
        %960 = vmatpush2.bf16.msra.mxu0 %v825
        %961 = vmatprep.subr.bf16.mxu0 %v824
        %962 = vmatpush2.bf16.msra.mxu0 %v823
        %963 = vmatprep.subr.bf16.mxu0 %v822
        %964 = vmatpush2.bf16.msra.mxu0 %v821
        %965 = vmatprep.mubr.bf16.mxu0 %v474
        %966 = vmatmul.mubr.bf16.gmra.mxu0 %v473
        %v967 = vpop.f32.mrf.mxu0
        %v968 = vadd.f32 %v606, %v967
        %v969 = vpop.f32.mrf.mxu0
        %v970 = vadd.f32 %v610, %v969
        %v971 = vpop.f32.mrf.mxu0
        %v972 = vadd.f32 %v606, %v971
        %v973 = vpop.f32.mrf.mxu0
        %v974 = vadd.f32 %v610, %v973
        %975 = vmatprep.mubr.bf16.mxu0 %v478
        %976 = vmatmul.mubr.bf16.gmra.mxu0 %v477
        %v977 = vpop.f32.mrf.mxu0
        %v978 = vadd.f32 %v606, %v977
        %v979 = vpop.f32.mrf.mxu0
        %v980 = vadd.f32 %v610, %v979
        %v981 = vpop.f32.mrf.mxu0
        %v982 = vadd.f32 %v606, %v981
        %v983 = vpop.f32.mrf.mxu0
        %v984 = vadd.f32 %v610, %v983
        %985 = vmatprep.mubr.bf16.mxu0 %v482
        %986 = vmatmul.mubr.bf16.gmra.mxu0 %v481
        %v987 = vpop.f32.mrf.mxu0
        %v988 = vadd.f32 %v606, %v987
        %v989 = vpop.f32.mrf.mxu0
        %v990 = vadd.f32 %v610, %v989
        %v991 = vpop.f32.mrf.mxu0
        %v992 = vadd.f32 %v606, %v991
        %v993 = vpop.f32.mrf.mxu0
        %v994 = vadd.f32 %v610, %v993
        %995 = vmatprep.mubr.bf16.mxu0 %v486
        %996 = vmatmul.mubr.bf16.gmra.mxu0 %v485
        %v997 = vpop.f32.mrf.mxu0
        %v998 = vadd.f32 %v606, %v997
        %v999 = vpop.f32.mrf.mxu0
        %v1000 = vadd.f32 %v610, %v999
        %v1001 = vpop.f32.mrf.mxu0
        %v1002 = vadd.f32 %v606, %v1001
        %v1003 = vpop.f32.mrf.mxu0
        %v1004 = vadd.f32 %v610, %v1003
        %1005 = vmatprep.mubr.bf16.mxu0 %v490
        %1006 = vmatmul.mubr.bf16.gmra.mxu0 %v489
        %v1007 = vpop.f32.mrf.mxu0
        %v1008 = vadd.f32 %v606, %v1007
        %v1009 = vpop.f32.mrf.mxu0
        %v1010 = vadd.f32 %v610, %v1009
        %v1011 = vpop.f32.mrf.mxu0
        %v1012 = vadd.f32 %v606, %v1011
        %v1013 = vpop.f32.mrf.mxu0
        %v1014 = vadd.f32 %v610, %v1013
        %1015 = vmatprep.mubr.bf16.mxu0 %v494
        %1016 = vmatmul.mubr.bf16.gmra.mxu0 %v493
        %v1017 = vpop.f32.mrf.mxu0
        %v1018 = vadd.f32 %v606, %v1017
        %v1019 = vpop.f32.mrf.mxu0
        %v1020 = vadd.f32 %v610, %v1019
        %v1021 = vpop.f32.mrf.mxu0
        %v1022 = vadd.f32 %v606, %v1021
        %v1023 = vpop.f32.mrf.mxu0
        %v1024 = vadd.f32 %v610, %v1023
        %1025 = vmatprep.mubr.bf16.mxu0 %v498
        %1026 = vmatmul.mubr.bf16.gmra.mxu0 %v497
        %v1027 = vpop.f32.mrf.mxu0
        %v1028 = vadd.f32 %v606, %v1027
        %v1029 = vpop.f32.mrf.mxu0
        %v1030 = vadd.f32 %v610, %v1029
        %v1031 = vpop.f32.mrf.mxu0
        %v1032 = vadd.f32 %v606, %v1031
        %v1033 = vpop.f32.mrf.mxu0
        %v1034 = vadd.f32 %v610, %v1033
        %1035 = vmatprep.mubr.bf16.mxu0 %v502
        %1036 = vmatmul.mubr.bf16.gmra.mxu0 %v501
        %v1037 = vpop.f32.mrf.mxu0
        %v1038 = vadd.f32 %v606, %v1037
        %v1039 = vpop.f32.mrf.mxu0
        %v1040 = vadd.f32 %v610, %v1039
        %v1041 = vpop.f32.mrf.mxu0
        %v1042 = vadd.f32 %v606, %v1041
        %v1043 = vpop.f32.mrf.mxu0
        %v1044 = vadd.f32 %v610, %v1043
        %1045 = vmatprep.mubr.bf16.mxu0 %v506
        %1046 = vmatmul.mubr.bf16.gmra.mxu0 %v505
        %v1047 = vpop.f32.mrf.mxu0
        %v1048 = vadd.f32 %v606, %v1047
        %v1049 = vpop.f32.mrf.mxu0
        %v1050 = vadd.f32 %v610, %v1049
        %v1051 = vpop.f32.mrf.mxu0
        %v1052 = vadd.f32 %v606, %v1051
        %v1053 = vpop.f32.mrf.mxu0
        %v1054 = vadd.f32 %v610, %v1053
        %1055 = vmatprep.mubr.bf16.mxu0 %v510
        %1056 = vmatmul.mubr.bf16.gmra.mxu0 %v509
        %v1057 = vpop.f32.mrf.mxu0
        %v1058 = vadd.f32 %v606, %v1057
        %v1059 = vpop.f32.mrf.mxu0
        %v1060 = vadd.f32 %v610, %v1059
        %v1061 = vpop.f32.mrf.mxu0
        %v1062 = vadd.f32 %v606, %v1061
        %v1063 = vpop.f32.mrf.mxu0
        %v1064 = vadd.f32 %v610, %v1063
        %1065 = vmatprep.mubr.bf16.mxu0 %v514
        %1066 = vmatmul.mubr.bf16.gmra.mxu0 %v513
        %v1067 = vpop.f32.mrf.mxu0
        %v1068 = vadd.f32 %v606, %v1067
        %v1069 = vpop.f32.mrf.mxu0
        %v1070 = vadd.f32 %v610, %v1069
        %v1071 = vpop.f32.mrf.mxu0
        %v1072 = vadd.f32 %v606, %v1071
        %v1073 = vpop.f32.mrf.mxu0
        %v1074 = vadd.f32 %v610, %v1073
        %1075 = vmatprep.mubr.bf16.mxu0 %v518
        %1076 = vmatmul.mubr.bf16.gmra.mxu0 %v517
        %v1077 = vpop.f32.mrf.mxu0
        %v1078 = vadd.f32 %v606, %v1077
        %v1079 = vpop.f32.mrf.mxu0
        %v1080 = vadd.f32 %v610, %v1079
        %v1081 = vpop.f32.mrf.mxu0
        %v1082 = vadd.f32 %v606, %v1081
        %v1083 = vpop.f32.mrf.mxu0
        %v1084 = vadd.f32 %v610, %v1083
        %1085 = vmatprep.mubr.bf16.mxu0 %v522
        %1086 = vmatmul.mubr.bf16.gmra.mxu0 %v521
        %v1087 = vpop.f32.mrf.mxu0
        %v1088 = vadd.f32 %v606, %v1087
        %v1089 = vpop.f32.mrf.mxu0
        %v1090 = vadd.f32 %v610, %v1089
        %v1091 = vpop.f32.mrf.mxu0
        %v1092 = vadd.f32 %v606, %v1091
        %v1093 = vpop.f32.mrf.mxu0
        %v1094 = vadd.f32 %v610, %v1093
        %1095 = vmatprep.mubr.bf16.mxu0 %v526
        %1096 = vmatmul.mubr.bf16.gmra.mxu0 %v525
        %v1097 = vpop.f32.mrf.mxu0
        %v1098 = vadd.f32 %v606, %v1097
        %v1099 = vpop.f32.mrf.mxu0
        %v1100 = vadd.f32 %v610, %v1099
        %v1101 = vpop.f32.mrf.mxu0
        %v1102 = vadd.f32 %v606, %v1101
        %v1103 = vpop.f32.mrf.mxu0
        %v1104 = vadd.f32 %v610, %v1103
        %1105 = vmatprep.mubr.bf16.mxu0 %v530
        %1106 = vmatmul.mubr.bf16.gmra.mxu0 %v529
        %v1107 = vpop.f32.mrf.mxu0
        %v1108 = vadd.f32 %v606, %v1107
        %v1109 = vpop.f32.mrf.mxu0
        %v1110 = vadd.f32 %v610, %v1109
        %v1111 = vpop.f32.mrf.mxu0
        %v1112 = vadd.f32 %v606, %v1111
        %v1113 = vpop.f32.mrf.mxu0
        %v1114 = vadd.f32 %v610, %v1113
        %1115 = vmatprep.mubr.bf16.mxu0 %v534
        %1116 = vmatmul.mubr.bf16.gmra.mxu0 %v533
        %v1117 = vpop.f32.mrf.mxu0
        %v1118 = vadd.f32 %v606, %v1117
        %v1119 = vpop.f32.mrf.mxu0
        %v1120 = vadd.f32 %v610, %v1119
        %v1121 = vpop.f32.mrf.mxu0
        %v1122 = vadd.f32 %v606, %v1121
        %v1123 = vpop.f32.mrf.mxu0
        %v1124 = vadd.f32 %v610, %v1123
        %1125 = vdwg.mxu0
        %1126 = vmatprep.subr.bf16.mxu0 %v852
        %1127 = vmatpush1.bf16.msra.mxu0 %v851
        %1128 = vmatprep.subr.bf16.mxu0 %v850
        %1129 = vmatpush1.bf16.msra.mxu0 %v849
        %1130 = vmatprep.subr.bf16.mxu0 %v848
        %1131 = vmatpush1.bf16.msra.mxu0 %v847
        %1132 = vmatprep.subr.bf16.mxu0 %v846
        %1133 = vmatpush1.bf16.msra.mxu0 %v845
        %1134 = vmatprep.subr.bf16.mxu0 %v844
        %1135 = vmatpush1.bf16.msra.mxu0 %v843
        %1136 = vmatprep.subr.bf16.mxu0 %v842
        %1137 = vmatpush1.bf16.msra.mxu0 %v841
        %1138 = vmatprep.subr.bf16.mxu0 %v840
        %1139 = vmatpush1.bf16.msra.mxu0 %v839
        %1140 = vmatprep.subr.bf16.mxu0 %v838
        %1141 = vmatpush1.bf16.msra.mxu0 %v837
        %1142 = vmatprep.subr.bf16.mxu0 %v868
        %1143 = vmatpush2.bf16.msra.mxu0 %v867
        %1144 = vmatprep.subr.bf16.mxu0 %v866
        %1145 = vmatpush2.bf16.msra.mxu0 %v865
        %1146 = vmatprep.subr.bf16.mxu0 %v864
        %1147 = vmatpush2.bf16.msra.mxu0 %v863
        %1148 = vmatprep.subr.bf16.mxu0 %v862
        %1149 = vmatpush2.bf16.msra.mxu0 %v861
        %1150 = vmatprep.subr.bf16.mxu0 %v860
        %1151 = vmatpush2.bf16.msra.mxu0 %v859
        %1152 = vmatprep.subr.bf16.mxu0 %v858
        %1153 = vmatpush2.bf16.msra.mxu0 %v857
        %1154 = vmatprep.subr.bf16.mxu0 %v856
        %1155 = vmatpush2.bf16.msra.mxu0 %v855
        %1156 = vmatprep.subr.bf16.mxu0 %v854
        %1157 = vmatpush2.bf16.msra.mxu0 %v853
        %1158 = vmatprep.mubr.bf16.mxu0 %v476
        %1159 = vmatmul.mubr.bf16.gmra.mxu0 %v475
        %v1160 = vpop.f32.mrf.mxu0
        %v1161 = vadd.f32 %v968, %v1160
        %v1162 = vpop.f32.mrf.mxu0
        %v1163 = vadd.f32 %v970, %v1162
        %v1164 = vpop.f32.mrf.mxu0
        %v1165 = vadd.f32 %v972, %v1164
        %v1166 = vpop.f32.mrf.mxu0
        %v1167 = vadd.f32 %v974, %v1166
        %1168 = vmatprep.mubr.bf16.mxu0 %v480
        %1169 = vmatmul.mubr.bf16.gmra.mxu0 %v479
        %v1170 = vpop.f32.mrf.mxu0
        %v1171 = vadd.f32 %v978, %v1170
        %v1172 = vpop.f32.mrf.mxu0
        %v1173 = vadd.f32 %v980, %v1172
        %v1174 = vpop.f32.mrf.mxu0
        %v1175 = vadd.f32 %v982, %v1174
        %v1176 = vpop.f32.mrf.mxu0
        %v1177 = vadd.f32 %v984, %v1176
        %1178 = vmatprep.mubr.bf16.mxu0 %v484
        %1179 = vmatmul.mubr.bf16.gmra.mxu0 %v483
        %v1180 = vpop.f32.mrf.mxu0
        %v1181 = vadd.f32 %v988, %v1180
        %v1182 = vpop.f32.mrf.mxu0
        %v1183 = vadd.f32 %v990, %v1182
        %v1184 = vpop.f32.mrf.mxu0
        %v1185 = vadd.f32 %v992, %v1184
        %v1186 = vpop.f32.mrf.mxu0
        %v1187 = vadd.f32 %v994, %v1186
        %1188 = vmatprep.mubr.bf16.mxu0 %v488
        %1189 = vmatmul.mubr.bf16.gmra.mxu0 %v487
        %v1190 = vpop.f32.mrf.mxu0
        %v1191 = vadd.f32 %v998, %v1190
        %v1192 = vpop.f32.mrf.mxu0
        %v1193 = vadd.f32 %v1000, %v1192
        %v1194 = vpop.f32.mrf.mxu0
        %v1195 = vadd.f32 %v1002, %v1194
        %v1196 = vpop.f32.mrf.mxu0
        %v1197 = vadd.f32 %v1004, %v1196
        %1198 = vmatprep.mubr.bf16.mxu0 %v492
        %1199 = vmatmul.mubr.bf16.gmra.mxu0 %v491
        %v1200 = vpop.f32.mrf.mxu0
        %v1201 = vadd.f32 %v1008, %v1200
        %v1202 = vpop.f32.mrf.mxu0
        %v1203 = vadd.f32 %v1010, %v1202
        %v1204 = vpop.f32.mrf.mxu0
        %v1205 = vadd.f32 %v1012, %v1204
        %v1206 = vpop.f32.mrf.mxu0
        %v1207 = vadd.f32 %v1014, %v1206
        %1208 = vmatprep.mubr.bf16.mxu0 %v496
        %1209 = vmatmul.mubr.bf16.gmra.mxu0 %v495
        %v1210 = vpop.f32.mrf.mxu0
        %v1211 = vadd.f32 %v1018, %v1210
        %v1212 = vpop.f32.mrf.mxu0
        %v1213 = vadd.f32 %v1020, %v1212
        %v1214 = vpop.f32.mrf.mxu0
        %v1215 = vadd.f32 %v1022, %v1214
        %v1216 = vpop.f32.mrf.mxu0
        %v1217 = vadd.f32 %v1024, %v1216
        %1218 = vmatprep.mubr.bf16.mxu0 %v500
        %1219 = vmatmul.mubr.bf16.gmra.mxu0 %v499
        %v1220 = vpop.f32.mrf.mxu0
        %v1221 = vadd.f32 %v1028, %v1220
        %v1222 = vpop.f32.mrf.mxu0
        %v1223 = vadd.f32 %v1030, %v1222
        %v1224 = vpop.f32.mrf.mxu0
        %v1225 = vadd.f32 %v1032, %v1224
        %v1226 = vpop.f32.mrf.mxu0
        %v1227 = vadd.f32 %v1034, %v1226
        %1228 = vmatprep.mubr.bf16.mxu0 %v504
        %1229 = vmatmul.mubr.bf16.gmra.mxu0 %v503
        %v1230 = vpop.f32.mrf.mxu0
        %v1231 = vadd.f32 %v1038, %v1230
        %v1232 = vpop.f32.mrf.mxu0
        %v1233 = vadd.f32 %v1040, %v1232
        %v1234 = vpop.f32.mrf.mxu0
        %v1235 = vadd.f32 %v1042, %v1234
        %v1236 = vpop.f32.mrf.mxu0
        %v1237 = vadd.f32 %v1044, %v1236
        %1238 = vmatprep.mubr.bf16.mxu0 %v508
        %1239 = vmatmul.mubr.bf16.gmra.mxu0 %v507
        %v1240 = vpop.f32.mrf.mxu0
        %v1241 = vadd.f32 %v1048, %v1240
        %v1242 = vpop.f32.mrf.mxu0
        %v1243 = vadd.f32 %v1050, %v1242
        %v1244 = vpop.f32.mrf.mxu0
        %v1245 = vadd.f32 %v1052, %v1244
        %v1246 = vpop.f32.mrf.mxu0
        %v1247 = vadd.f32 %v1054, %v1246
        %1248 = vmatprep.mubr.bf16.mxu0 %v512
        %1249 = vmatmul.mubr.bf16.gmra.mxu0 %v511
        %v1250 = vpop.f32.mrf.mxu0
        %v1251 = vadd.f32 %v1058, %v1250
        %v1252 = vpop.f32.mrf.mxu0
        %v1253 = vadd.f32 %v1060, %v1252
        %v1254 = vpop.f32.mrf.mxu0
        %v1255 = vadd.f32 %v1062, %v1254
        %v1256 = vpop.f32.mrf.mxu0
        %v1257 = vadd.f32 %v1064, %v1256
        %1258 = vmatprep.mubr.bf16.mxu0 %v516
        %1259 = vmatmul.mubr.bf16.gmra.mxu0 %v515
        %v1260 = vpop.f32.mrf.mxu0
        %v1261 = vadd.f32 %v1068, %v1260
        %v1262 = vpop.f32.mrf.mxu0
        %v1263 = vadd.f32 %v1070, %v1262
        %v1264 = vpop.f32.mrf.mxu0
        %v1265 = vadd.f32 %v1072, %v1264
        %v1266 = vpop.f32.mrf.mxu0
        %v1267 = vadd.f32 %v1074, %v1266
        %1268 = vmatprep.mubr.bf16.mxu0 %v520
        %1269 = vmatmul.mubr.bf16.gmra.mxu0 %v519
        %v1270 = vpop.f32.mrf.mxu0
        %v1271 = vadd.f32 %v1078, %v1270
        %v1272 = vpop.f32.mrf.mxu0
        %v1273 = vadd.f32 %v1080, %v1272
        %v1274 = vpop.f32.mrf.mxu0
        %v1275 = vadd.f32 %v1082, %v1274
        %v1276 = vpop.f32.mrf.mxu0
        %v1277 = vadd.f32 %v1084, %v1276
        %1278 = vmatprep.mubr.bf16.mxu0 %v524
        %1279 = vmatmul.mubr.bf16.gmra.mxu0 %v523
        %v1280 = vpop.f32.mrf.mxu0
        %v1281 = vadd.f32 %v1088, %v1280
        %v1282 = vpop.f32.mrf.mxu0
        %v1283 = vadd.f32 %v1090, %v1282
        %v1284 = vpop.f32.mrf.mxu0
        %v1285 = vadd.f32 %v1092, %v1284
        %v1286 = vpop.f32.mrf.mxu0
        %v1287 = vadd.f32 %v1094, %v1286
        %1288 = vmatprep.mubr.bf16.mxu0 %v528
        %1289 = vmatmul.mubr.bf16.gmra.mxu0 %v527
        %v1290 = vpop.f32.mrf.mxu0
        %v1291 = vadd.f32 %v1098, %v1290
        %v1292 = vpop.f32.mrf.mxu0
        %v1293 = vadd.f32 %v1100, %v1292
        %v1294 = vpop.f32.mrf.mxu0
        %v1295 = vadd.f32 %v1102, %v1294
        %v1296 = vpop.f32.mrf.mxu0
        %v1297 = vadd.f32 %v1104, %v1296
        %1298 = vmatprep.mubr.bf16.mxu0 %v532
        %1299 = vmatmul.mubr.bf16.gmra.mxu0 %v531
        %v1300 = vpop.f32.mrf.mxu0
        %v1301 = vadd.f32 %v1108, %v1300
        %v1302 = vpop.f32.mrf.mxu0
        %v1303 = vadd.f32 %v1110, %v1302
        %v1304 = vpop.f32.mrf.mxu0
        %v1305 = vadd.f32 %v1112, %v1304
        %v1306 = vpop.f32.mrf.mxu0
        %v1307 = vadd.f32 %v1114, %v1306
        %1308 = vmatprep.mubr.bf16.mxu0 %v536
        %1309 = vmatmul.mubr.bf16.gmra.mxu0 %v535
        %v1310 = vpop.f32.mrf.mxu0
        %v1311 = vadd.f32 %v1118, %v1310
        %v1312 = vpop.f32.mrf.mxu0
        %v1313 = vadd.f32 %v1120, %v1312
        %v1314 = vpop.f32.mrf.mxu0
        %v1315 = vadd.f32 %v1122, %v1314
        %v1316 = vpop.f32.mrf.mxu0
        %v1317 = vadd.f32 %v1124, %v1316
        %1318 = vdwg.mxu0
        %v1319 = vmax.f32 %v1161, 0.0
        %v1320 = vmax.f32 %v1163, 0.0
        %v1321 = vmax.f32 %v1165, 0.0
        %v1322 = vmax.f32 %v1167, 0.0
        %v1323 = vmax.f32 %v1171, 0.0
        %v1324 = vmax.f32 %v1173, 0.0
        %v1325 = vmax.f32 %v1175, 0.0
        %v1326 = vmax.f32 %v1177, 0.0
        %v1327 = vmax.f32 %v1181, 0.0
        %v1328 = vmax.f32 %v1183, 0.0
        %v1329 = vmax.f32 %v1185, 0.0
        %v1330 = vmax.f32 %v1187, 0.0
        %v1331 = vmax.f32 %v1191, 0.0
        %v1332 = vmax.f32 %v1193, 0.0
        %v1333 = vmax.f32 %v1195, 0.0
        %v1334 = vmax.f32 %v1197, 0.0
        %v1335 = vmax.f32 %v1201, 0.0
        %v1336 = vmax.f32 %v1203, 0.0
        %v1337 = vmax.f32 %v1205, 0.0
        %v1338 = vmax.f32 %v1207, 0.0
        %v1339 = vmax.f32 %v1211, 0.0
        %v1340 = vmax.f32 %v1213, 0.0
        %v1341 = vmax.f32 %v1215, 0.0
        %v1342 = vmax.f32 %v1217, 0.0
        %v1343 = vmax.f32 %v1221, 0.0
        %v1344 = vmax.f32 %v1223, 0.0
        %v1345 = vmax.f32 %v1225, 0.0
        %v1346 = vmax.f32 %v1227, 0.0
        %v1347 = vmax.f32 %v1231, 0.0
        %v1348 = vmax.f32 %v1233, 0.0
        %v1349 = vmax.f32 %v1235, 0.0
        %v1350 = vmax.f32 %v1237, 0.0
        %v1351 = vmax.f32 %v1241, 0.0
        %v1352 = vmax.f32 %v1243, 0.0
        %v1353 = vmax.f32 %v1245, 0.0
        %v1354 = vmax.f32 %v1247, 0.0
        %v1355 = vmax.f32 %v1251, 0.0
        %v1356 = vmax.f32 %v1253, 0.0
        %v1357 = vmax.f32 %v1255, 0.0
        %v1358 = vmax.f32 %v1257, 0.0
        %v1359 = vmax.f32 %v1261, 0.0
        %v1360 = vmax.f32 %v1263, 0.0
        %v1361 = vmax.f32 %v1265, 0.0
        %v1362 = vmax.f32 %v1267, 0.0
        %v1363 = vmax.f32 %v1271, 0.0
        %v1364 = vmax.f32 %v1273, 0.0
        %v1365 = vmax.f32 %v1275, 0.0
        %v1366 = vmax.f32 %v1277, 0.0
        %v1367 = vmax.f32 %v1281, 0.0
        %v1368 = vmax.f32 %v1283, 0.0
        %v1369 = vmax.f32 %v1285, 0.0
        %v1370 = vmax.f32 %v1287, 0.0
        %v1371 = vmax.f32 %v1291, 0.0
        %v1372 = vmax.f32 %v1293, 0.0
        %v1373 = vmax.f32 %v1295, 0.0
        %v1374 = vmax.f32 %v1297, 0.0
        %v1375 = vmax.f32 %v1301, 0.0
        %v1376 = vmax.f32 %v1303, 0.0
        %v1377 = vmax.f32 %v1305, 0.0
        %v1378 = vmax.f32 %v1307, 0.0
        %v1379 = vmax.f32 %v1311, 0.0
        %v1380 = vmax.f32 %v1313, 0.0
        %v1381 = vmax.f32 %v1315, 0.0
        %v1382 = vmax.f32 %v1317, 0.0
        %v1383 = vpack.c.bf16 %v1321, %v1319
        %v1384 = vpack.c.bf16 %v1322, %v1320
        %v1385 = vpack.c.bf16 %v1325, %v1323
        %v1386 = vpack.c.bf16 %v1326, %v1324
        %v1387 = vpack.c.bf16 %v1329, %v1327
        %v1388 = vpack.c.bf16 %v1330, %v1328
        %v1389 = vpack.c.bf16 %v1333, %v1331
        %v1390 = vpack.c.bf16 %v1334, %v1332
        %v1391 = vpack.c.bf16 %v1337, %v1335
        %v1392 = vpack.c.bf16 %v1338, %v1336
        %v1393 = vpack.c.bf16 %v1341, %v1339
        %v1394 = vpack.c.bf16 %v1342, %v1340
        %v1395 = vpack.c.bf16 %v1345, %v1343
        %v1396 = vpack.c.bf16 %v1346, %v1344
        %v1397 = vpack.c.bf16 %v1349, %v1347
        %v1398 = vpack.c.bf16 %v1350, %v1348
        %v1399 = vpack.c.bf16 %v1353, %v1351
        %v1400 = vpack.c.bf16 %v1354, %v1352
        %v1401 = vpack.c.bf16 %v1357, %v1355
        %v1402 = vpack.c.bf16 %v1358, %v1356
        %v1403 = vpack.c.bf16 %v1361, %v1359
        %v1404 = vpack.c.bf16 %v1362, %v1360
        %v1405 = vpack.c.bf16 %v1365, %v1363
        %v1406 = vpack.c.bf16 %v1366, %v1364
        %v1407 = vpack.c.bf16 %v1369, %v1367
        %v1408 = vpack.c.bf16 %v1370, %v1368
        %v1409 = vpack.c.bf16 %v1373, %v1371
        %v1410 = vpack.c.bf16 %v1374, %v1372
        %v1411 = vpack.c.bf16 %v1377, %v1375
        %v1412 = vpack.c.bf16 %v1378, %v1376
        %v1413 = vpack.c.bf16 %v1381, %v1379
        %v1414 = vpack.c.bf16 %v1382, %v1380
        %v1415 = vld [vmem:[#allocation7] sm:$0xf]
        %v1416 = vld [vmem:[#allocation7 + $0x4] sm:$0xf]
        %v1417 = vld [vmem:[#allocation7 + $0x8] sm:$0xf]
        %v1418 = vld [vmem:[#allocation7 + $0xc] sm:$0xf]
        %v1419 = vld [vmem:[#allocation7 + $0x10] sm:$0xf]
        %v1420 = vld [vmem:[#allocation7 + $0x14] sm:$0xf]
        %v1421 = vld [vmem:[#allocation7 + $0x18] sm:$0xf]
        %v1422 = vld [vmem:[#allocation7 + $0x1c] sm:$0xf]
        %v1423 = vld [vmem:[#allocation7 + $0x20] sm:$0xf]
        %v1424 = vld [vmem:[#allocation7 + $0x24] sm:$0xf]
        %v1425 = vld [vmem:[#allocation7 + $0x28] sm:$0xf]
        %v1426 = vld [vmem:[#allocation7 + $0x2c] sm:$0xf]
        %v1427 = vld [vmem:[#allocation7 + $0x30] sm:$0xf]
        %v1428 = vld [vmem:[#allocation7 + $0x34] sm:$0xf]
        %v1429 = vld [vmem:[#allocation7 + $0x38] sm:$0xf]
        %v1430 = vld [vmem:[#allocation7 + $0x3c] sm:$0xf]
        %v1431 = vld [vmem:[#allocation7 + $0x40] sm:$0xf]
        %v1432 = vld [vmem:[#allocation7 + $0x44] sm:$0xf]
        %v1433 = vld [vmem:[#allocation7 + $0x48] sm:$0xf]
        %v1434 = vld [vmem:[#allocation7 + $0x4c] sm:$0xf]
        %v1435 = vld [vmem:[#allocation7 + $0x50] sm:$0xf]
        %v1436 = vld [vmem:[#allocation7 + $0x54] sm:$0xf]
        %v1437 = vld [vmem:[#allocation7 + $0x58] sm:$0xf]
        %v1438 = vld [vmem:[#allocation7 + $0x5c] sm:$0xf]
        %v1439 = vld [vmem:[#allocation7 + $0x60] sm:$0xf]
        %v1440 = vld [vmem:[#allocation7 + $0x64] sm:$0xf]
        %v1441 = vld [vmem:[#allocation7 + $0x68] sm:$0xf]
        %v1442 = vld [vmem:[#allocation7 + $0x6c] sm:$0xf]
        %v1443 = vld [vmem:[#allocation7 + $0x70] sm:$0xf]
        %v1444 = vld [vmem:[#allocation7 + $0x74] sm:$0xf]
        %v1445 = vld [vmem:[#allocation7 + $0x78] sm:$0xf]
        %v1446 = vld [vmem:[#allocation7 + $0x7c] sm:$0xf]
        %v1447 = vld [vmem:[%s4] sm:$0x1]
        %v1449 = vlaneseq
        %v1450 = vshrl.u32 %v1449, 7
        %v1451 = vsub.s32 0, %v1450
        %v1452 = vrot.slane %v1447, %v1451
        %v1486 = vunpack.c.l.b16 %v1415
        %v1487 = vunpack.c.l.b16 %v1416
        %v1488 = vunpack.c.l.b16 %v1417
        %v1489 = vunpack.c.l.b16 %v1418
        %v1490 = vunpack.c.l.b16 %v1419
        %v1491 = vunpack.c.l.b16 %v1420
        %v1492 = vunpack.c.l.b16 %v1421
        %v1493 = vunpack.c.l.b16 %v1422
        %v1494 = vunpack.c.l.b16 %v1423
        %v1495 = vunpack.c.l.b16 %v1424
        %v1496 = vunpack.c.l.b16 %v1425
        %v1497 = vunpack.c.l.b16 %v1426
        %v1498 = vunpack.c.l.b16 %v1427
        %v1499 = vunpack.c.l.b16 %v1428
        %v1500 = vunpack.c.l.b16 %v1429
        %v1501 = vunpack.c.l.b16 %v1430
        %v1502 = vunpack.c.l.b16 %v1431
        %v1503 = vunpack.c.l.b16 %v1432
        %v1504 = vunpack.c.l.b16 %v1433
        %v1505 = vunpack.c.l.b16 %v1434
        %v1506 = vunpack.c.l.b16 %v1435
        %v1507 = vunpack.c.l.b16 %v1436
        %v1508 = vunpack.c.l.b16 %v1437
        %v1509 = vunpack.c.l.b16 %v1438
        %v1510 = vunpack.c.l.b16 %v1439
        %v1511 = vunpack.c.l.b16 %v1440
        %v1512 = vunpack.c.l.b16 %v1441
        %v1513 = vunpack.c.l.b16 %v1442
        %v1514 = vunpack.c.l.b16 %v1443
        %v1515 = vunpack.c.l.b16 %v1444
        %v1516 = vunpack.c.l.b16 %v1445
        %v1517 = vunpack.c.l.b16 %v1446
        %v1518 = vpack.c.b16 %v1487, %v1486
        %v1519 = vpack.c.b16 %v1489, %v1488
        %v1520 = vpack.c.b16 %v1491, %v1490
        %v1521 = vpack.c.b16 %v1493, %v1492
        %v1522 = vpack.c.b16 %v1495, %v1494
        %v1523 = vpack.c.b16 %v1497, %v1496
        %v1524 = vpack.c.b16 %v1499, %v1498
        %v1525 = vpack.c.b16 %v1501, %v1500
        %v1526 = vpack.c.b16 %v1503, %v1502
        %v1527 = vpack.c.b16 %v1505, %v1504
        %v1528 = vpack.c.b16 %v1507, %v1506
        %v1529 = vpack.c.b16 %v1509, %v1508
        %v1530 = vpack.c.b16 %v1511, %v1510
        %v1531 = vpack.c.b16 %v1513, %v1512
        %v1532 = vpack.c.b16 %v1515, %v1514
        %v1533 = vpack.c.b16 %v1517, %v1516
        %1550 = vmatprep.subr.bf16.mxu0 0
        %1551 = vmatpush1.bf16.msra.mxu0 %v1525
        %1552 = vmatprep.subr.bf16.mxu0 0
        %1553 = vmatpush1.bf16.msra.mxu0 %v1524
        %1554 = vmatprep.subr.bf16.mxu0 0
        %1555 = vmatpush1.bf16.msra.mxu0 %v1523
        %1556 = vmatprep.subr.bf16.mxu0 0
        %1557 = vmatpush1.bf16.msra.mxu0 %v1522
        %1558 = vmatprep.subr.bf16.mxu0 0
        %1559 = vmatpush1.bf16.msra.mxu0 %v1521
        %1560 = vmatprep.subr.bf16.mxu0 0
        %1561 = vmatpush1.bf16.msra.mxu0 %v1520
        %1562 = vmatprep.subr.bf16.mxu0 0
        %1563 = vmatpush1.bf16.msra.mxu0 %v1519
        %1564 = vmatprep.subr.bf16.mxu0 0
        %1565 = vmatpush1.bf16.msra.mxu0 %v1518
        %1566 = vmatprep.subr.bf16.mxu0 0
        %1567 = vmatpush2.bf16.msra.mxu0 %v1533
        %1568 = vmatprep.subr.bf16.mxu0 0
        %1569 = vmatpush2.bf16.msra.mxu0 %v1532
        %1570 = vmatprep.subr.bf16.mxu0 0
        %1571 = vmatpush2.bf16.msra.mxu0 %v1531
        %1572 = vmatprep.subr.bf16.mxu0 0
        %1573 = vmatpush2.bf16.msra.mxu0 %v1530
        %1574 = vmatprep.subr.bf16.mxu0 0
        %1575 = vmatpush2.bf16.msra.mxu0 %v1529
        %1576 = vmatprep.subr.bf16.mxu0 0
        %1577 = vmatpush2.bf16.msra.mxu0 %v1528
        %1578 = vmatprep.subr.bf16.mxu0 0
        %1579 = vmatpush2.bf16.msra.mxu0 %v1527
        %1580 = vmatprep.subr.bf16.mxu0 0
        %1581 = vmatpush2.bf16.msra.mxu0 %v1526
        %1582 = vmatprep.mubr.bf16.mxu0 %v1384
        %1583 = vmatmul.mubr.bf16.gmra.mxu0 %v1383
        %v1584 = vpop.f32.mrf.mxu0
        %v1585 = vadd.f32 %v1452, %v1584
        %v1586 = vpop.f32.mrf.mxu0
        %v1587 = vpop.f32.mrf.mxu0
        %v1588 = vadd.f32 %v1452, %v1587
        %v1589 = vpop.f32.mrf.mxu0
        %1590 = vmatprep.mubr.bf16.mxu0 %v1386
        %1591 = vmatmul.mubr.bf16.gmra.mxu0 %v1385
        %v1592 = vpop.f32.mrf.mxu0
        %v1593 = vadd.f32 %v1452, %v1592
        %v1594 = vpop.f32.mrf.mxu0
        %v1595 = vpop.f32.mrf.mxu0
        %v1596 = vadd.f32 %v1452, %v1595
        %v1597 = vpop.f32.mrf.mxu0
        %1598 = vmatprep.mubr.bf16.mxu0 %v1388
        %1599 = vmatmul.mubr.bf16.gmra.mxu0 %v1387
        %v1600 = vpop.f32.mrf.mxu0
        %v1601 = vadd.f32 %v1452, %v1600
        %v1602 = vpop.f32.mrf.mxu0
        %v1603 = vpop.f32.mrf.mxu0
        %v1604 = vadd.f32 %v1452, %v1603
        %v1605 = vpop.f32.mrf.mxu0
        %1606 = vmatprep.mubr.bf16.mxu0 %v1390
        %1607 = vmatmul.mubr.bf16.gmra.mxu0 %v1389
        %v1608 = vpop.f32.mrf.mxu0
        %v1609 = vadd.f32 %v1452, %v1608
        %v1610 = vpop.f32.mrf.mxu0
        %v1611 = vpop.f32.mrf.mxu0
        %v1612 = vadd.f32 %v1452, %v1611
        %v1613 = vpop.f32.mrf.mxu0
        %1614 = vmatprep.mubr.bf16.mxu0 %v1392
        %1615 = vmatmul.mubr.bf16.gmra.mxu0 %v1391
        %v1616 = vpop.f32.mrf.mxu0
        %v1617 = vadd.f32 %v1452, %v1616
        %v1618 = vpop.f32.mrf.mxu0
        %v1619 = vpop.f32.mrf.mxu0
        %v1620 = vadd.f32 %v1452, %v1619
        %v1621 = vpop.f32.mrf.mxu0
        %1622 = vmatprep.mubr.bf16.mxu0 %v1394
        %1623 = vmatmul.mubr.bf16.gmra.mxu0 %v1393
        %v1624 = vpop.f32.mrf.mxu0
        %v1625 = vadd.f32 %v1452, %v1624
        %v1626 = vpop.f32.mrf.mxu0
        %v1627 = vpop.f32.mrf.mxu0
        %v1628 = vadd.f32 %v1452, %v1627
        %v1629 = vpop.f32.mrf.mxu0
        %1630 = vmatprep.mubr.bf16.mxu0 %v1396
        %1631 = vmatmul.mubr.bf16.gmra.mxu0 %v1395
        %v1632 = vpop.f32.mrf.mxu0
        %v1633 = vadd.f32 %v1452, %v1632
        %v1634 = vpop.f32.mrf.mxu0
        %v1635 = vpop.f32.mrf.mxu0
        %v1636 = vadd.f32 %v1452, %v1635
        %v1637 = vpop.f32.mrf.mxu0
        %1638 = vmatprep.mubr.bf16.mxu0 %v1398
        %1639 = vmatmul.mubr.bf16.gmra.mxu0 %v1397
        %v1640 = vpop.f32.mrf.mxu0
        %v1641 = vadd.f32 %v1452, %v1640
        %v1642 = vpop.f32.mrf.mxu0
        %v1643 = vpop.f32.mrf.mxu0
        %v1644 = vadd.f32 %v1452, %v1643
        %v1645 = vpop.f32.mrf.mxu0
        %1646 = vmatprep.mubr.bf16.mxu0 %v1400
        %1647 = vmatmul.mubr.bf16.gmra.mxu0 %v1399
        %v1648 = vpop.f32.mrf.mxu0
        %v1649 = vadd.f32 %v1452, %v1648
        %v1650 = vpop.f32.mrf.mxu0
        %v1651 = vpop.f32.mrf.mxu0
        %v1652 = vadd.f32 %v1452, %v1651
        %v1653 = vpop.f32.mrf.mxu0
        %1654 = vmatprep.mubr.bf16.mxu0 %v1402
        %1655 = vmatmul.mubr.bf16.gmra.mxu0 %v1401
        %v1656 = vpop.f32.mrf.mxu0
        %v1657 = vadd.f32 %v1452, %v1656
        %v1658 = vpop.f32.mrf.mxu0
        %v1659 = vpop.f32.mrf.mxu0
        %v1660 = vadd.f32 %v1452, %v1659
        %v1661 = vpop.f32.mrf.mxu0
        %1662 = vmatprep.mubr.bf16.mxu0 %v1404
        %1663 = vmatmul.mubr.bf16.gmra.mxu0 %v1403
        %v1664 = vpop.f32.mrf.mxu0
        %v1665 = vadd.f32 %v1452, %v1664
        %v1666 = vpop.f32.mrf.mxu0
        %v1667 = vpop.f32.mrf.mxu0
        %v1668 = vadd.f32 %v1452, %v1667
        %v1669 = vpop.f32.mrf.mxu0
        %1670 = vmatprep.mubr.bf16.mxu0 %v1406
        %1671 = vmatmul.mubr.bf16.gmra.mxu0 %v1405
        %v1672 = vpop.f32.mrf.mxu0
        %v1673 = vadd.f32 %v1452, %v1672
        %v1674 = vpop.f32.mrf.mxu0
        %v1675 = vpop.f32.mrf.mxu0
        %v1676 = vadd.f32 %v1452, %v1675
        %v1677 = vpop.f32.mrf.mxu0
        %1678 = vmatprep.mubr.bf16.mxu0 %v1408
        %1679 = vmatmul.mubr.bf16.gmra.mxu0 %v1407
        %v1680 = vpop.f32.mrf.mxu0
        %v1681 = vadd.f32 %v1452, %v1680
        %v1682 = vpop.f32.mrf.mxu0
        %v1683 = vpop.f32.mrf.mxu0
        %v1684 = vadd.f32 %v1452, %v1683
        %v1685 = vpop.f32.mrf.mxu0
        %1686 = vmatprep.mubr.bf16.mxu0 %v1410
        %1687 = vmatmul.mubr.bf16.gmra.mxu0 %v1409
        %v1688 = vpop.f32.mrf.mxu0
        %v1689 = vadd.f32 %v1452, %v1688
        %v1690 = vpop.f32.mrf.mxu0
        %v1691 = vpop.f32.mrf.mxu0
        %v1692 = vadd.f32 %v1452, %v1691
        %v1693 = vpop.f32.mrf.mxu0
        %1694 = vmatprep.mubr.bf16.mxu0 %v1412
        %1695 = vmatmul.mubr.bf16.gmra.mxu0 %v1411
        %v1696 = vpop.f32.mrf.mxu0
        %v1697 = vadd.f32 %v1452, %v1696
        %v1698 = vpop.f32.mrf.mxu0
        %v1699 = vpop.f32.mrf.mxu0
        %v1700 = vadd.f32 %v1452, %v1699
        %v1701 = vpop.f32.mrf.mxu0
        %1702 = vmatprep.mubr.bf16.mxu0 %v1414
        %1703 = vmatmul.mubr.bf16.gmra.mxu0 %v1413
        %v1704 = vpop.f32.mrf.mxu0
        %v1705 = vadd.f32 %v1452, %v1704
        %v1706 = vpop.f32.mrf.mxu0
        %v1707 = vpop.f32.mrf.mxu0
        %v1708 = vadd.f32 %v1452, %v1707
        %v1709 = vpop.f32.mrf.mxu0
        %1710 = vdwg.mxu0
        %v1711 = vmax.f32 %v1585, 0.0
        %v1712 = vmax.f32 %v1588, 0.0
        %v1713 = vmax.f32 %v1593, 0.0
        %v1714 = vmax.f32 %v1596, 0.0
        %v1715 = vmax.f32 %v1601, 0.0
        %v1716 = vmax.f32 %v1604, 0.0
        %v1717 = vmax.f32 %v1609, 0.0
        %v1718 = vmax.f32 %v1612, 0.0
        %v1719 = vmax.f32 %v1617, 0.0
        %v1720 = vmax.f32 %v1620, 0.0
        %v1721 = vmax.f32 %v1625, 0.0
        %v1722 = vmax.f32 %v1628, 0.0
        %v1723 = vmax.f32 %v1633, 0.0
        %v1724 = vmax.f32 %v1636, 0.0
        %v1725 = vmax.f32 %v1641, 0.0
        %v1726 = vmax.f32 %v1644, 0.0
        %v1727 = vmax.f32 %v1649, 0.0
        %v1728 = vmax.f32 %v1652, 0.0
        %v1729 = vmax.f32 %v1657, 0.0
        %v1730 = vmax.f32 %v1660, 0.0
        %v1731 = vmax.f32 %v1665, 0.0
        %v1732 = vmax.f32 %v1668, 0.0
        %v1733 = vmax.f32 %v1673, 0.0
        %v1734 = vmax.f32 %v1676, 0.0
        %v1735 = vmax.f32 %v1681, 0.0
        %v1736 = vmax.f32 %v1684, 0.0
        %v1737 = vmax.f32 %v1689, 0.0
        %v1738 = vmax.f32 %v1692, 0.0
        %v1739 = vmax.f32 %v1697, 0.0
        %v1740 = vmax.f32 %v1700, 0.0
        %v1741 = vmax.f32 %v1705, 0.0
        %v1742 = vmax.f32 %v1708, 0.0
        %v1743 = vpack.c.bf16 %v1712, %v1711
        %v1744 = vpack.c.bf16 %v1714, %v1713
        %v1745 = vpack.c.bf16 %v1716, %v1715
        %v1746 = vpack.c.bf16 %v1718, %v1717
        %v1747 = vpack.c.bf16 %v1720, %v1719
        %v1748 = vpack.c.bf16 %v1722, %v1721
        %v1749 = vpack.c.bf16 %v1724, %v1723
        %v1750 = vpack.c.bf16 %v1726, %v1725
        %v1751 = vpack.c.bf16 %v1728, %v1727
        %v1752 = vpack.c.bf16 %v1730, %v1729
        %v1753 = vpack.c.bf16 %v1732, %v1731
        %v1754 = vpack.c.bf16 %v1734, %v1733
        %v1755 = vpack.c.bf16 %v1736, %v1735
        %v1756 = vpack.c.bf16 %v1738, %v1737
        %v1757 = vpack.c.bf16 %v1740, %v1739
        %v1758 = vpack.c.bf16 %v1742, %v1741
        %v1759 = vld [vmem:[#allocation8] sm:$0xf]
        %v1760 = vld [vmem:[#allocation8 + $0x4] sm:$0xf]
        %v1761 = vld [vmem:[#allocation8 + $0x8] sm:$0xf]
        %v1762 = vld [vmem:[#allocation8 + $0xc] sm:$0xf]
        %v1763 = vld [vmem:[#allocation8 + $0x10] sm:$0xf]
        %v1764 = vld [vmem:[#allocation8 + $0x14] sm:$0xf]
        %v1765 = vld [vmem:[#allocation8 + $0x18] sm:$0xf]
        %v1766 = vld [vmem:[#allocation8 + $0x1c] sm:$0xf]
        %v1767 = vld [vmem:[#allocation8 + $0x20] sm:$0xf]
        %v1768 = vld [vmem:[#allocation8 + $0x24] sm:$0xf]
        %v1769 = vld [vmem:[#allocation8 + $0x28] sm:$0xf]
        %v1770 = vld [vmem:[#allocation8 + $0x2c] sm:$0xf]
        %v1771 = vld [vmem:[#allocation8 + $0x30] sm:$0xf]
        %v1772 = vld [vmem:[#allocation8 + $0x34] sm:$0xf]
        %v1773 = vld [vmem:[#allocation8 + $0x38] sm:$0xf]
        %v1774 = vld [vmem:[#allocation8 + $0x3c] sm:$0xf]
        %v1775 = vld [vmem:[%s6] sm:$0x1]
        %v1777 = vlaneseq
        %v1778 = vshrl.u32 %v1777, 7
        %v1779 = vsub.s32 0, %v1778
        %v1780 = vrot.slane %v1775, %v1779
        %v1798 = vunpack.c.l.b16 %v1759
        %v1799 = vunpack.c.l.b16 %v1760
        %v1800 = vunpack.c.l.b16 %v1761
        %v1801 = vunpack.c.l.b16 %v1762
        %v1802 = vunpack.c.l.b16 %v1763
        %v1803 = vunpack.c.l.b16 %v1764
        %v1804 = vunpack.c.l.b16 %v1765
        %v1805 = vunpack.c.l.b16 %v1766
        %v1806 = vunpack.c.l.b16 %v1767
        %v1807 = vunpack.c.l.b16 %v1768
        %v1808 = vunpack.c.l.b16 %v1769
        %v1809 = vunpack.c.l.b16 %v1770
        %v1810 = vunpack.c.l.b16 %v1771
        %v1811 = vunpack.c.l.b16 %v1772
        %v1812 = vunpack.c.l.b16 %v1773
        %v1813 = vunpack.c.l.b16 %v1774
        %v1814 = vpack.c.b16 %v1799, %v1798
        %v1815 = vpack.c.b16 %v1801, %v1800
        %v1816 = vpack.c.b16 %v1803, %v1802
        %v1817 = vpack.c.b16 %v1805, %v1804
        %v1818 = vpack.c.b16 %v1807, %v1806
        %v1819 = vpack.c.b16 %v1809, %v1808
        %v1820 = vpack.c.b16 %v1811, %v1810
        %v1821 = vpack.c.b16 %v1813, %v1812
        %1830 = vmatprep.subr.bf16.mxu0 0
        %1831 = vmatpush1.bf16.msra.mxu0 %v1821
        %1832 = vmatprep.subr.bf16.mxu0 0
        %1833 = vmatpush1.bf16.msra.mxu0 %v1820
        %1834 = vmatprep.subr.bf16.mxu0 0
        %1835 = vmatpush1.bf16.msra.mxu0 %v1819
        %1836 = vmatprep.subr.bf16.mxu0 0
        %1837 = vmatpush1.bf16.msra.mxu0 %v1818
        %1838 = vmatprep.subr.bf16.mxu0 0
        %1839 = vmatpush1.bf16.msra.mxu0 %v1817
        %1840 = vmatprep.subr.bf16.mxu0 0
        %1841 = vmatpush1.bf16.msra.mxu0 %v1816
        %1842 = vmatprep.subr.bf16.mxu0 0
        %1843 = vmatpush1.bf16.msra.mxu0 %v1815
        %1844 = vmatprep.subr.bf16.mxu0 0
        %1845 = vmatpush1.bf16.msra.mxu0 %v1814
        %1846 = vmatprep.subr.bf16.mxu0 0
        %1847 = vmatpush2.bf16.msra.mxu0 0
        %1848 = vmatprep.subr.bf16.mxu0 0
        %1849 = vmatpush2.bf16.msra.mxu0 0
        %1850 = vmatprep.subr.bf16.mxu0 0
        %1851 = vmatpush2.bf16.msra.mxu0 0
        %1852 = vmatprep.subr.bf16.mxu0 0
        %1853 = vmatpush2.bf16.msra.mxu0 0
        %1854 = vmatprep.subr.bf16.mxu0 0
        %1855 = vmatpush2.bf16.msra.mxu0 0
        %1856 = vmatprep.subr.bf16.mxu0 0
        %1857 = vmatpush2.bf16.msra.mxu0 0
        %1858 = vmatprep.subr.bf16.mxu0 0
        %1859 = vmatpush2.bf16.msra.mxu0 0
        %1860 = vmatprep.subr.bf16.mxu0 0
        %1861 = vmatpush2.bf16.msra.mxu0 0
        %1862 = vmatprep.mubr.bf16.mxu0 0
        %1863 = vmatmul.mubr.bf16.gmra.mxu0 %v1743
        %v1864 = vpop.f32.mrf.mxu0
        %v1865 = vadd.f32 %v1780, %v1864
        %v1866 = vpop.f32.mrf.mxu0
        %v1867 = vpop.f32.mrf.mxu0
        %v1868 = vadd.f32 %v1780, %v1867
        %v1869 = vpop.f32.mrf.mxu0
        %1870 = vmatprep.mubr.bf16.mxu0 0
        %1871 = vmatmul.mubr.bf16.gmra.mxu0 %v1744
        %v1872 = vpop.f32.mrf.mxu0
        %v1873 = vadd.f32 %v1780, %v1872
        %v1874 = vpop.f32.mrf.mxu0
        %v1875 = vpop.f32.mrf.mxu0
        %v1876 = vadd.f32 %v1780, %v1875
        %v1877 = vpop.f32.mrf.mxu0
        %1878 = vmatprep.mubr.bf16.mxu0 0
        %1879 = vmatmul.mubr.bf16.gmra.mxu0 %v1745
        %v1880 = vpop.f32.mrf.mxu0
        %v1881 = vadd.f32 %v1780, %v1880
        %v1882 = vpop.f32.mrf.mxu0
        %v1883 = vpop.f32.mrf.mxu0
        %v1884 = vadd.f32 %v1780, %v1883
        %v1885 = vpop.f32.mrf.mxu0
        %1886 = vmatprep.mubr.bf16.mxu0 0
        %1887 = vmatmul.mubr.bf16.gmra.mxu0 %v1746
        %v1888 = vpop.f32.mrf.mxu0
        %v1889 = vadd.f32 %v1780, %v1888
        %v1890 = vpop.f32.mrf.mxu0
        %v1891 = vpop.f32.mrf.mxu0
        %v1892 = vadd.f32 %v1780, %v1891
        %v1893 = vpop.f32.mrf.mxu0
        %1894 = vmatprep.mubr.bf16.mxu0 0
        %1895 = vmatmul.mubr.bf16.gmra.mxu0 %v1747
        %v1896 = vpop.f32.mrf.mxu0
        %v1897 = vadd.f32 %v1780, %v1896
        %v1898 = vpop.f32.mrf.mxu0
        %v1899 = vpop.f32.mrf.mxu0
        %v1900 = vadd.f32 %v1780, %v1899
        %v1901 = vpop.f32.mrf.mxu0
        %1902 = vmatprep.mubr.bf16.mxu0 0
        %1903 = vmatmul.mubr.bf16.gmra.mxu0 %v1748
        %v1904 = vpop.f32.mrf.mxu0
        %v1905 = vadd.f32 %v1780, %v1904
        %v1906 = vpop.f32.mrf.mxu0
        %v1907 = vpop.f32.mrf.mxu0
        %v1908 = vadd.f32 %v1780, %v1907
        %v1909 = vpop.f32.mrf.mxu0
        %1910 = vmatprep.mubr.bf16.mxu0 0
        %1911 = vmatmul.mubr.bf16.gmra.mxu0 %v1749
        %v1912 = vpop.f32.mrf.mxu0
        %v1913 = vadd.f32 %v1780, %v1912
        %v1914 = vpop.f32.mrf.mxu0
        %v1915 = vpop.f32.mrf.mxu0
        %v1916 = vadd.f32 %v1780, %v1915
        %v1917 = vpop.f32.mrf.mxu0
        %1918 = vmatprep.mubr.bf16.mxu0 0
        %1919 = vmatmul.mubr.bf16.gmra.mxu0 %v1750
        %v1920 = vpop.f32.mrf.mxu0
        %v1921 = vadd.f32 %v1780, %v1920
        %v1922 = vpop.f32.mrf.mxu0
        %v1923 = vpop.f32.mrf.mxu0
        %v1924 = vadd.f32 %v1780, %v1923
        %v1925 = vpop.f32.mrf.mxu0
        %1926 = vmatprep.mubr.bf16.mxu0 0
        %1927 = vmatmul.mubr.bf16.gmra.mxu0 %v1751
        %v1928 = vpop.f32.mrf.mxu0
        %v1929 = vadd.f32 %v1780, %v1928
        %v1930 = vpop.f32.mrf.mxu0
        %v1931 = vpop.f32.mrf.mxu0
        %v1932 = vadd.f32 %v1780, %v1931
        %v1933 = vpop.f32.mrf.mxu0
        %1934 = vmatprep.mubr.bf16.mxu0 0
        %1935 = vmatmul.mubr.bf16.gmra.mxu0 %v1752
        %v1936 = vpop.f32.mrf.mxu0
        %v1937 = vadd.f32 %v1780, %v1936
        %v1938 = vpop.f32.mrf.mxu0
        %v1939 = vpop.f32.mrf.mxu0
        %v1940 = vadd.f32 %v1780, %v1939
        %v1941 = vpop.f32.mrf.mxu0
        %1942 = vmatprep.mubr.bf16.mxu0 0
        %1943 = vmatmul.mubr.bf16.gmra.mxu0 %v1753
        %v1944 = vpop.f32.mrf.mxu0
        %v1945 = vadd.f32 %v1780, %v1944
        %v1946 = vpop.f32.mrf.mxu0
        %v1947 = vpop.f32.mrf.mxu0
        %v1948 = vadd.f32 %v1780, %v1947
        %v1949 = vpop.f32.mrf.mxu0
        %1950 = vmatprep.mubr.bf16.mxu0 0
        %1951 = vmatmul.mubr.bf16.gmra.mxu0 %v1754
        %v1952 = vpop.f32.mrf.mxu0
        %v1953 = vadd.f32 %v1780, %v1952
        %v1954 = vpop.f32.mrf.mxu0
        %v1955 = vpop.f32.mrf.mxu0
        %v1956 = vadd.f32 %v1780, %v1955
        %v1957 = vpop.f32.mrf.mxu0
        %1958 = vmatprep.mubr.bf16.mxu0 0
        %1959 = vmatmul.mubr.bf16.gmra.mxu0 %v1755
        %v1960 = vpop.f32.mrf.mxu0
        %v1961 = vadd.f32 %v1780, %v1960
        %v1962 = vpop.f32.mrf.mxu0
        %v1963 = vpop.f32.mrf.mxu0
        %v1964 = vadd.f32 %v1780, %v1963
        %v1965 = vpop.f32.mrf.mxu0
        %1966 = vmatprep.mubr.bf16.mxu0 0
        %1967 = vmatmul.mubr.bf16.gmra.mxu0 %v1756
        %v1968 = vpop.f32.mrf.mxu0
        %v1969 = vadd.f32 %v1780, %v1968
        %v1970 = vpop.f32.mrf.mxu0
        %v1971 = vpop.f32.mrf.mxu0
        %v1972 = vadd.f32 %v1780, %v1971
        %v1973 = vpop.f32.mrf.mxu0
        %1974 = vmatprep.mubr.bf16.mxu0 0
        %1975 = vmatmul.mubr.bf16.gmra.mxu0 %v1757
        %v1976 = vpop.f32.mrf.mxu0
        %v1977 = vadd.f32 %v1780, %v1976
        %v1978 = vpop.f32.mrf.mxu0
        %v1979 = vpop.f32.mrf.mxu0
        %v1980 = vadd.f32 %v1780, %v1979
        %v1981 = vpop.f32.mrf.mxu0
        %1982 = vmatprep.mubr.bf16.mxu0 0
        %1983 = vmatmul.mubr.bf16.gmra.mxu0 %v1758
        %v1984 = vpop.f32.mrf.mxu0
        %v1985 = vadd.f32 %v1780, %v1984
        %v1986 = vpop.f32.mrf.mxu0
        %v1987 = vpop.f32.mrf.mxu0
        %v1988 = vadd.f32 %v1780, %v1987
        %v1989 = vpop.f32.mrf.mxu0
        %1990 = vdwg.mxu0
        %v1991 = vpack.c.bf16 %v1868, %v1865
        %v1992 = vpack.c.bf16 %v1876, %v1873
        %v1993 = vpack.c.bf16 %v1884, %v1881
        %v1994 = vpack.c.bf16 %v1892, %v1889
        %v1995 = vpack.c.bf16 %v1900, %v1897
        %v1996 = vpack.c.bf16 %v1908, %v1905
        %v1997 = vpack.c.bf16 %v1916, %v1913
        %v1998 = vpack.c.bf16 %v1924, %v1921
        %v1999 = vpack.c.bf16 %v1932, %v1929
        %v2000 = vpack.c.bf16 %v1940, %v1937
        %v2001 = vpack.c.bf16 %v1948, %v1945
        %v2002 = vpack.c.bf16 %v1956, %v1953
        %v2003 = vpack.c.bf16 %v1964, %v1961
        %v2004 = vpack.c.bf16 %v1972, %v1969
        %v2005 = vpack.c.bf16 %v1980, %v1977
        %v2006 = vpack.c.bf16 %v1988, %v1985
        %v2023 = vunpack.c.l.b16 %v1991
        %v2024 = vunpack.c.h.b16 %v1991
        %v2025 = vunpack.c.l.b16 %v1992
        %v2026 = vunpack.c.h.b16 %v1992
        %v2027 = vunpack.c.l.b16 %v1993
        %v2028 = vunpack.c.h.b16 %v1993
        %v2029 = vunpack.c.l.b16 %v1994
        %v2030 = vunpack.c.h.b16 %v1994
        %v2031 = vunpack.c.l.b16 %v1995
        %v2032 = vunpack.c.h.b16 %v1995
        %v2033 = vunpack.c.l.b16 %v1996
        %v2034 = vunpack.c.h.b16 %v1996
        %v2035 = vunpack.c.l.b16 %v1997
        %v2036 = vunpack.c.h.b16 %v1997
        %v2037 = vunpack.c.l.b16 %v1998
        %v2038 = vunpack.c.h.b16 %v1998
        %v2039 = vunpack.c.l.b16 %v1999
        %v2040 = vunpack.c.h.b16 %v1999
        %v2041 = vunpack.c.l.b16 %v2000
        %v2042 = vunpack.c.h.b16 %v2000
        %v2043 = vunpack.c.l.b16 %v2001
        %v2044 = vunpack.c.h.b16 %v2001
        %v2045 = vunpack.c.l.b16 %v2002
        %v2046 = vunpack.c.h.b16 %v2002
        %v2047 = vunpack.c.l.b16 %v2003
        %v2048 = vunpack.c.h.b16 %v2003
        %v2049 = vunpack.c.l.b16 %v2004
        %v2050 = vunpack.c.h.b16 %v2004
        %v2051 = vunpack.c.l.b16 %v2005
        %v2052 = vunpack.c.h.b16 %v2005
        %v2053 = vunpack.c.l.b16 %v2006
        %v2054 = vunpack.c.h.b16 %v2006
        %v2055 = vpack.c.b16 %v2023, %v2023
        %v2056 = vpack.c.b16 %v2024, %v2024
        %v2057 = vpack.c.b16 %v2025, %v2025
        %v2058 = vpack.c.b16 %v2026, %v2026
        %v2059 = vpack.c.b16 %v2027, %v2027
        %v2060 = vpack.c.b16 %v2028, %v2028
        %v2061 = vpack.c.b16 %v2029, %v2029
        %v2062 = vpack.c.b16 %v2030, %v2030
        %v2063 = vpack.c.b16 %v2031, %v2031
        %v2064 = vpack.c.b16 %v2032, %v2032
        %v2065 = vpack.c.b16 %v2033, %v2033
        %v2066 = vpack.c.b16 %v2034, %v2034
        %v2067 = vpack.c.b16 %v2035, %v2035
        %v2068 = vpack.c.b16 %v2036, %v2036
        %v2069 = vpack.c.b16 %v2037, %v2037
        %v2070 = vpack.c.b16 %v2038, %v2038
        %v2071 = vpack.c.b16 %v2039, %v2039
        %v2072 = vpack.c.b16 %v2040, %v2040
        %v2073 = vpack.c.b16 %v2041, %v2041
        %v2074 = vpack.c.b16 %v2042, %v2042
        %v2075 = vpack.c.b16 %v2043, %v2043
        %v2076 = vpack.c.b16 %v2044, %v2044
        %v2077 = vpack.c.b16 %v2045, %v2045
        %v2078 = vpack.c.b16 %v2046, %v2046
        %v2079 = vpack.c.b16 %v2047, %v2047
        %v2080 = vpack.c.b16 %v2048, %v2048
        %v2081 = vpack.c.b16 %v2049, %v2049
        %v2082 = vpack.c.b16 %v2050, %v2050
        %v2083 = vpack.c.b16 %v2051, %v2051
        %v2084 = vpack.c.b16 %v2052, %v2052
        %v2085 = vpack.c.b16 %v2053, %v2053
        %v2086 = vpack.c.b16 %v2054, %v2054
        %2119 = vst [vmem:[%s341] sm:$0xf] %v2055
        %2120 = vst [vmem:[%s341 + $0x4] sm:$0xf] %v2056
        %2121 = vst [vmem:[%s341 + $0x8] sm:$0xf] %v2057
        %2122 = vst [vmem:[%s341 + $0xc] sm:$0xf] %v2058
        %2123 = vst [vmem:[%s341 + $0x10] sm:$0xf] %v2059
        %2124 = vst [vmem:[%s341 + $0x14] sm:$0xf] %v2060
        %2125 = vst [vmem:[%s341 + $0x18] sm:$0xf] %v2061
        %2126 = vst [vmem:[%s341 + $0x1c] sm:$0xf] %v2062
        %2127 = vst [vmem:[%s341 + $0x20] sm:$0xf] %v2063
        %2128 = vst [vmem:[%s341 + $0x24] sm:$0xf] %v2064
        %2129 = vst [vmem:[%s341 + $0x28] sm:$0xf] %v2065
        %2130 = vst [vmem:[%s341 + $0x2c] sm:$0xf] %v2066
        %2131 = vst [vmem:[%s341 + $0x30] sm:$0xf] %v2067
        %2132 = vst [vmem:[%s341 + $0x34] sm:$0xf] %v2068
        %2133 = vst [vmem:[%s341 + $0x38] sm:$0xf] %v2069
        %2134 = vst [vmem:[%s341 + $0x3c] sm:$0xf] %v2070
        %2135 = vst [vmem:[%s341 + $0x40] sm:$0xf] %v2071
        %2136 = vst [vmem:[%s341 + $0x44] sm:$0xf] %v2072
        %2137 = vst [vmem:[%s341 + $0x48] sm:$0xf] %v2073
        %2138 = vst [vmem:[%s341 + $0x4c] sm:$0xf] %v2074
        %2139 = vst [vmem:[%s341 + $0x50] sm:$0xf] %v2075
        %2140 = vst [vmem:[%s341 + $0x54] sm:$0xf] %v2076
        %2141 = vst [vmem:[%s341 + $0x58] sm:$0xf] %v2077
        %2142 = vst [vmem:[%s341 + $0x5c] sm:$0xf] %v2078
        %2143 = vst [vmem:[%s341 + $0x60] sm:$0xf] %v2079
        %2144 = vst [vmem:[%s341 + $0x64] sm:$0xf] %v2080
        %2145 = vst [vmem:[%s341 + $0x68] sm:$0xf] %v2081
        %2146 = vst [vmem:[%s341 + $0x6c] sm:$0xf] %v2082
        %2147 = vst [vmem:[%s341 + $0x70] sm:$0xf] %v2083
        %2148 = vst [vmem:[%s341 + $0x74] sm:$0xf] %v2084
        %2149 = vst [vmem:[%s341 + $0x78] sm:$0xf] %v2085
        %2150 = vst [vmem:[%s341 + $0x7c] sm:$0xf] %v2086
        %s2151 = sand.u32 %s186, 1
        %s2152 = scalar_lea.sflag [#allocation4], %s2151
        %s2153 = sand.u32 %s186, 1
        %s2154 = smul.addr %s2153, 128
        %s2155 = scalar_lea.vmem [#allocation10], %s2154
        // Predicated region
        $region65: #{tpu_custom_call.1} parent=47 // pred_check
          %p2156 = pneg %p196
        $region66: #{tpu_custom_call.1} parent=47 // pred_check_branch
          %2158 = sbr.rel (%p2156) target = $region68
        $region67: #{tpu_custom_call.1} parent=47 // pred_region
          %s2159 = smul.u32 32, %s26
          %s2161 = ssub.s32 2048, 2048
          %2162 = vsyncadd %s2152, %s2161
          %s2163 = smul.addr %s2159, 64
          %s2164 = scalar_lea.hbm %s7, %s2163
          %s2165 = sshll.u32 %s2155, 4
          %s2166 = int_to_ptr.vmem [resolvable:$true] %s2165
          %2171 = dma.vmem_to_hbm [thread:$0]  %s2166, 2048, %s2164, %s2152, 64, 64, 4
        $region68: #{tpu_custom_call.1} parent=47 // pred_fallthru
          _
      $region48: #{tpu_custom_call.1} parent=5 // pred_fallthru
        _
      %p2172 = scmp.le.s32.totalorder 2, %s21
      // Predicated region
      $region69: #{tpu_custom_call.1} parent=5 // pred_check
        %p2173 = pneg %p2172
      $region70: #{tpu_custom_call.1} parent=5 // pred_check_branch
        %2175 = sbr.rel (%p2173) target = $region72
      $region71: #{tpu_custom_call.1} parent=5 // pred_region
        %s2176 = ssub.s32 %s21, 2
        // Predicated region
        $region73: #{tpu_custom_call.1} parent=71 // pred_check
          %p2177 = pneg %p202
        $region74: #{tpu_custom_call.1} parent=71 // pred_check_branch
          %2179 = sbr.rel (%p2177) target = $region76
        $region75: #{tpu_custom_call.1} parent=71 // pred_region
          %s2180 = sand.u32 %s187, 1
          %s2181 = scalar_lea.sflag [#allocation4], %s2180
          %s2182 = sand.u32 %s187, 1
          %s2183 = smul.addr %s2182, 128
          %s2184 = scalar_lea.vmem [#allocation10], %s2183
          %2185 = dma.done %s2181, 2048
        $region76: #{tpu_custom_call.1} parent=71 // pred_fallthru
          _
      $region72: #{tpu_custom_call.1} parent=5 // pred_fallthru
        _
    $region6: #{tpu_custom_call.1} parent=1 // loop_footer
      %s25 = sadd.s32 1, %s21
    $region7: #{tpu_custom_call.1} parent=1 // loop_footer_branch
      %20 = sbr.rel target = $region3
    $region8: #{tpu_custom_call.1} parent=1 // loop_exit
      _
    %2186 = vsyncpa [#allocation3], 1
    %s2187 = scalar_lea.sflag [#allocation3], 1
    %2188 = vsyncpa %s2187, 1
    %2189 = vsyncpa [#allocation6], 1
    %2190 = vsyncpa [#allocation9], 1
    %2191 = vsyncpa [#allocation4], 1
    %s2192 = scalar_lea.sflag [#allocation4], 1
    %2193 = vsyncpa %s2192, 1

</llo_original>
